<compile_context>
chip_gen: v5e
topology: v5e:2x2
jax: 0.10.0
libtpu: 0.0.40
codegen_flags: <defaults>
</compile_context>

<pallas_src>
import functools

import jax
import jax.numpy as jnp
from jax.experimental import pallas as pl
from jax.experimental.pallas import tpu as pltpu


# --------------------------------------------------------------------------------------
# Fused IB kernel (one grid step == one batch image, everything in VMEM)
# --------------------------------------------------------------------------------------

def _make_ib_kernel(H, W, C, Chid, rev, compute_dtype):
    HW = H * W

    def _pad1(x):
        """Zero-pad [h, w, c] -> [h+2, w+2, c] with explicit concats (VMEM only)."""
        hh, ww, cc = x.shape
        zr = jnp.zeros((1, ww, cc), x.dtype)
        x = jnp.concatenate([zr, x, zr], axis=0)
        zc = jnp.zeros((hh + 2, 1, cc), x.dtype)
        return jnp.concatenate([zc, x, zc], axis=1)

    def _im2col(x_hwc):
        """[H, W, Cin] -> [H*W, 9*Cin], tap order (dy, dx, cin); built once per conv."""
        xp = _pad1(x_hwc)
        taps = [xp[dy:dy + H, dx:dx + W, :] for dy in range(3) for dx in range(3)]
        return jnp.concatenate(taps, axis=-1).reshape(HW, -1)

    def _conv(im, w_ref, b_ref):
        """Single MXU matmul per conv; bias add fused as the only epilogue VALU pass."""
        return jnp.dot(im, w_ref[...], preferred_element_type=jnp.float32) + b_ref[...]

    def kernel(x1_ref, x2_ref,
               wf1_ref, bf1_ref, wf2_ref, bf2_ref,
               wr1_ref, br1_ref, wr2_ref, br2_ref,
               wy1_ref, by1_ref, wy2_ref, by2_ref,
               y1_ref, y2_ref):
        cd = compute_dtype
        x1 = x1_ref[0]                                   # [H, W, C] f32
        x2 = x2_ref[0]                                   # [H, W, C] f32

        def subnet_f(inp_hwc):
            """t2 = f(inp): conv3x3 -> relu -> conv3x3, bf16 matmul operands, f32 results."""
            h = jnp.maximum(_conv(_im2col(inp_hwc.astype(cd)), wf1_ref, bf1_ref), 0.0)
            return _conv(_im2col(h.astype(cd).reshape(H, W, Chid)), wf2_ref, bf2_ref)

        def subnet_ry(inp_hwc):
            """s1, t1 = r(inp), y(inp): layer-1 im2col is shared, two dots per layer."""
            im1 = _im2col(inp_hwc.astype(cd))                            # [HW, 9*C]
            h_r = jnp.maximum(_conv(im1, wr1_ref, br1_ref), 0.0)         # [HW, Chid]
            h_y = jnp.maximum(_conv(im1, wy1_ref, by1_ref), 0.0)
            s1 = _conv(_im2col(h_r.astype(cd).reshape(H, W, Chid)), wr2_ref, br2_ref)
            t1 = _conv(_im2col(h_y.astype(cd).reshape(H, W, Chid)), wy2_ref, by2_ref)
            return s1, t1                                                # f32 [HW, C]

        if not rev:
            # t2 = f(x2); y1 = x1 + t2; s1,t1 = r(y1),y(y1); y2 = exp(s1)*x2 + t1
            t2 = subnet_f(x2)
            y1 = x1.reshape(HW, C) + t2
            s1, t1 = subnet_ry(y1.reshape(H, W, C))
            y2 = jnp.exp(s1) * x2.reshape(HW, C) + t1
        else:
            # s1,t1 = r(x1),y(x1); y2 = (x2 - t1)/exp(s1); t2 = f(y2); y1 = x1 - t2
            s1, t1 = subnet_ry(x1)
            y2 = (x2.reshape(HW, C) - t1) * jnp.exp(-s1)
            t2 = subnet_f(y2.reshape(H, W, C))
            y1 = x1.reshape(HW, C) - t2

        # Lane-dense stores: [HW, C] -> [C, HW] (last dim = HW >= 128) == NCHW order.
        y1_ref[0] = y1.T
        y2_ref[0] = y2.T

    return kernel


# --------------------------------------------------------------------------------------
# Wrapper (layout glue + weight packing, traced under jit)
# --------------------------------------------------------------------------------------

def _w2d(w):
    """PyTorch conv weight [Cout, Cin, 3, 3] -> [9*Cin, Cout], row = (dy*3+dx)*Cin + cin."""
    return jnp.transpose(w, (2, 3, 1, 0)).reshape(9 * w.shape[1], w.shape[0])


def ib_apply(x1_nchw, x2_nchw, params, rev=False, compute_dtype=jnp.bfloat16):
    """IB.forward([x1, x2], rev). NCHW in / NCHW out."""
    B, C, H, W = x1_nchw.shape
    x1 = jnp.transpose(x1_nchw, (0, 2, 3, 1)).astype(jnp.float32)   # NHWC for the kernel
    x2 = jnp.transpose(x2_nchw, (0, 2, 3, 1)).astype(jnp.float32)

    f, r, y = params["f"], params["r"], params["y"]
    Chid = f["w1"].shape[0]
    cd = compute_dtype

    def prep(sub):
        return (_w2d(sub["w1"]).astype(cd), sub["b1"].reshape(1, -1).astype(jnp.float32),
                _w2d(sub["w2"]).astype(cd), sub["b2"].reshape(1, -1).astype(jnp.float32))

    wf1, bf1, wf2, bf2 = prep(f)
    wr1, br1, wr2, br2 = prep(r)
    wy1, by1, wy2, by2 = prep(y)
    weights = [wf1, bf1, wf2, bf2, wr1, br1, wr2, br2, wy1, by1, wy2, by2]

    kernel = _make_ib_kernel(H, W, C, Chid, rev, cd)

    img_spec = lambda: pl.BlockSpec((1, H, W, C), lambda b: (b, 0, 0, 0))

    def resident(arr):                 # full-array, fetched once (constant block index)
        return pl.BlockSpec(arr.shape, lambda b: (0, 0))

    in_specs = [img_spec(), img_spec()] + [resident(w) for w in weights]

    out_block = pl.BlockSpec((1, C, H * W), lambda b: (b, 0, 0))
    out_sds = jax.ShapeDtypeStruct((B, C, H * W), jnp.float32)

    # Advisory cost hints (6 convs per direction, weights fetched once).
    flops = 12 * B * H * W * 9 * C * Chid
    wbytes = sum(int(w.size) * jnp.dtype(w.dtype).itemsize for w in weights)
    bytes_accessed = 4 * B * H * W * C * 4 * 2 + wbytes
    cost = pl.CostEstimate(flops=flops, transcendentals=B * H * W * C,
                           bytes_accessed=int(bytes_accessed))

    y1f, y2f = pl.pallas_call(
        kernel,
        out_shape=(out_sds, out_sds),
        grid=(B,),
        in_specs=in_specs,
        out_specs=(out_block, out_block),
        compiler_params=pltpu.CompilerParams(
            dimension_semantics=("parallel",),          # images split across v7x's 2 TCs
            vmem_limit_bytes=32 * 1024 * 1024),         # safe on v5e/v6e/v7x
        cost_estimate=cost,
    )(x1, x2, *weights)

    # [B, C, H*W] is already NCHW order -> contiguous (free) reshape only.
    return y1f.reshape(B, C, H, W), y2f.reshape(B, C, H, W)


# --------------------------------------------------------------------------------------
# Deterministic parameter init (Conv-ReLU-Conv stand-in for DownNet / CopyUpNet)
# --------------------------------------------------------------------------------------

def make_subnet_params(key, c_in, c_hidden, c_out):
    k1, k2, k3, k4 = jax.random.split(key, 4)
    return {
        "w1": 0.1 * jax.random.normal(k1, (c_hidden, c_in, 3, 3), jnp.float32),
        "b1": 0.1 * jax.random.normal(k2, (c_hidden,), jnp.float32),
        "w2": 0.1 * jax.random.normal(k3, (c_out, c_hidden, 3, 3), jnp.float32),
        "b2": 0.1 * jax.random.normal(k4, (c_out,), jnp.float32),
    }


def make_ib_params(key, c1, c2, c_hidden):
    kr, ky, kf = jax.random.split(key, 3)
    return {
        "r": make_subnet_params(kr, c1, c_hidden, c2),   # r: y1 -> scale for x2
        "y": make_subnet_params(ky, c1, c_hidden, c2),   # y: y1 -> shift for x2
        "f": make_subnet_params(kf, c2, c_hidden, c1),   # f: x2 -> shift for x1
    }


# --------------------------------------------------------------------------------------
# Main
# --------------------------------------------------------------------------------------

if __name__ == "__main__":
    B, C, Hs, Ws = 2, 4, 16, 16      # small NCHW shapes
    C_HID = 32                       # small stand-in for the reference H=128 hidden width

    key = jax.random.PRNGKey(0)
    kx1, kx2, kp = jax.random.split(key, 3)
    x1 = 0.1 * jax.random.normal(kx1, (B, C, Hs, Ws), jnp.float32)
    x2 = 0.1 * jax.random.normal(kx2, (B, C, Hs, Ws), jnp.float32)
    params = make_ib_params(kp, C, C, C_HID)

    fwd = jax.jit(functools.partial(ib_apply, rev=False))
    bwd = jax.jit(functools.partial(ib_apply, rev=True))

    # forward
    y1, y2 = fwd(x1, x2, params)
    jax.block_until_ready((y1, y2))

    # reverse (invertibility sanity check)
    r1, r2 = bwd(y1, y2, params)
    jax.block_until_ready((r1, r2))

    assert r1.shape == x1.shape and r2.shape == x2.shape
    assert jnp.allclose(r2, x2, atol=1e-3, rtol=1e-3)
    assert jnp.allclose(r1, x1, atol=1e-3, rtol=1e-3)

    print("KERNEL_OK")
</pallas_src>

<mosaic_0001>
module attributes {stable_mosaic.version = 11 : i64} {
  func.func @kernel(%arg0: i32, %arg1: memref<1x16x16x4xf32, #tpu.memory_space<vmem>>, %arg2: memref<1x16x16x4xf32, #tpu.memory_space<vmem>>, %arg3: memref<36x32xbf16, #tpu.memory_space<vmem>>, %arg4: memref<1x32xf32, #tpu.memory_space<vmem>>, %arg5: memref<288x4xbf16, #tpu.memory_space<vmem>>, %arg6: memref<1x4xf32, #tpu.memory_space<vmem>>, %arg7: memref<36x32xbf16, #tpu.memory_space<vmem>>, %arg8: memref<1x32xf32, #tpu.memory_space<vmem>>, %arg9: memref<288x4xbf16, #tpu.memory_space<vmem>>, %arg10: memref<1x4xf32, #tpu.memory_space<vmem>>, %arg11: memref<36x32xbf16, #tpu.memory_space<vmem>>, %arg12: memref<1x32xf32, #tpu.memory_space<vmem>>, %arg13: memref<288x4xbf16, #tpu.memory_space<vmem>>, %arg14: memref<1x4xf32, #tpu.memory_space<vmem>>, %arg15: memref<1x4x256xf32, #tpu.memory_space<vmem>>, %arg16: memref<1x4x256xf32, #tpu.memory_space<vmem>>) attributes {dimension_semantics = [#tpu.dimension_semantics<parallel>], iteration_bounds = array<i64: 2>, scalar_prefetch = 0 : i64, scratch_operands = 0 : i64, tpu.core_type = #tpu.core_type<tc>, window_params = [{transform_indices = @transform_0, window_bounds = array<i64: 1, 16, 16, 4>}, {transform_indices = @transform_1, window_bounds = array<i64: 1, 16, 16, 4>}, {pipeline_mode = #tpu.pipeline_mode<synchronous>, transform_indices = @transform_2, window_bounds = array<i64: 36, 32>}, {pipeline_mode = #tpu.pipeline_mode<synchronous>, transform_indices = @transform_3, window_bounds = array<i64: 1, 32>}, {pipeline_mode = #tpu.pipeline_mode<synchronous>, transform_indices = @transform_4, window_bounds = array<i64: 288, 4>}, {pipeline_mode = #tpu.pipeline_mode<synchronous>, transform_indices = @transform_5, window_bounds = array<i64: 1, 4>}, {pipeline_mode = #tpu.pipeline_mode<synchronous>, transform_indices = @transform_6, window_bounds = array<i64: 36, 32>}, {pipeline_mode = #tpu.pipeline_mode<synchronous>, transform_indices = @transform_7, window_bounds = array<i64: 1, 32>}, {pipeline_mode = #tpu.pipeline_mode<synchronous>, transform_indices = @transform_8, window_bounds = array<i64: 288, 4>}, {pipeline_mode = #tpu.pipeline_mode<synchronous>, transform_indices = @transform_9, window_bounds = array<i64: 1, 4>}, {pipeline_mode = #tpu.pipeline_mode<synchronous>, transform_indices = @transform_10, window_bounds = array<i64: 36, 32>}, {pipeline_mode = #tpu.pipeline_mode<synchronous>, transform_indices = @transform_11, window_bounds = array<i64: 1, 32>}, {pipeline_mode = #tpu.pipeline_mode<synchronous>, transform_indices = @transform_12, window_bounds = array<i64: 288, 4>}, {pipeline_mode = #tpu.pipeline_mode<synchronous>, transform_indices = @transform_13, window_bounds = array<i64: 1, 4>}, {transform_indices = @transform_14, window_bounds = array<i64: 1, 4, 256>}, {transform_indices = @transform_15, window_bounds = array<i64: 1, 4, 256>}]} {
    %c0 = arith.constant 0 : index
    %c0_0 = arith.constant 0 : index
    %c0_1 = arith.constant 0 : index
    %c0_2 = arith.constant 0 : index
    %0 = vector.load %arg1[%c0, %c0_0, %c0_1, %c0_2] : memref<1x16x16x4xf32, #tpu.memory_space<vmem>>, vector<1x16x16x4xf32>
    %1 = vector.shape_cast %0 : vector<1x16x16x4xf32> to vector<16x16x4xf32>
    %c0_3 = arith.constant 0 : index
    %c0_4 = arith.constant 0 : index
    %c0_5 = arith.constant 0 : index
    %c0_6 = arith.constant 0 : index
    %2 = vector.load %arg2[%c0_3, %c0_4, %c0_5, %c0_6] : memref<1x16x16x4xf32, #tpu.memory_space<vmem>>, vector<1x16x16x4xf32>
    %3 = vector.shape_cast %2 : vector<1x16x16x4xf32> to vector<16x16x4xf32>
    %4 = arith.truncf %3 : vector<16x16x4xf32> to vector<16x16x4xbf16>
    %cst = arith.constant 0.000000e+00 : bf16
    %5 = vector.broadcast %cst : bf16 to vector<1x16x4xbf16>
    %6 = tpu.concatenate %5, %4, %5 in 0 : vector<1x16x4xbf16>, vector<16x16x4xbf16>, vector<1x16x4xbf16> -> vector<18x16x4xbf16>
    %cst_7 = arith.constant 0.000000e+00 : bf16
    %7 = vector.broadcast %cst_7 : bf16 to vector<18x1x4xbf16>
    %8 = tpu.concatenate %7, %6, %7 in 1 : vector<18x1x4xbf16>, vector<18x16x4xbf16>, vector<18x1x4xbf16> -> vector<18x18x4xbf16>
    %9 = vector.extract_strided_slice %8 {offsets = [0, 0, 0], sizes = [16, 16, 4], strides = [1, 1, 1]} : vector<18x18x4xbf16> to vector<16x16x4xbf16>
    %10 = vector.extract_strided_slice %8 {offsets = [0, 1, 0], sizes = [16, 16, 4], strides = [1, 1, 1]} : vector<18x18x4xbf16> to vector<16x16x4xbf16>
    %11 = vector.extract_strided_slice %8 {offsets = [0, 2, 0], sizes = [16, 16, 4], strides = [1, 1, 1]} : vector<18x18x4xbf16> to vector<16x16x4xbf16>
    %12 = vector.extract_strided_slice %8 {offsets = [1, 0, 0], sizes = [16, 16, 4], strides = [1, 1, 1]} : vector<18x18x4xbf16> to vector<16x16x4xbf16>
    %13 = vector.extract_strided_slice %8 {offsets = [1, 1, 0], sizes = [16, 16, 4], strides = [1, 1, 1]} : vector<18x18x4xbf16> to vector<16x16x4xbf16>
    %14 = vector.extract_strided_slice %8 {offsets = [1, 2, 0], sizes = [16, 16, 4], strides = [1, 1, 1]} : vector<18x18x4xbf16> to vector<16x16x4xbf16>
    %15 = vector.extract_strided_slice %8 {offsets = [2, 0, 0], sizes = [16, 16, 4], strides = [1, 1, 1]} : vector<18x18x4xbf16> to vector<16x16x4xbf16>
    %16 = vector.extract_strided_slice %8 {offsets = [2, 1, 0], sizes = [16, 16, 4], strides = [1, 1, 1]} : vector<18x18x4xbf16> to vector<16x16x4xbf16>
    %17 = vector.extract_strided_slice %8 {offsets = [2, 2, 0], sizes = [16, 16, 4], strides = [1, 1, 1]} : vector<18x18x4xbf16> to vector<16x16x4xbf16>
    %18 = tpu.concatenate %9, %10, %11, %12, %13, %14, %15, %16, %17 in 2 : vector<16x16x4xbf16>, vector<16x16x4xbf16>, vector<16x16x4xbf16>, vector<16x16x4xbf16>, vector<16x16x4xbf16>, vector<16x16x4xbf16>, vector<16x16x4xbf16>, vector<16x16x4xbf16>, vector<16x16x4xbf16> -> vector<16x16x36xbf16>
    %19 = vector.shape_cast %18 : vector<16x16x36xbf16> to vector<256x36xbf16>
    %c0_8 = arith.constant 0 : index
    %c0_9 = arith.constant 0 : index
    %20 = vector.load %arg3[%c0_8, %c0_9] : memref<36x32xbf16, #tpu.memory_space<vmem>>, vector<36x32xbf16>
    %cst_10 = arith.constant dense<0.000000e+00> : vector<256x32xf32>
    %21 = tpu.matmul %19, %20, %cst_10 {dimension_numbers = #tpu.dot_dimension_numbers<[1], [0], [0], [1], [0, 0, 1, 1], [], []>} : vector<256x36xbf16>, vector<36x32xbf16>, vector<256x32xf32> -> vector<256x32xf32>
    %c0_11 = arith.constant 0 : index
    %c0_12 = arith.constant 0 : index
    %22 = vector.load %arg4[%c0_11, %c0_12] : memref<1x32xf32, #tpu.memory_space<vmem>>, vector<1x32xf32>
    %23 = vector.broadcast %22 : vector<1x32xf32> to vector<256x32xf32>
    %24 = arith.addf %21, %23 : vector<256x32xf32>
    %cst_13 = arith.constant 0.000000e+00 : f32
    %25 = vector.broadcast %cst_13 : f32 to vector<256x32xf32>
    %26 = arith.maximumf %24, %25 : vector<256x32xf32>
    %27 = arith.truncf %26 : vector<256x32xf32> to vector<256x32xbf16>
    %28 = vector.shape_cast %27 : vector<256x32xbf16> to vector<16x16x32xbf16>
    %cst_14 = arith.constant 0.000000e+00 : bf16
    %29 = vector.broadcast %cst_14 : bf16 to vector<1x16x32xbf16>
    %30 = tpu.concatenate %29, %28, %29 in 0 : vector<1x16x32xbf16>, vector<16x16x32xbf16>, vector<1x16x32xbf16> -> vector<18x16x32xbf16>
    %cst_15 = arith.constant 0.000000e+00 : bf16
    %31 = vector.broadcast %cst_15 : bf16 to vector<18x1x32xbf16>
    %32 = tpu.concatenate %31, %30, %31 in 1 : vector<18x1x32xbf16>, vector<18x16x32xbf16>, vector<18x1x32xbf16> -> vector<18x18x32xbf16>
    %33 = vector.extract_strided_slice %32 {offsets = [0, 0, 0], sizes = [16, 16, 32], strides = [1, 1, 1]} : vector<18x18x32xbf16> to vector<16x16x32xbf16>
    %34 = vector.extract_strided_slice %32 {offsets = [0, 1, 0], sizes = [16, 16, 32], strides = [1, 1, 1]} : vector<18x18x32xbf16> to vector<16x16x32xbf16>
    %35 = vector.extract_strided_slice %32 {offsets = [0, 2, 0], sizes = [16, 16, 32], strides = [1, 1, 1]} : vector<18x18x32xbf16> to vector<16x16x32xbf16>
    %36 = vector.extract_strided_slice %32 {offsets = [1, 0, 0], sizes = [16, 16, 32], strides = [1, 1, 1]} : vector<18x18x32xbf16> to vector<16x16x32xbf16>
    %37 = vector.extract_strided_slice %32 {offsets = [1, 1, 0], sizes = [16, 16, 32], strides = [1, 1, 1]} : vector<18x18x32xbf16> to vector<16x16x32xbf16>
    %38 = vector.extract_strided_slice %32 {offsets = [1, 2, 0], sizes = [16, 16, 32], strides = [1, 1, 1]} : vector<18x18x32xbf16> to vector<16x16x32xbf16>
    %39 = vector.extract_strided_slice %32 {offsets = [2, 0, 0], sizes = [16, 16, 32], strides = [1, 1, 1]} : vector<18x18x32xbf16> to vector<16x16x32xbf16>
    %40 = vector.extract_strided_slice %32 {offsets = [2, 1, 0], sizes = [16, 16, 32], strides = [1, 1, 1]} : vector<18x18x32xbf16> to vector<16x16x32xbf16>
    %41 = vector.extract_strided_slice %32 {offsets = [2, 2, 0], sizes = [16, 16, 32], strides = [1, 1, 1]} : vector<18x18x32xbf16> to vector<16x16x32xbf16>
    %42 = tpu.concatenate %33, %34, %35, %36, %37, %38, %39, %40, %41 in 2 : vector<16x16x32xbf16>, vector<16x16x32xbf16>, vector<16x16x32xbf16>, vector<16x16x32xbf16>, vector<16x16x32xbf16>, vector<16x16x32xbf16>, vector<16x16x32xbf16>, vector<16x16x32xbf16>, vector<16x16x32xbf16> -> vector<16x16x288xbf16>
    %43 = vector.shape_cast %42 : vector<16x16x288xbf16> to vector<256x288xbf16>
    %c0_16 = arith.constant 0 : index
    %c0_17 = arith.constant 0 : index
    %44 = vector.load %arg5[%c0_16, %c0_17] : memref<288x4xbf16, #tpu.memory_space<vmem>>, vector<288x4xbf16>
    %cst_18 = arith.constant dense<0.000000e+00> : vector<256x4xf32>
    %45 = tpu.matmul %43, %44, %cst_18 {dimension_numbers = #tpu.dot_dimension_numbers<[1], [0], [0], [1], [0, 0, 1, 1], [], []>} : vector<256x288xbf16>, vector<288x4xbf16>, vector<256x4xf32> -> vector<256x4xf32>
    %c0_19 = arith.constant 0 : index
    %c0_20 = arith.constant 0 : index
    %46 = vector.load %arg6[%c0_19, %c0_20] : memref<1x4xf32, #tpu.memory_space<vmem>>, vector<1x4xf32>
    %47 = vector.broadcast %46 : vector<1x4xf32> to vector<256x4xf32>
    %48 = arith.addf %45, %47 : vector<256x4xf32>
    %49 = vector.shape_cast %1 : vector<16x16x4xf32> to vector<256x4xf32>
    %50 = arith.addf %49, %48 : vector<256x4xf32>
    %51 = vector.shape_cast %50 : vector<256x4xf32> to vector<16x16x4xf32>
    %52 = arith.truncf %51 : vector<16x16x4xf32> to vector<16x16x4xbf16>
    %cst_21 = arith.constant 0.000000e+00 : bf16
    %53 = vector.broadcast %cst_21 : bf16 to vector<1x16x4xbf16>
    %54 = tpu.concatenate %53, %52, %53 in 0 : vector<1x16x4xbf16>, vector<16x16x4xbf16>, vector<1x16x4xbf16> -> vector<18x16x4xbf16>
    %cst_22 = arith.constant 0.000000e+00 : bf16
    %55 = vector.broadcast %cst_22 : bf16 to vector<18x1x4xbf16>
    %56 = tpu.concatenate %55, %54, %55 in 1 : vector<18x1x4xbf16>, vector<18x16x4xbf16>, vector<18x1x4xbf16> -> vector<18x18x4xbf16>
    %57 = vector.extract_strided_slice %56 {offsets = [0, 0, 0], sizes = [16, 16, 4], strides = [1, 1, 1]} : vector<18x18x4xbf16> to vector<16x16x4xbf16>
    %58 = vector.extract_strided_slice %56 {offsets = [0, 1, 0], sizes = [16, 16, 4], strides = [1, 1, 1]} : vector<18x18x4xbf16> to vector<16x16x4xbf16>
    %59 = vector.extract_strided_slice %56 {offsets = [0, 2, 0], sizes = [16, 16, 4], strides = [1, 1, 1]} : vector<18x18x4xbf16> to vector<16x16x4xbf16>
    %60 = vector.extract_strided_slice %56 {offsets = [1, 0, 0], sizes = [16, 16, 4], strides = [1, 1, 1]} : vector<18x18x4xbf16> to vector<16x16x4xbf16>
    %61 = vector.extract_strided_slice %56 {offsets = [1, 1, 0], sizes = [16, 16, 4], strides = [1, 1, 1]} : vector<18x18x4xbf16> to vector<16x16x4xbf16>
    %62 = vector.extract_strided_slice %56 {offsets = [1, 2, 0], sizes = [16, 16, 4], strides = [1, 1, 1]} : vector<18x18x4xbf16> to vector<16x16x4xbf16>
    %63 = vector.extract_strided_slice %56 {offsets = [2, 0, 0], sizes = [16, 16, 4], strides = [1, 1, 1]} : vector<18x18x4xbf16> to vector<16x16x4xbf16>
    %64 = vector.extract_strided_slice %56 {offsets = [2, 1, 0], sizes = [16, 16, 4], strides = [1, 1, 1]} : vector<18x18x4xbf16> to vector<16x16x4xbf16>
    %65 = vector.extract_strided_slice %56 {offsets = [2, 2, 0], sizes = [16, 16, 4], strides = [1, 1, 1]} : vector<18x18x4xbf16> to vector<16x16x4xbf16>
    %66 = tpu.concatenate %57, %58, %59, %60, %61, %62, %63, %64, %65 in 2 : vector<16x16x4xbf16>, vector<16x16x4xbf16>, vector<16x16x4xbf16>, vector<16x16x4xbf16>, vector<16x16x4xbf16>, vector<16x16x4xbf16>, vector<16x16x4xbf16>, vector<16x16x4xbf16>, vector<16x16x4xbf16> -> vector<16x16x36xbf16>
    %67 = vector.shape_cast %66 : vector<16x16x36xbf16> to vector<256x36xbf16>
    %c0_23 = arith.constant 0 : index
    %c0_24 = arith.constant 0 : index
    %68 = vector.load %arg7[%c0_23, %c0_24] : memref<36x32xbf16, #tpu.memory_space<vmem>>, vector<36x32xbf16>
    %cst_25 = arith.constant dense<0.000000e+00> : vector<256x32xf32>
    %69 = tpu.matmul %67, %68, %cst_25 {dimension_numbers = #tpu.dot_dimension_numbers<[1], [0], [0], [1], [0, 0, 1, 1], [], []>} : vector<256x36xbf16>, vector<36x32xbf16>, vector<256x32xf32> -> vector<256x32xf32>
    %c0_26 = arith.constant 0 : index
    %c0_27 = arith.constant 0 : index
    %70 = vector.load %arg8[%c0_26, %c0_27] : memref<1x32xf32, #tpu.memory_space<vmem>>, vector<1x32xf32>
    %71 = vector.broadcast %70 : vector<1x32xf32> to vector<256x32xf32>
    %72 = arith.addf %69, %71 : vector<256x32xf32>
    %cst_28 = arith.constant 0.000000e+00 : f32
    %73 = vector.broadcast %cst_28 : f32 to vector<256x32xf32>
    %74 = arith.maximumf %72, %73 : vector<256x32xf32>
    %c0_29 = arith.constant 0 : index
    %c0_30 = arith.constant 0 : index
    %75 = vector.load %arg11[%c0_29, %c0_30] : memref<36x32xbf16, #tpu.memory_space<vmem>>, vector<36x32xbf16>
    %cst_31 = arith.constant dense<0.000000e+00> : vector<256x32xf32>
    %76 = tpu.matmul %67, %75, %cst_31 {dimension_numbers = #tpu.dot_dimension_numbers<[1], [0], [0], [1], [0, 0, 1, 1], [], []>} : vector<256x36xbf16>, vector<36x32xbf16>, vector<256x32xf32> -> vector<256x32xf32>
    %c0_32 = arith.constant 0 : index
    %c0_33 = arith.constant 0 : index
    %77 = vector.load %arg12[%c0_32, %c0_33] : memref<1x32xf32, #tpu.memory_space<vmem>>, vector<1x32xf32>
    %78 = vector.broadcast %77 : vector<1x32xf32> to vector<256x32xf32>
    %79 = arith.addf %76, %78 : vector<256x32xf32>
    %cst_34 = arith.constant 0.000000e+00 : f32
    %80 = vector.broadcast %cst_34 : f32 to vector<256x32xf32>
    %81 = arith.maximumf %79, %80 : vector<256x32xf32>
    %82 = arith.truncf %74 : vector<256x32xf32> to vector<256x32xbf16>
    %83 = vector.shape_cast %82 : vector<256x32xbf16> to vector<16x16x32xbf16>
    %cst_35 = arith.constant 0.000000e+00 : bf16
    %84 = vector.broadcast %cst_35 : bf16 to vector<1x16x32xbf16>
    %85 = tpu.concatenate %84, %83, %84 in 0 : vector<1x16x32xbf16>, vector<16x16x32xbf16>, vector<1x16x32xbf16> -> vector<18x16x32xbf16>
    %cst_36 = arith.constant 0.000000e+00 : bf16
    %86 = vector.broadcast %cst_36 : bf16 to vector<18x1x32xbf16>
    %87 = tpu.concatenate %86, %85, %86 in 1 : vector<18x1x32xbf16>, vector<18x16x32xbf16>, vector<18x1x32xbf16> -> vector<18x18x32xbf16>
    %88 = vector.extract_strided_slice %87 {offsets = [0, 0, 0], sizes = [16, 16, 32], strides = [1, 1, 1]} : vector<18x18x32xbf16> to vector<16x16x32xbf16>
    %89 = vector.extract_strided_slice %87 {offsets = [0, 1, 0], sizes = [16, 16, 32], strides = [1, 1, 1]} : vector<18x18x32xbf16> to vector<16x16x32xbf16>
    %90 = vector.extract_strided_slice %87 {offsets = [0, 2, 0], sizes = [16, 16, 32], strides = [1, 1, 1]} : vector<18x18x32xbf16> to vector<16x16x32xbf16>
    %91 = vector.extract_strided_slice %87 {offsets = [1, 0, 0], sizes = [16, 16, 32], strides = [1, 1, 1]} : vector<18x18x32xbf16> to vector<16x16x32xbf16>
    %92 = vector.extract_strided_slice %87 {offsets = [1, 1, 0], sizes = [16, 16, 32], strides = [1, 1, 1]} : vector<18x18x32xbf16> to vector<16x16x32xbf16>
    %93 = vector.extract_strided_slice %87 {offsets = [1, 2, 0], sizes = [16, 16, 32], strides = [1, 1, 1]} : vector<18x18x32xbf16> to vector<16x16x32xbf16>
    %94 = vector.extract_strided_slice %87 {offsets = [2, 0, 0], sizes = [16, 16, 32], strides = [1, 1, 1]} : vector<18x18x32xbf16> to vector<16x16x32xbf16>
    %95 = vector.extract_strided_slice %87 {offsets = [2, 1, 0], sizes = [16, 16, 32], strides = [1, 1, 1]} : vector<18x18x32xbf16> to vector<16x16x32xbf16>
    %96 = vector.extract_strided_slice %87 {offsets = [2, 2, 0], sizes = [16, 16, 32], strides = [1, 1, 1]} : vector<18x18x32xbf16> to vector<16x16x32xbf16>
    %97 = tpu.concatenate %88, %89, %90, %91, %92, %93, %94, %95, %96 in 2 : vector<16x16x32xbf16>, vector<16x16x32xbf16>, vector<16x16x32xbf16>, vector<16x16x32xbf16>, vector<16x16x32xbf16>, vector<16x16x32xbf16>, vector<16x16x32xbf16>, vector<16x16x32xbf16>, vector<16x16x32xbf16> -> vector<16x16x288xbf16>
    %98 = vector.shape_cast %97 : vector<16x16x288xbf16> to vector<256x288xbf16>
    %c0_37 = arith.constant 0 : index
    %c0_38 = arith.constant 0 : index
    %99 = vector.load %arg9[%c0_37, %c0_38] : memref<288x4xbf16, #tpu.memory_space<vmem>>, vector<288x4xbf16>
    %cst_39 = arith.constant dense<0.000000e+00> : vector<256x4xf32>
    %100 = tpu.matmul %98, %99, %cst_39 {dimension_numbers = #tpu.dot_dimension_numbers<[1], [0], [0], [1], [0, 0, 1, 1], [], []>} : vector<256x288xbf16>, vector<288x4xbf16>, vector<256x4xf32> -> vector<256x4xf32>
    %c0_40 = arith.constant 0 : index
    %c0_41 = arith.constant 0 : index
    %101 = vector.load %arg10[%c0_40, %c0_41] : memref<1x4xf32, #tpu.memory_space<vmem>>, vector<1x4xf32>
    %102 = vector.broadcast %101 : vector<1x4xf32> to vector<256x4xf32>
    %103 = arith.addf %100, %102 : vector<256x4xf32>
    %104 = arith.truncf %81 : vector<256x32xf32> to vector<256x32xbf16>
    %105 = vector.shape_cast %104 : vector<256x32xbf16> to vector<16x16x32xbf16>
    %cst_42 = arith.constant 0.000000e+00 : bf16
    %106 = vector.broadcast %cst_42 : bf16 to vector<1x16x32xbf16>
    %107 = tpu.concatenate %106, %105, %106 in 0 : vector<1x16x32xbf16>, vector<16x16x32xbf16>, vector<1x16x32xbf16> -> vector<18x16x32xbf16>
    %cst_43 = arith.constant 0.000000e+00 : bf16
    %108 = vector.broadcast %cst_43 : bf16 to vector<18x1x32xbf16>
    %109 = tpu.concatenate %108, %107, %108 in 1 : vector<18x1x32xbf16>, vector<18x16x32xbf16>, vector<18x1x32xbf16> -> vector<18x18x32xbf16>
    %110 = vector.extract_strided_slice %109 {offsets = [0, 0, 0], sizes = [16, 16, 32], strides = [1, 1, 1]} : vector<18x18x32xbf16> to vector<16x16x32xbf16>
    %111 = vector.extract_strided_slice %109 {offsets = [0, 1, 0], sizes = [16, 16, 32], strides = [1, 1, 1]} : vector<18x18x32xbf16> to vector<16x16x32xbf16>
    %112 = vector.extract_strided_slice %109 {offsets = [0, 2, 0], sizes = [16, 16, 32], strides = [1, 1, 1]} : vector<18x18x32xbf16> to vector<16x16x32xbf16>
    %113 = vector.extract_strided_slice %109 {offsets = [1, 0, 0], sizes = [16, 16, 32], strides = [1, 1, 1]} : vector<18x18x32xbf16> to vector<16x16x32xbf16>
    %114 = vector.extract_strided_slice %109 {offsets = [1, 1, 0], sizes = [16, 16, 32], strides = [1, 1, 1]} : vector<18x18x32xbf16> to vector<16x16x32xbf16>
    %115 = vector.extract_strided_slice %109 {offsets = [1, 2, 0], sizes = [16, 16, 32], strides = [1, 1, 1]} : vector<18x18x32xbf16> to vector<16x16x32xbf16>
    %116 = vector.extract_strided_slice %109 {offsets = [2, 0, 0], sizes = [16, 16, 32], strides = [1, 1, 1]} : vector<18x18x32xbf16> to vector<16x16x32xbf16>
    %117 = vector.extract_strided_slice %109 {offsets = [2, 1, 0], sizes = [16, 16, 32], strides = [1, 1, 1]} : vector<18x18x32xbf16> to vector<16x16x32xbf16>
    %118 = vector.extract_strided_slice %109 {offsets = [2, 2, 0], sizes = [16, 16, 32], strides = [1, 1, 1]} : vector<18x18x32xbf16> to vector<16x16x32xbf16>
    %119 = tpu.concatenate %110, %111, %112, %113, %114, %115, %116, %117, %118 in 2 : vector<16x16x32xbf16>, vector<16x16x32xbf16>, vector<16x16x32xbf16>, vector<16x16x32xbf16>, vector<16x16x32xbf16>, vector<16x16x32xbf16>, vector<16x16x32xbf16>, vector<16x16x32xbf16>, vector<16x16x32xbf16> -> vector<16x16x288xbf16>
    %120 = vector.shape_cast %119 : vector<16x16x288xbf16> to vector<256x288xbf16>
    %c0_44 = arith.constant 0 : index
    %c0_45 = arith.constant 0 : index
    %121 = vector.load %arg13[%c0_44, %c0_45] : memref<288x4xbf16, #tpu.memory_space<vmem>>, vector<288x4xbf16>
    %cst_46 = arith.constant dense<0.000000e+00> : vector<256x4xf32>
    %122 = tpu.matmul %120, %121, %cst_46 {dimension_numbers = #tpu.dot_dimension_numbers<[1], [0], [0], [1], [0, 0, 1, 1], [], []>} : vector<256x288xbf16>, vector<288x4xbf16>, vector<256x4xf32> -> vector<256x4xf32>
    %c0_47 = arith.constant 0 : index
    %c0_48 = arith.constant 0 : index
    %123 = vector.load %arg14[%c0_47, %c0_48] : memref<1x4xf32, #tpu.memory_space<vmem>>, vector<1x4xf32>
    %124 = vector.broadcast %123 : vector<1x4xf32> to vector<256x4xf32>
    %125 = arith.addf %122, %124 : vector<256x4xf32>
    %126 = math.exp %103 : vector<256x4xf32>
    %127 = vector.shape_cast %3 : vector<16x16x4xf32> to vector<256x4xf32>
    %128 = arith.mulf %126, %127 : vector<256x4xf32>
    %129 = arith.addf %128, %125 : vector<256x4xf32>
    %130 = tpu.transpose %50, [1, 0] : vector<256x4xf32> -> vector<4x256xf32>
    %c0_49 = arith.constant 0 : index
    %c0_50 = arith.constant 0 : index
    %c0_51 = arith.constant 0 : index
    %131 = vector.load %arg15[%c0_49, %c0_50, %c0_51] : memref<1x4x256xf32, #tpu.memory_space<vmem>>, vector<1x4x256xf32>
    %132 = vector.shape_cast %131 : vector<1x4x256xf32> to vector<4x256xf32>
    %133 = vector.shape_cast %130 : vector<4x256xf32> to vector<1x4x256xf32>
    tpu.vector_store %arg15[%c0_49, %c0_50, %c0_51], %133 {strides = array<i32>} : memref<1x4x256xf32, #tpu.memory_space<vmem>>, vector<1x4x256xf32>,
    %134 = tpu.transpose %129, [1, 0] : vector<256x4xf32> -> vector<4x256xf32>
    %c0_52 = arith.constant 0 : index
    %c0_53 = arith.constant 0 : index
    %c0_54 = arith.constant 0 : index
    %135 = vector.load %arg16[%c0_52, %c0_53, %c0_54] : memref<1x4x256xf32, #tpu.memory_space<vmem>>, vector<1x4x256xf32>
    %136 = vector.shape_cast %135 : vector<1x4x256xf32> to vector<4x256xf32>
    %137 = vector.shape_cast %134 : vector<4x256xf32> to vector<1x4x256xf32>
    tpu.vector_store %arg16[%c0_52, %c0_53, %c0_54], %137 {strides = array<i32>} : memref<1x4x256xf32, #tpu.memory_space<vmem>>, vector<1x4x256xf32>,
    return
  }
  func.func @transform_0(%arg0: i32) -> (i32, i32, i32, i32) {
    %c0_i32 = arith.constant 0 : i32
    %c0_i32_0 = arith.constant 0 : i32
    %c0_i32_1 = arith.constant 0 : i32
    %c0_i32_2 = arith.constant 0 : i32
    return %arg0, %c0_i32, %c0_i32_0, %c0_i32_1 : i32, i32, i32, i32
  }
  func.func @transform_1(%arg0: i32) -> (i32, i32, i32, i32) {
    %c0_i32 = arith.constant 0 : i32
    %c0_i32_0 = arith.constant 0 : i32
    %c0_i32_1 = arith.constant 0 : i32
    %c0_i32_2 = arith.constant 0 : i32
    return %arg0, %c0_i32, %c0_i32_0, %c0_i32_1 : i32, i32, i32, i32
  }
  func.func @transform_2(%arg0: i32) -> (i32, i32) {
    %c0_i32 = arith.constant 0 : i32
    %c0_i32_0 = arith.constant 0 : i32
    %c0_i32_1 = arith.constant 0 : i32
    return %c0_i32, %c0_i32_0 : i32, i32
  }
  func.func @transform_3(%arg0: i32) -> (i32, i32) {
    %c0_i32 = arith.constant 0 : i32
    %c0_i32_0 = arith.constant 0 : i32
    %c0_i32_1 = arith.constant 0 : i32
    return %c0_i32, %c0_i32_0 : i32, i32
  }
  func.func @transform_4(%arg0: i32) -> (i32, i32) {
    %c0_i32 = arith.constant 0 : i32
    %c0_i32_0 = arith.constant 0 : i32
    %c0_i32_1 = arith.constant 0 : i32
    return %c0_i32, %c0_i32_0 : i32, i32
  }
  func.func @transform_5(%arg0: i32) -> (i32, i32) {
    %c0_i32 = arith.constant 0 : i32
    %c0_i32_0 = arith.constant 0 : i32
    %c0_i32_1 = arith.constant 0 : i32
    return %c0_i32, %c0_i32_0 : i32, i32
  }
  func.func @transform_6(%arg0: i32) -> (i32, i32) {
    %c0_i32 = arith.constant 0 : i32
    %c0_i32_0 = arith.constant 0 : i32
    %c0_i32_1 = arith.constant 0 : i32
    return %c0_i32, %c0_i32_0 : i32, i32
  }
  func.func @transform_7(%arg0: i32) -> (i32, i32) {
    %c0_i32 = arith.constant 0 : i32
    %c0_i32_0 = arith.constant 0 : i32
    %c0_i32_1 = arith.constant 0 : i32
    return %c0_i32, %c0_i32_0 : i32, i32
  }
  func.func @transform_8(%arg0: i32) -> (i32, i32) {
    %c0_i32 = arith.constant 0 : i32
    %c0_i32_0 = arith.constant 0 : i32
    %c0_i32_1 = arith.constant 0 : i32
    return %c0_i32, %c0_i32_0 : i32, i32
  }
  func.func @transform_9(%arg0: i32) -> (i32, i32) {
    %c0_i32 = arith.constant 0 : i32
    %c0_i32_0 = arith.constant 0 : i32
    %c0_i32_1 = arith.constant 0 : i32
    return %c0_i32, %c0_i32_0 : i32, i32
  }
  func.func @transform_10(%arg0: i32) -> (i32, i32) {
    %c0_i32 = arith.constant 0 : i32
    %c0_i32_0 = arith.constant 0 : i32
    %c0_i32_1 = arith.constant 0 : i32
    return %c0_i32, %c0_i32_0 : i32, i32
  }
  func.func @transform_11(%arg0: i32) -> (i32, i32) {
    %c0_i32 = arith.constant 0 : i32
    %c0_i32_0 = arith.constant 0 : i32
    %c0_i32_1 = arith.constant 0 : i32
    return %c0_i32, %c0_i32_0 : i32, i32
  }
  func.func @transform_12(%arg0: i32) -> (i32, i32) {
    %c0_i32 = arith.constant 0 : i32
    %c0_i32_0 = arith.constant 0 : i32
    %c0_i32_1 = arith.constant 0 : i32
    return %c0_i32, %c0_i32_0 : i32, i32
  }
  func.func @transform_13(%arg0: i32) -> (i32, i32) {
    %c0_i32 = arith.constant 0 : i32
    %c0_i32_0 = arith.constant 0 : i32
    %c0_i32_1 = arith.constant 0 : i32
    return %c0_i32, %c0_i32_0 : i32, i32
  }
  func.func @transform_14(%arg0: i32) -> (i32, i32, i32) {
    %c0_i32 = arith.constant 0 : i32
    %c0_i32_0 = arith.constant 0 : i32
    %c0_i32_1 = arith.constant 0 : i32
    return %arg0, %c0_i32, %c0_i32_0 : i32, i32, i32
  }
  func.func @transform_15(%arg0: i32) -> (i32, i32, i32) {
    %c0_i32 = arith.constant 0 : i32
    %c0_i32_0 = arith.constant 0 : i32
    %c0_i32_1 = arith.constant 0 : i32
    return %arg0, %c0_i32, %c0_i32_0 : i32, i32, i32
  }
}

</mosaic_0001>

<llo_original>
// kernel: ib_apply.1
$region0: #{ib_apply.1}
  #allocation0 [shape = 'u32[]', space=smem, size = 0x4, offset = 0x4, fixed_abs, tag = 'smem constant byte address 0x4 - core index']
  #allocation1 [shape = 'u32[72,128]{1,0:T(1,128)}', space=vmem, size = 0x9000, scoped, tag = 'internal scratch']
  %s0 = inlined_call_operand.vmem [shape: f32[2,16,16,4], index: 0, kind: input, shape index: {}]
  %s1 = inlined_call_operand.vmem [shape: f32[2,16,16,4], index: 1, kind: input, shape index: {}]
  %s2 = inlined_call_operand.vmem [shape: bf16[36,32], index: 2, kind: input, shape index: {}]
  %s3 = inlined_call_operand.vmem [shape: f32[1,32], index: 3, kind: input, shape index: {}]
  %s4 = inlined_call_operand.vmem [shape: bf16[288,4], index: 4, kind: input, shape index: {}]
  %s5 = inlined_call_operand.vmem [shape: f32[1,4], index: 5, kind: input, shape index: {}]
  %s6 = inlined_call_operand.vmem [shape: bf16[36,32], index: 6, kind: input, shape index: {}]
  %s7 = inlined_call_operand.vmem [shape: f32[1,32], index: 7, kind: input, shape index: {}]
  %s8 = inlined_call_operand.vmem [shape: bf16[288,4], index: 8, kind: input, shape index: {}]
  %s9 = inlined_call_operand.vmem [shape: f32[1,4], index: 9, kind: input, shape index: {}]
  %s10 = inlined_call_operand.vmem [shape: bf16[36,32], index: 10, kind: input, shape index: {}]
  %s11 = inlined_call_operand.vmem [shape: f32[1,32], index: 11, kind: input, shape index: {}]
  %s12 = inlined_call_operand.vmem [shape: bf16[288,4], index: 12, kind: input, shape index: {}]
  %s13 = inlined_call_operand.vmem [shape: f32[1,4], index: 13, kind: input, shape index: {}]
  %s14 = inlined_call_operand.vmem [shape: f32[2,4,256], index: 14, kind: output, shape index: {0}]
  %s15 = inlined_call_operand.vmem [shape: f32[2,4,256], index: 15, kind: output, shape index: {1}]
  %16 = xla_tuple %s14, %s15
  %s17 = sld [smem:[#allocation0]]
  $region97: #{ib_apply.1} parent=0
    _
  %s19 = ssub.s32 1, %s17
  %s20 = scalar_select 0, %s19, %s17
  loop: start=0, step=1, limit=4
  $region2: #{ib_apply.1} parent=0 // loop_pre_header
    _
  $region3: #{ib_apply.1} parent=0 // loop_header
    %s22 = sphi 0, %s26
    %p23 = scmp.ge.s32.totalorder %s22, 4
    %s32 = sphi 0, %s34
    %s35 = sphi 0, %s32
    %s36 = sphi 0, %s35
    %s52 = sphi 0, %s36
    %s58 = sphi 0, %s60
    %s61 = sphi 0, %s58
    %s62 = sphi 0, %s61
    %s78 = sphi 0, %s62
    %s82 = sphi 0, %s82
    %s84 = sphi 0, %s82
    %s85 = sphi 0, %s84
    %s99 = sphi 0, %s85
    %s103 = sphi 0, %s103
    %s105 = sphi 0, %s103
    %s106 = sphi 0, %s105
    %s120 = sphi 0, %s106
    %s124 = sphi 0, %s124
    %s126 = sphi 0, %s124
    %s127 = sphi 0, %s126
    %s141 = sphi 0, %s127
    %s145 = sphi 0, %s145
    %s147 = sphi 0, %s145
    %s148 = sphi 0, %s147
    %s162 = sphi 0, %s148
    %s166 = sphi 0, %s166
    %s168 = sphi 0, %s166
    %s169 = sphi 0, %s168
    %s183 = sphi 0, %s169
    %s187 = sphi 0, %s187
    %s189 = sphi 0, %s187
    %s190 = sphi 0, %s189
    %s204 = sphi 0, %s190
    %s208 = sphi 0, %s208
    %s210 = sphi 0, %s208
    %s211 = sphi 0, %s210
    %s225 = sphi 0, %s211
    %s229 = sphi 0, %s229
    %s231 = sphi 0, %s229
    %s232 = sphi 0, %s231
    %s246 = sphi 0, %s232
    %s250 = sphi 0, %s250
    %s252 = sphi 0, %s250
    %s253 = sphi 0, %s252
    %s267 = sphi 0, %s253
    %s271 = sphi 0, %s271
    %s273 = sphi 0, %s271
    %s274 = sphi 0, %s273
    %s288 = sphi 0, %s274
    %s292 = sphi 0, %s292
    %s294 = sphi 0, %s292
    %s295 = sphi 0, %s294
    %s309 = sphi 0, %s295
    %s313 = sphi 0, %s313
    %s315 = sphi 0, %s313
    %s316 = sphi 0, %s315
    %s330 = sphi 0, %s316
    %s336 = sphi 0, %s338
    %s339 = sphi 0, %s336
    %s340 = sphi 0, %s339
    %s356 = sphi 0, %s340
    %s362 = sphi 0, %s364
    %s365 = sphi 0, %s362
    %s366 = sphi 0, %s365
    %s382 = sphi 0, %s366
  $region4: #{ib_apply.1} parent=0 // loop_header_branch
    %25 = sbr.rel (%p23) target = $region8
  $region5: #{ib_apply.1} parent=0 // loop_body
    %s27 = ssub.s32 %s22, 1
    %s28 = ssub.s32 %s22, 2
    %s29 = sadd.s32 %s22, 1
    %s30 = ssub.s32 %s22, %s29
    %p31 = scmp.eq.s32.totalorder %s30, 0
    %s33 = sadd.s32 %s32, 1
    %s34 = scalar_select %p31, %s32, %s33
    %p37 = pneg %p31
    %p38 = scmp.eq.s32.totalorder %s22, 1
    %p39 = por %p37, %p38
    %p40 = scmp.ne.s32.totalorder %s32, %s35
    %p41 = scmp.eq.s32.totalorder %s22, 0
    %p42 = por %p40, %p41
    %p43 = scmp.ne.s32.totalorder %s32, %s35
    %p44 = scmp.eq.s32.totalorder %s27, 1
    %p45 = por %p43, %p44
    %p46 = scmp.ne.s32.totalorder %s35, %s36
    %p47 = scmp.eq.s32.totalorder %s27, 0
    %p48 = por %p46, %p47
    %p49 = scmp.ne.s32.totalorder %s35, %s36
    %p50 = scmp.eq.s32.totalorder %s28, 1
    %p51 = por %p49, %p50
    %p53 = scmp.ne.s32.totalorder %s36, %s52
    %p54 = scmp.eq.s32.totalorder %s28, 0
    %p55 = por %p53, %p54
    %s56 = ssub.s32 %s22, %s29
    %p57 = scmp.eq.s32.totalorder %s56, 0
    %s59 = sadd.s32 %s58, 1
    %s60 = scalar_select %p57, %s58, %s59
    %p63 = pneg %p57
    %p64 = scmp.eq.s32.totalorder %s22, 1
    %p65 = por %p63, %p64
    %p66 = scmp.ne.s32.totalorder %s58, %s61
    %p67 = scmp.eq.s32.totalorder %s22, 0
    %p68 = por %p66, %p67
    %p69 = scmp.ne.s32.totalorder %s58, %s61
    %p70 = scmp.eq.s32.totalorder %s27, 1
    %p71 = por %p69, %p70
    %p72 = scmp.ne.s32.totalorder %s61, %s62
    %p73 = scmp.eq.s32.totalorder %s27, 0
    %p74 = por %p72, %p73
    %p75 = scmp.ne.s32.totalorder %s61, %s62
    %p76 = scmp.eq.s32.totalorder %s28, 1
    %p77 = por %p75, %p76
    %p79 = scmp.ne.s32.totalorder %s62, %s78
    %p80 = scmp.eq.s32.totalorder %s28, 0
    %p81 = por %p79, %p80
    %s83 = sadd.s32 %s82, 1
    %p86 = scmp.eq.s32.totalorder %s22, 1
    %p87 = scmp.ne.s32.totalorder %s82, %s84
    %p88 = scmp.eq.s32.totalorder %s22, 0
    %p89 = por %p87, %p88
    %p90 = scmp.ne.s32.totalorder %s82, %s84
    %p91 = scmp.eq.s32.totalorder %s27, 1
    %p92 = por %p90, %p91
    %p93 = scmp.ne.s32.totalorder %s84, %s85
    %p94 = scmp.eq.s32.totalorder %s27, 0
    %p95 = por %p93, %p94
    %p96 = scmp.ne.s32.totalorder %s84, %s85
    %p97 = scmp.eq.s32.totalorder %s28, 1
    %p98 = por %p96, %p97
    %p100 = scmp.ne.s32.totalorder %s85, %s99
    %p101 = scmp.eq.s32.totalorder %s28, 0
    %p102 = por %p100, %p101
    %s104 = sadd.s32 %s103, 1
    %p107 = scmp.eq.s32.totalorder %s22, 1
    %p108 = scmp.ne.s32.totalorder %s103, %s105
    %p109 = scmp.eq.s32.totalorder %s22, 0
    %p110 = por %p108, %p109
    %p111 = scmp.ne.s32.totalorder %s103, %s105
    %p112 = scmp.eq.s32.totalorder %s27, 1
    %p113 = por %p111, %p112
    %p114 = scmp.ne.s32.totalorder %s105, %s106
    %p115 = scmp.eq.s32.totalorder %s27, 0
    %p116 = por %p114, %p115
    %p117 = scmp.ne.s32.totalorder %s105, %s106
    %p118 = scmp.eq.s32.totalorder %s28, 1
    %p119 = por %p117, %p118
    %p121 = scmp.ne.s32.totalorder %s106, %s120
    %p122 = scmp.eq.s32.totalorder %s28, 0
    %p123 = por %p121, %p122
    %s125 = sadd.s32 %s124, 1
    %p128 = scmp.eq.s32.totalorder %s22, 1
    %p129 = scmp.ne.s32.totalorder %s124, %s126
    %p130 = scmp.eq.s32.totalorder %s22, 0
    %p131 = por %p129, %p130
    %p132 = scmp.ne.s32.totalorder %s124, %s126
    %p133 = scmp.eq.s32.totalorder %s27, 1
    %p134 = por %p132, %p133
    %p135 = scmp.ne.s32.totalorder %s126, %s127
    %p136 = scmp.eq.s32.totalorder %s27, 0
    %p137 = por %p135, %p136
    %p138 = scmp.ne.s32.totalorder %s126, %s127
    %p139 = scmp.eq.s32.totalorder %s28, 1
    %p140 = por %p138, %p139
    %p142 = scmp.ne.s32.totalorder %s127, %s141
    %p143 = scmp.eq.s32.totalorder %s28, 0
    %p144 = por %p142, %p143
    %s146 = sadd.s32 %s145, 1
    %p149 = scmp.eq.s32.totalorder %s22, 1
    %p150 = scmp.ne.s32.totalorder %s145, %s147
    %p151 = scmp.eq.s32.totalorder %s22, 0
    %p152 = por %p150, %p151
    %p153 = scmp.ne.s32.totalorder %s145, %s147
    %p154 = scmp.eq.s32.totalorder %s27, 1
    %p155 = por %p153, %p154
    %p156 = scmp.ne.s32.totalorder %s147, %s148
    %p157 = scmp.eq.s32.totalorder %s27, 0
    %p158 = por %p156, %p157
    %p159 = scmp.ne.s32.totalorder %s147, %s148
    %p160 = scmp.eq.s32.totalorder %s28, 1
    %p161 = por %p159, %p160
    %p163 = scmp.ne.s32.totalorder %s148, %s162
    %p164 = scmp.eq.s32.totalorder %s28, 0
    %p165 = por %p163, %p164
    %s167 = sadd.s32 %s166, 1
    %p170 = scmp.eq.s32.totalorder %s22, 1
    %p171 = scmp.ne.s32.totalorder %s166, %s168
    %p172 = scmp.eq.s32.totalorder %s22, 0
    %p173 = por %p171, %p172
    %p174 = scmp.ne.s32.totalorder %s166, %s168
    %p175 = scmp.eq.s32.totalorder %s27, 1
    %p176 = por %p174, %p175
    %p177 = scmp.ne.s32.totalorder %s168, %s169
    %p178 = scmp.eq.s32.totalorder %s27, 0
    %p179 = por %p177, %p178
    %p180 = scmp.ne.s32.totalorder %s168, %s169
    %p181 = scmp.eq.s32.totalorder %s28, 1
    %p182 = por %p180, %p181
    %p184 = scmp.ne.s32.totalorder %s169, %s183
    %p185 = scmp.eq.s32.totalorder %s28, 0
    %p186 = por %p184, %p185
    %s188 = sadd.s32 %s187, 1
    %p191 = scmp.eq.s32.totalorder %s22, 1
    %p192 = scmp.ne.s32.totalorder %s187, %s189
    %p193 = scmp.eq.s32.totalorder %s22, 0
    %p194 = por %p192, %p193
    %p195 = scmp.ne.s32.totalorder %s187, %s189
    %p196 = scmp.eq.s32.totalorder %s27, 1
    %p197 = por %p195, %p196
    %p198 = scmp.ne.s32.totalorder %s189, %s190
    %p199 = scmp.eq.s32.totalorder %s27, 0
    %p200 = por %p198, %p199
    %p201 = scmp.ne.s32.totalorder %s189, %s190
    %p202 = scmp.eq.s32.totalorder %s28, 1
    %p203 = por %p201, %p202
    %p205 = scmp.ne.s32.totalorder %s190, %s204
    %p206 = scmp.eq.s32.totalorder %s28, 0
    %p207 = por %p205, %p206
    %s209 = sadd.s32 %s208, 1
    %p212 = scmp.eq.s32.totalorder %s22, 1
    %p213 = scmp.ne.s32.totalorder %s208, %s210
    %p214 = scmp.eq.s32.totalorder %s22, 0
    %p215 = por %p213, %p214
    %p216 = scmp.ne.s32.totalorder %s208, %s210
    %p217 = scmp.eq.s32.totalorder %s27, 1
    %p218 = por %p216, %p217
    %p219 = scmp.ne.s32.totalorder %s210, %s211
    %p220 = scmp.eq.s32.totalorder %s27, 0
    %p221 = por %p219, %p220
    %p222 = scmp.ne.s32.totalorder %s210, %s211
    %p223 = scmp.eq.s32.totalorder %s28, 1
    %p224 = por %p222, %p223
    %p226 = scmp.ne.s32.totalorder %s211, %s225
    %p227 = scmp.eq.s32.totalorder %s28, 0
    %p228 = por %p226, %p227
    %s230 = sadd.s32 %s229, 1
    %p233 = scmp.eq.s32.totalorder %s22, 1
    %p234 = scmp.ne.s32.totalorder %s229, %s231
    %p235 = scmp.eq.s32.totalorder %s22, 0
    %p236 = por %p234, %p235
    %p237 = scmp.ne.s32.totalorder %s229, %s231
    %p238 = scmp.eq.s32.totalorder %s27, 1
    %p239 = por %p237, %p238
    %p240 = scmp.ne.s32.totalorder %s231, %s232
    %p241 = scmp.eq.s32.totalorder %s27, 0
    %p242 = por %p240, %p241
    %p243 = scmp.ne.s32.totalorder %s231, %s232
    %p244 = scmp.eq.s32.totalorder %s28, 1
    %p245 = por %p243, %p244
    %p247 = scmp.ne.s32.totalorder %s232, %s246
    %p248 = scmp.eq.s32.totalorder %s28, 0
    %p249 = por %p247, %p248
    %s251 = sadd.s32 %s250, 1
    %p254 = scmp.eq.s32.totalorder %s22, 1
    %p255 = scmp.ne.s32.totalorder %s250, %s252
    %p256 = scmp.eq.s32.totalorder %s22, 0
    %p257 = por %p255, %p256
    %p258 = scmp.ne.s32.totalorder %s250, %s252
    %p259 = scmp.eq.s32.totalorder %s27, 1
    %p260 = por %p258, %p259
    %p261 = scmp.ne.s32.totalorder %s252, %s253
    %p262 = scmp.eq.s32.totalorder %s27, 0
    %p263 = por %p261, %p262
    %p264 = scmp.ne.s32.totalorder %s252, %s253
    %p265 = scmp.eq.s32.totalorder %s28, 1
    %p266 = por %p264, %p265
    %p268 = scmp.ne.s32.totalorder %s253, %s267
    %p269 = scmp.eq.s32.totalorder %s28, 0
    %p270 = por %p268, %p269
    %s272 = sadd.s32 %s271, 1
    %p275 = scmp.eq.s32.totalorder %s22, 1
    %p276 = scmp.ne.s32.totalorder %s271, %s273
    %p277 = scmp.eq.s32.totalorder %s22, 0
    %p278 = por %p276, %p277
    %p279 = scmp.ne.s32.totalorder %s271, %s273
    %p280 = scmp.eq.s32.totalorder %s27, 1
    %p281 = por %p279, %p280
    %p282 = scmp.ne.s32.totalorder %s273, %s274
    %p283 = scmp.eq.s32.totalorder %s27, 0
    %p284 = por %p282, %p283
    %p285 = scmp.ne.s32.totalorder %s273, %s274
    %p286 = scmp.eq.s32.totalorder %s28, 1
    %p287 = por %p285, %p286
    %p289 = scmp.ne.s32.totalorder %s274, %s288
    %p290 = scmp.eq.s32.totalorder %s28, 0
    %p291 = por %p289, %p290
    %s293 = sadd.s32 %s292, 1
    %p296 = scmp.eq.s32.totalorder %s22, 1
    %p297 = scmp.ne.s32.totalorder %s292, %s294
    %p298 = scmp.eq.s32.totalorder %s22, 0
    %p299 = por %p297, %p298
    %p300 = scmp.ne.s32.totalorder %s292, %s294
    %p301 = scmp.eq.s32.totalorder %s27, 1
    %p302 = por %p300, %p301
    %p303 = scmp.ne.s32.totalorder %s294, %s295
    %p304 = scmp.eq.s32.totalorder %s27, 0
    %p305 = por %p303, %p304
    %p306 = scmp.ne.s32.totalorder %s294, %s295
    %p307 = scmp.eq.s32.totalorder %s28, 1
    %p308 = por %p306, %p307
    %p310 = scmp.ne.s32.totalorder %s295, %s309
    %p311 = scmp.eq.s32.totalorder %s28, 0
    %p312 = por %p310, %p311
    %s314 = sadd.s32 %s313, 1
    %p317 = scmp.eq.s32.totalorder %s22, 1
    %p318 = scmp.ne.s32.totalorder %s313, %s315
    %p319 = scmp.eq.s32.totalorder %s22, 0
    %p320 = por %p318, %p319
    %p321 = scmp.ne.s32.totalorder %s313, %s315
    %p322 = scmp.eq.s32.totalorder %s27, 1
    %p323 = por %p321, %p322
    %p324 = scmp.ne.s32.totalorder %s315, %s316
    %p325 = scmp.eq.s32.totalorder %s27, 0
    %p326 = por %p324, %p325
    %p327 = scmp.ne.s32.totalorder %s315, %s316
    %p328 = scmp.eq.s32.totalorder %s28, 1
    %p329 = por %p327, %p328
    %p331 = scmp.ne.s32.totalorder %s316, %s330
    %p332 = scmp.eq.s32.totalorder %s28, 0
    %p333 = por %p331, %p332
    %s334 = ssub.s32 %s22, %s29
    %p335 = scmp.eq.s32.totalorder %s334, 0
    %s337 = sadd.s32 %s336, 1
    %s338 = scalar_select %p335, %s336, %s337
    %p341 = pneg %p335
    %p342 = scmp.eq.s32.totalorder %s22, 1
    %p343 = por %p341, %p342
    %p344 = scmp.ne.s32.totalorder %s336, %s339
    %p345 = scmp.eq.s32.totalorder %s22, 0
    %p346 = por %p344, %p345
    %p347 = scmp.ne.s32.totalorder %s336, %s339
    %p348 = scmp.eq.s32.totalorder %s27, 1
    %p349 = por %p347, %p348
    %p350 = scmp.ne.s32.totalorder %s339, %s340
    %p351 = scmp.eq.s32.totalorder %s27, 0
    %p352 = por %p350, %p351
    %p353 = scmp.ne.s32.totalorder %s339, %s340
    %p354 = scmp.eq.s32.totalorder %s28, 1
    %p355 = por %p353, %p354
    %p357 = scmp.ne.s32.totalorder %s340, %s356
    %p358 = scmp.eq.s32.totalorder %s28, 0
    %p359 = por %p357, %p358
    %s360 = ssub.s32 %s22, %s29
    %p361 = scmp.eq.s32.totalorder %s360, 0
    %s363 = sadd.s32 %s362, 1
    %s364 = scalar_select %p361, %s362, %s363
    %p367 = pneg %p361
    %p368 = scmp.eq.s32.totalorder %s22, 1
    %p369 = por %p367, %p368
    %p370 = scmp.ne.s32.totalorder %s362, %s365
    %p371 = scmp.eq.s32.totalorder %s22, 0
    %p372 = por %p370, %p371
    %p373 = scmp.ne.s32.totalorder %s362, %s365
    %p374 = scmp.eq.s32.totalorder %s27, 1
    %p375 = por %p373, %p374
    %p376 = scmp.ne.s32.totalorder %s365, %s366
    %p377 = scmp.eq.s32.totalorder %s27, 0
    %p378 = por %p376, %p377
    %p379 = scmp.ne.s32.totalorder %s365, %s366
    %p380 = scmp.eq.s32.totalorder %s28, 1
    %p381 = por %p379, %p380
    %p383 = scmp.ne.s32.totalorder %s366, %s382
    %p384 = scmp.eq.s32.totalorder %s28, 0
    %p385 = por %p383, %p384
    %p386 = scmp.le.s32.totalorder 1, %s22
    %p387 = scmp.lt.s32.totalorder %s22, 3
    %p388 = pnand %p386, %p387
    %p389 = pneg %p388
    // Predicated region
    $region9: #{ib_apply.1} parent=5 // pred_check
      _
    $region10: #{ib_apply.1} parent=5 // pred_check_branch
      %391 = sbr.rel (%p388) target = $region12
    $region11: #{ib_apply.1} parent=5 // pred_region
      %s392 = ssub.s32 %s22, 1
      // Predicated region
      $region13: #{ib_apply.1} parent=11 // pred_check
        %p393 = pneg %p95
      $region14: #{ib_apply.1} parent=11 // pred_check_branch
        %395 = sbr.rel (%p393) target = $region16
      $region15: #{ib_apply.1} parent=11 // pred_region
        _
      $region16: #{ib_apply.1} parent=11 // pred_fallthru
        _
      // Predicated region
      $region17: #{ib_apply.1} parent=11 // pred_check
        %p396 = pneg %p116
      $region18: #{ib_apply.1} parent=11 // pred_check_branch
        %398 = sbr.rel (%p396) target = $region20
      $region19: #{ib_apply.1} parent=11 // pred_region
        _
      $region20: #{ib_apply.1} parent=11 // pred_fallthru
        _
      // Predicated region
      $region21: #{ib_apply.1} parent=11 // pred_check
        %p399 = pneg %p137
      $region22: #{ib_apply.1} parent=11 // pred_check_branch
        %401 = sbr.rel (%p399) target = $region24
      $region23: #{ib_apply.1} parent=11 // pred_region
        _
      $region24: #{ib_apply.1} parent=11 // pred_fallthru
        _
      // Predicated region
      $region25: #{ib_apply.1} parent=11 // pred_check
        %p402 = pneg %p158
      $region26: #{ib_apply.1} parent=11 // pred_check_branch
        %404 = sbr.rel (%p402) target = $region28
      $region27: #{ib_apply.1} parent=11 // pred_region
        _
      $region28: #{ib_apply.1} parent=11 // pred_fallthru
        _
      // Predicated region
      $region29: #{ib_apply.1} parent=11 // pred_check
        %p405 = pneg %p179
      $region30: #{ib_apply.1} parent=11 // pred_check_branch
        %407 = sbr.rel (%p405) target = $region32
      $region31: #{ib_apply.1} parent=11 // pred_region
        _
      $region32: #{ib_apply.1} parent=11 // pred_fallthru
        _
      // Predicated region
      $region33: #{ib_apply.1} parent=11 // pred_check
        %p408 = pneg %p200
      $region34: #{ib_apply.1} parent=11 // pred_check_branch
        %410 = sbr.rel (%p408) target = $region36
      $region35: #{ib_apply.1} parent=11 // pred_region
        _
      $region36: #{ib_apply.1} parent=11 // pred_fallthru
        _
      // Predicated region
      $region37: #{ib_apply.1} parent=11 // pred_check
        %p411 = pneg %p221
      $region38: #{ib_apply.1} parent=11 // pred_check_branch
        %413 = sbr.rel (%p411) target = $region40
      $region39: #{ib_apply.1} parent=11 // pred_region
        _
      $region40: #{ib_apply.1} parent=11 // pred_fallthru
        _
      // Predicated region
      $region41: #{ib_apply.1} parent=11 // pred_check
        %p414 = pneg %p242
      $region42: #{ib_apply.1} parent=11 // pred_check_branch
        %416 = sbr.rel (%p414) target = $region44
      $region43: #{ib_apply.1} parent=11 // pred_region
        _
      $region44: #{ib_apply.1} parent=11 // pred_fallthru
        _
      // Predicated region
      $region45: #{ib_apply.1} parent=11 // pred_check
        %p417 = pneg %p263
      $region46: #{ib_apply.1} parent=11 // pred_check_branch
        %419 = sbr.rel (%p417) target = $region48
      $region47: #{ib_apply.1} parent=11 // pred_region
        _
      $region48: #{ib_apply.1} parent=11 // pred_fallthru
        _
      // Predicated region
      $region49: #{ib_apply.1} parent=11 // pred_check
        %p420 = pneg %p284
      $region50: #{ib_apply.1} parent=11 // pred_check_branch
        %422 = sbr.rel (%p420) target = $region52
      $region51: #{ib_apply.1} parent=11 // pred_region
        _
      $region52: #{ib_apply.1} parent=11 // pred_fallthru
        _
      // Predicated region
      $region53: #{ib_apply.1} parent=11 // pred_check
        %p423 = pneg %p305
      $region54: #{ib_apply.1} parent=11 // pred_check_branch
        %425 = sbr.rel (%p423) target = $region56
      $region55: #{ib_apply.1} parent=11 // pred_region
        _
      $region56: #{ib_apply.1} parent=11 // pred_fallthru
        _
      // Predicated region
      $region57: #{ib_apply.1} parent=11 // pred_check
        %p426 = pneg %p326
      $region58: #{ib_apply.1} parent=11 // pred_check_branch
        %428 = sbr.rel (%p426) target = $region60
      $region59: #{ib_apply.1} parent=11 // pred_region
        _
      $region60: #{ib_apply.1} parent=11 // pred_fallthru
        _
    $region12: #{ib_apply.1} parent=5 // pred_fallthru
      _
    %p429 = scmp.lt.s32.totalorder %s22, 2
    // Predicated region
    $region61: #{ib_apply.1} parent=5 // pred_check
      %p430 = pneg %p429
    $region62: #{ib_apply.1} parent=5 // pred_check_branch
      %432 = sbr.rel (%p430) target = $region64
    $region63: #{ib_apply.1} parent=5 // pred_region
      // Predicated region
      $region65: #{ib_apply.1} parent=63 // pred_check
        %p433 = pneg %p42
      $region66: #{ib_apply.1} parent=63 // pred_check_branch
        %435 = sbr.rel (%p433) target = $region68
      $region67: #{ib_apply.1} parent=63 // pred_region
        %p436 = scmp.lt.s32.totalorder %s22, 1
        %s437 = scalar_select %p436, %s22, 1
        %s438 = smul.addr %s437, 32
        %s439 = smul.addr %s438, 8
        %s440 = scalar_lea.vmem %s0, %s439
      $region68: #{ib_apply.1} parent=63 // pred_fallthru
        _
      // Predicated region
      $region69: #{ib_apply.1} parent=63 // pred_check
        %p441 = pneg %p68
      $region70: #{ib_apply.1} parent=63 // pred_check_branch
        %443 = sbr.rel (%p441) target = $region72
      $region71: #{ib_apply.1} parent=63 // pred_region
        %p444 = scmp.lt.s32.totalorder %s22, 1
        %s445 = scalar_select %p444, %s22, 1
        %s446 = smul.addr %s445, 32
        %s447 = smul.addr %s446, 8
        %s448 = scalar_lea.vmem %s1, %s447
      $region72: #{ib_apply.1} parent=63 // pred_fallthru
        _
    $region64: #{ib_apply.1} parent=5 // pred_fallthru
      _
    %p449 = scmp.le.s32.totalorder 1, %s22
    %p450 = scmp.lt.s32.totalorder %s22, 3
    %p451 = pnand %p449, %p450
    %p452 = pneg %p451
    // Predicated region
    $region73: #{ib_apply.1} parent=5 // pred_check
      _
    $region74: #{ib_apply.1} parent=5 // pred_check_branch
      %454 = sbr.rel (%p451) target = $region76
    $region75: #{ib_apply.1} parent=5 // pred_region
      %s455 = ssub.s32 %s22, 1
      %p456 = scmp.lt.s32.totalorder %s27, 1
      %s457 = scalar_select %p456, %s27, 1
      %s458 = smul.addr %s457, 32
      %s459 = smul.addr %s458, 8
      %s460 = scalar_lea.vmem %s0, %s459
      %p461 = pneg %p48
      %p462 = pneg %p45
      %p463 = scmp.lt.s32.totalorder %s27, 1
      %s464 = scalar_select %p463, %s27, 1
      %s465 = smul.addr %s464, 32
      %s466 = smul.addr %s465, 8
      %s467 = scalar_lea.vmem %s1, %s466
      %p468 = pneg %p74
      %p469 = pneg %p71
      %p470 = pneg %p95
      %p471 = pneg %p92
      %p472 = pneg %p116
      %p473 = pneg %p113
      %p474 = pneg %p137
      %p475 = pneg %p134
      %p476 = pneg %p158
      %p477 = pneg %p155
      %p478 = pneg %p179
      %p479 = pneg %p176
      %p480 = pneg %p200
      %p481 = pneg %p197
      %p482 = pneg %p221
      %p483 = pneg %p218
      %p484 = pneg %p242
      %p485 = pneg %p239
      %p486 = pneg %p263
      %p487 = pneg %p260
      %p488 = pneg %p284
      %p489 = pneg %p281
      %p490 = pneg %p305
      %p491 = pneg %p302
      %p492 = pneg %p326
      %p493 = pneg %p323
      %p494 = pneg %p352
      %p495 = pneg %p349
      %p496 = scmp.lt.s32.totalorder %s27, 1
      %s497 = scalar_select %p496, %s27, 1
      %s498 = smul.addr %s497, 2
      %s499 = smul.addr %s498, 4
      %s500 = scalar_lea.vmem %s14, %s499
      %p501 = pneg %p378
      %p502 = pneg %p375
      %p503 = scmp.lt.s32.totalorder %s27, 1
      %s504 = scalar_select %p503, %s27, 1
      %s505 = smul.addr %s504, 2
      %s506 = smul.addr %s505, 4
      %s507 = scalar_lea.vmem %s15, %s506
      %p508 = scmp.lt.s32.totalorder %s27, 1
      %s509 = scalar_select %p508, %s27, 1
      %s510 = smul.addr %s509, 32
      %s511 = smul.addr %s510, 8
      %s512 = scalar_lea.vmem %s0, %s511
      %p513 = scmp.lt.s32.totalorder %s27, 1
      %s514 = scalar_select %p513, %s27, 1
      %s515 = smul.addr %s514, 32
      %s516 = smul.addr %s515, 8
      %s517 = scalar_lea.vmem %s1, %s516
      %p518 = scmp.lt.s32.totalorder %s27, 1
      %s519 = scalar_select %p518, %s27, 1
      %s520 = smul.addr %s519, 2
      %s521 = smul.addr %s520, 4
      %s522 = scalar_lea.vmem %s14, %s521
      %p523 = scmp.lt.s32.totalorder %s27, 1
      %s524 = scalar_select %p523, %s27, 1
      %s525 = smul.addr %s524, 2
      %s526 = smul.addr %s525, 4
      %s527 = scalar_lea.vmem %s15, %s526
      %v529 = vld [vmem:[%s512] sm:$0xff]
      %v530 = vld [vmem:[%s512 + $0x8] sm:$0xff]
      %v531 = vld [vmem:[%s512 + $0x10] sm:$0xff]
      %v532 = vld [vmem:[%s512 + $0x18] sm:$0xff]
      %v533 = vld [vmem:[%s512 + $0x20] sm:$0xff]
      %v534 = vld [vmem:[%s512 + $0x28] sm:$0xff]
      %v535 = vld [vmem:[%s512 + $0x30] sm:$0xff]
      %v536 = vld [vmem:[%s512 + $0x38] sm:$0xff]
      %v537 = vld [vmem:[%s512 + $0x40] sm:$0xff]
      %v538 = vld [vmem:[%s512 + $0x48] sm:$0xff]
      %v539 = vld [vmem:[%s512 + $0x50] sm:$0xff]
      %v540 = vld [vmem:[%s512 + $0x58] sm:$0xff]
      %v541 = vld [vmem:[%s512 + $0x60] sm:$0xff]
      %v542 = vld [vmem:[%s512 + $0x68] sm:$0xff]
      %v543 = vld [vmem:[%s512 + $0x70] sm:$0xff]
      %v544 = vld [vmem:[%s512 + $0x78] sm:$0xff]
      %v545 = vld [vmem:[%s512 + $0x80] sm:$0xff]
      %v546 = vld [vmem:[%s512 + $0x88] sm:$0xff]
      %v547 = vld [vmem:[%s512 + $0x90] sm:$0xff]
      %v548 = vld [vmem:[%s512 + $0x98] sm:$0xff]
      %v549 = vld [vmem:[%s512 + $0xa0] sm:$0xff]
      %v550 = vld [vmem:[%s512 + $0xa8] sm:$0xff]
      %v551 = vld [vmem:[%s512 + $0xb0] sm:$0xff]
      %v552 = vld [vmem:[%s512 + $0xb8] sm:$0xff]
      %v553 = vld [vmem:[%s512 + $0xc0] sm:$0xff]
      %v554 = vld [vmem:[%s512 + $0xc8] sm:$0xff]
      %v555 = vld [vmem:[%s512 + $0xd0] sm:$0xff]
      %v556 = vld [vmem:[%s512 + $0xd8] sm:$0xff]
      %v557 = vld [vmem:[%s512 + $0xe0] sm:$0xff]
      %v558 = vld [vmem:[%s512 + $0xe8] sm:$0xff]
      %v559 = vld [vmem:[%s512 + $0xf0] sm:$0xff]
      %v560 = vld [vmem:[%s512 + $0xf8] sm:$0xff]
      %v561 = vld [vmem:[%s517] sm:$0xff]
      %v562 = vld [vmem:[%s517 + $0x8] sm:$0xff]
      %v563 = vld [vmem:[%s517 + $0x10] sm:$0xff]
      %v564 = vld [vmem:[%s517 + $0x18] sm:$0xff]
      %v565 = vld [vmem:[%s517 + $0x20] sm:$0xff]
      %v566 = vld [vmem:[%s517 + $0x28] sm:$0xff]
      %v567 = vld [vmem:[%s517 + $0x30] sm:$0xff]
      %v568 = vld [vmem:[%s517 + $0x38] sm:$0xff]
      %v569 = vld [vmem:[%s517 + $0x40] sm:$0xff]
      %v570 = vld [vmem:[%s517 + $0x48] sm:$0xff]
      %v571 = vld [vmem:[%s517 + $0x50] sm:$0xff]
      %v572 = vld [vmem:[%s517 + $0x58] sm:$0xff]
      %v573 = vld [vmem:[%s517 + $0x60] sm:$0xff]
      %v574 = vld [vmem:[%s517 + $0x68] sm:$0xff]
      %v575 = vld [vmem:[%s517 + $0x70] sm:$0xff]
      %v576 = vld [vmem:[%s517 + $0x78] sm:$0xff]
      %v577 = vld [vmem:[%s517 + $0x80] sm:$0xff]
      %v578 = vld [vmem:[%s517 + $0x88] sm:$0xff]
      %v579 = vld [vmem:[%s517 + $0x90] sm:$0xff]
      %v580 = vld [vmem:[%s517 + $0x98] sm:$0xff]
      %v581 = vld [vmem:[%s517 + $0xa0] sm:$0xff]
      %v582 = vld [vmem:[%s517 + $0xa8] sm:$0xff]
      %v583 = vld [vmem:[%s517 + $0xb0] sm:$0xff]
      %v584 = vld [vmem:[%s517 + $0xb8] sm:$0xff]
      %v585 = vld [vmem:[%s517 + $0xc0] sm:$0xff]
      %v586 = vld [vmem:[%s517 + $0xc8] sm:$0xff]
      %v587 = vld [vmem:[%s517 + $0xd0] sm:$0xff]
      %v588 = vld [vmem:[%s517 + $0xd8] sm:$0xff]
      %v589 = vld [vmem:[%s517 + $0xe0] sm:$0xff]
      %v590 = vld [vmem:[%s517 + $0xe8] sm:$0xff]
      %v591 = vld [vmem:[%s517 + $0xf0] sm:$0xff]
      %v592 = vld [vmem:[%s517 + $0xf8] sm:$0xff]
      %v593 = vpack.c.bf16 %v561, %v561
      %v594 = vpack.c.bf16 %v562, %v562
      %v595 = vpack.c.bf16 %v563, %v563
      %v596 = vpack.c.bf16 %v564, %v564
      %v597 = vpack.c.bf16 %v565, %v565
      %v598 = vpack.c.bf16 %v566, %v566
      %v599 = vpack.c.bf16 %v567, %v567
      %v600 = vpack.c.bf16 %v568, %v568
      %v601 = vpack.c.bf16 %v569, %v569
      %v602 = vpack.c.bf16 %v570, %v570
      %v603 = vpack.c.bf16 %v571, %v571
      %v604 = vpack.c.bf16 %v572, %v572
      %v605 = vpack.c.bf16 %v573, %v573
      %v606 = vpack.c.bf16 %v574, %v574
      %v607 = vpack.c.bf16 %v575, %v575
      %v608 = vpack.c.bf16 %v576, %v576
      %v609 = vpack.c.bf16 %v577, %v577
      %v610 = vpack.c.bf16 %v578, %v578
      %v611 = vpack.c.bf16 %v579, %v579
      %v612 = vpack.c.bf16 %v580, %v580
      %v613 = vpack.c.bf16 %v581, %v581
      %v614 = vpack.c.bf16 %v582, %v582
      %v615 = vpack.c.bf16 %v583, %v583
      %v616 = vpack.c.bf16 %v584, %v584
      %v617 = vpack.c.bf16 %v585, %v585
      %v618 = vpack.c.bf16 %v586, %v586
      %v619 = vpack.c.bf16 %v587, %v587
      %v620 = vpack.c.bf16 %v588, %v588
      %v621 = vpack.c.bf16 %v589, %v589
      %v622 = vpack.c.bf16 %v590, %v590
      %v623 = vpack.c.bf16 %v591, %v591
      %v624 = vpack.c.bf16 %v592, %v592
      %v657 = vunpack.c.l.b16 %v593
      %v658 = vunpack.c.l.b16 %v594
      %v659 = vunpack.c.l.b16 %v595
      %v660 = vunpack.c.l.b16 %v596
      %v661 = vunpack.c.l.b16 %v597
      %v662 = vunpack.c.l.b16 %v598
      %v663 = vunpack.c.l.b16 %v599
      %v664 = vunpack.c.l.b16 %v600
      %v665 = vunpack.c.l.b16 %v601
      %v666 = vunpack.c.l.b16 %v602
      %v667 = vunpack.c.l.b16 %v603
      %v668 = vunpack.c.l.b16 %v604
      %v669 = vunpack.c.l.b16 %v605
      %v670 = vunpack.c.l.b16 %v606
      %v671 = vunpack.c.l.b16 %v607
      %v672 = vunpack.c.l.b16 %v608
      %v673 = vunpack.c.l.b16 %v609
      %v674 = vunpack.c.l.b16 %v610
      %v675 = vunpack.c.l.b16 %v611
      %v676 = vunpack.c.l.b16 %v612
      %v677 = vunpack.c.l.b16 %v613
      %v678 = vunpack.c.l.b16 %v614
      %v679 = vunpack.c.l.b16 %v615
      %v680 = vunpack.c.l.b16 %v616
      %v681 = vunpack.c.l.b16 %v617
      %v682 = vunpack.c.l.b16 %v618
      %v683 = vunpack.c.l.b16 %v619
      %v684 = vunpack.c.l.b16 %v620
      %v685 = vunpack.c.l.b16 %v621
      %v686 = vunpack.c.l.b16 %v622
      %v687 = vunpack.c.l.b16 %v623
      %v688 = vunpack.c.l.b16 %v624
      %v689 = vpack.c.b16 %v658, %v657
      %v690 = vpack.c.b16 %v660, %v659
      %v691 = vpack.c.b16 %v662, %v661
      %v692 = vpack.c.b16 %v664, %v663
      %v693 = vpack.c.b16 %v666, %v665
      %v694 = vpack.c.b16 %v668, %v667
      %v695 = vpack.c.b16 %v670, %v669
      %v696 = vpack.c.b16 %v672, %v671
      %v697 = vpack.c.b16 %v674, %v673
      %v698 = vpack.c.b16 %v676, %v675
      %v699 = vpack.c.b16 %v678, %v677
      %v700 = vpack.c.b16 %v680, %v679
      %v701 = vpack.c.b16 %v682, %v681
      %v702 = vpack.c.b16 %v684, %v683
      %v703 = vpack.c.b16 %v686, %v685
      %v704 = vpack.c.b16 %v688, %v687
      %v706 = vshrl.u32 0, 16
      %v708 = vrot.slane %v706, 7
      %v709 = vshll.u32 0, 16
      %v711 = vor.u32 %v708, %v709
      %v713 = vshrl.u32 %v689, 16
      %v715 = vrot.slane %v713, 7
      %v716 = vshll.u32 %v689, 16
      %v718 = vor.u32 %v715, %v716
      %v720 = vshrl.u32 %v690, 16
      %v722 = vrot.slane %v720, 7
      %v723 = vshll.u32 %v690, 16
      %v725 = vor.u32 %v722, %v723
      %v727 = vshrl.u32 %v691, 16
      %v729 = vrot.slane %v727, 7
      %v730 = vshll.u32 %v691, 16
      %v732 = vor.u32 %v729, %v730
      %v734 = vshrl.u32 %v692, 16
      %v736 = vrot.slane %v734, 7
      %v737 = vshll.u32 %v692, 16
      %v739 = vor.u32 %v736, %v737
      %v741 = vshrl.u32 %v693, 16
      %v743 = vrot.slane %v741, 7
      %v744 = vshll.u32 %v693, 16
      %v746 = vor.u32 %v743, %v744
      %v748 = vshrl.u32 %v694, 16
      %v750 = vrot.slane %v748, 7
      %v751 = vshll.u32 %v694, 16
      %v753 = vor.u32 %v750, %v751
      %v755 = vshrl.u32 %v695, 16
      %v757 = vrot.slane %v755, 7
      %v758 = vshll.u32 %v695, 16
      %v760 = vor.u32 %v757, %v758
      %v762 = vshrl.u32 %v696, 16
      %v764 = vrot.slane %v762, 7
      %v765 = vshll.u32 %v696, 16
      %v767 = vor.u32 %v764, %v765
      %v769 = vshrl.u32 %v697, 16
      %v771 = vrot.slane %v769, 7
      %v772 = vshll.u32 %v697, 16
      %v774 = vor.u32 %v771, %v772
      %v776 = vshrl.u32 %v698, 16
      %v778 = vrot.slane %v776, 7
      %v779 = vshll.u32 %v698, 16
      %v781 = vor.u32 %v778, %v779
      %v783 = vshrl.u32 %v699, 16
      %v785 = vrot.slane %v783, 7
      %v786 = vshll.u32 %v699, 16
      %v788 = vor.u32 %v785, %v786
      %v790 = vshrl.u32 %v700, 16
      %v792 = vrot.slane %v790, 7
      %v793 = vshll.u32 %v700, 16
      %v795 = vor.u32 %v792, %v793
      %v797 = vshrl.u32 %v701, 16
      %v799 = vrot.slane %v797, 7
      %v800 = vshll.u32 %v701, 16
      %v802 = vor.u32 %v799, %v800
      %v804 = vshrl.u32 %v702, 16
      %v806 = vrot.slane %v804, 7
      %v807 = vshll.u32 %v702, 16
      %v809 = vor.u32 %v806, %v807
      %v811 = vshrl.u32 %v703, 16
      %v813 = vrot.slane %v811, 7
      %v814 = vshll.u32 %v703, 16
      %v816 = vor.u32 %v813, %v814
      %v818 = vshrl.u32 %v704, 16
      %v820 = vrot.slane %v818, 7
      %v821 = vshll.u32 %v704, 16
      %v823 = vor.u32 %v820, %v821
      %vm858 = vcmask 1040384
      %vm859 = vsmask.f32 256
      %vm860 = vmand %vm858, %vm859
      %v861 = vsel %vm860, 0, %v711
      %v862 = vsel %vm860, 0, %v718
      %v863 = vsel %vm860, 0, %v725
      %v864 = vsel %vm860, 0, %v732
      %v865 = vsel %vm860, 0, %v739
      %v866 = vsel %vm860, 0, %v746
      %v867 = vsel %vm860, 0, %v753
      %v868 = vsel %vm860, 0, %v760
      %v869 = vsel %vm860, 0, %v767
      %v870 = vsel %vm860, 0, %v774
      %v871 = vsel %vm860, 0, %v781
      %v872 = vsel %vm860, 0, %v788
      %v873 = vsel %vm860, 0, %v795
      %v874 = vsel %vm860, 0, %v802
      %v875 = vsel %vm860, 0, %v809
      %v876 = vsel %vm860, 0, %v816
      %v877 = vsel %vm860, 0, %v823
      %v878 = vsel %vm860, %v708, 0
      %v879 = vsel %vm860, %v715, 0
      %v880 = vsel %vm860, %v722, 0
      %v881 = vsel %vm860, %v729, 0
      %v882 = vsel %vm860, %v736, 0
      %v883 = vsel %vm860, %v743, 0
      %v884 = vsel %vm860, %v750, 0
      %v885 = vsel %vm860, %v757, 0
      %v886 = vsel %vm860, %v764, 0
      %v887 = vsel %vm860, %v771, 0
      %v888 = vsel %vm860, %v778, 0
      %v889 = vsel %vm860, %v785, 0
      %v890 = vsel %vm860, %v792, 0
      %v891 = vsel %vm860, %v799, 0
      %v892 = vsel %vm860, %v806, 0
      %v893 = vsel %vm860, %v813, 0
      %v894 = vsel %vm860, %v820, 0
      %vm895 = vsmask.f32 7424
      %v897 = vshrl.u32 %v861, 16
      %v899 = vshll.u32 %v861, 16
      %v901 = vrot.slane %v899, 1
      %v902 = vor.u32 %v897, %v901
      %v904 = vshll.u32 %v878, 16
      %v906 = vrot.slane %v904, 1
      %v907 = vsel %vm895, %v902, %v906
      %v909 = vshrl.u32 %v862, 16
      %v911 = vshll.u32 %v862, 16
      %v913 = vrot.slane %v911, 1
      %v914 = vor.u32 %v909, %v913
      %v916 = vshll.u32 %v879, 16
      %v918 = vrot.slane %v916, 1
      %v919 = vsel %vm895, %v914, %v918
      %v921 = vshrl.u32 %v863, 16
      %v923 = vshll.u32 %v863, 16
      %v925 = vrot.slane %v923, 1
      %v926 = vor.u32 %v921, %v925
      %v928 = vshll.u32 %v880, 16
      %v930 = vrot.slane %v928, 1
      %v931 = vsel %vm895, %v926, %v930
      %v933 = vshrl.u32 %v864, 16
      %v935 = vshll.u32 %v864, 16
      %v937 = vrot.slane %v935, 1
      %v938 = vor.u32 %v933, %v937
      %v940 = vshll.u32 %v881, 16
      %v942 = vrot.slane %v940, 1
      %v943 = vsel %vm895, %v938, %v942
      %v945 = vshrl.u32 %v865, 16
      %v947 = vshll.u32 %v865, 16
      %v949 = vrot.slane %v947, 1
      %v950 = vor.u32 %v945, %v949
      %v952 = vshll.u32 %v882, 16
      %v954 = vrot.slane %v952, 1
      %v955 = vsel %vm895, %v950, %v954
      %v957 = vshrl.u32 %v866, 16
      %v959 = vshll.u32 %v866, 16
      %v961 = vrot.slane %v959, 1
      %v962 = vor.u32 %v957, %v961
      %v964 = vshll.u32 %v883, 16
      %v966 = vrot.slane %v964, 1
      %v967 = vsel %vm895, %v962, %v966
      %v969 = vshrl.u32 %v867, 16
      %v971 = vshll.u32 %v867, 16
      %v973 = vrot.slane %v971, 1
      %v974 = vor.u32 %v969, %v973
      %v976 = vshll.u32 %v884, 16
      %v978 = vrot.slane %v976, 1
      %v979 = vsel %vm895, %v974, %v978
      %v981 = vshrl.u32 %v868, 16
      %v983 = vshll.u32 %v868, 16
      %v985 = vrot.slane %v983, 1
      %v986 = vor.u32 %v981, %v985
      %v988 = vshll.u32 %v885, 16
      %v990 = vrot.slane %v988, 1
      %v991 = vsel %vm895, %v986, %v990
      %v993 = vshrl.u32 %v869, 16
      %v995 = vshll.u32 %v869, 16
      %v997 = vrot.slane %v995, 1
      %v998 = vor.u32 %v993, %v997
      %v1000 = vshll.u32 %v886, 16
      %v1002 = vrot.slane %v1000, 1
      %v1003 = vsel %vm895, %v998, %v1002
      %v1005 = vshrl.u32 %v870, 16
      %v1007 = vshll.u32 %v870, 16
      %v1009 = vrot.slane %v1007, 1
      %v1010 = vor.u32 %v1005, %v1009
      %v1012 = vshll.u32 %v887, 16
      %v1014 = vrot.slane %v1012, 1
      %v1015 = vsel %vm895, %v1010, %v1014
      %v1017 = vshrl.u32 %v871, 16
      %v1019 = vshll.u32 %v871, 16
      %v1021 = vrot.slane %v1019, 1
      %v1022 = vor.u32 %v1017, %v1021
      %v1024 = vshll.u32 %v888, 16
      %v1026 = vrot.slane %v1024, 1
      %v1027 = vsel %vm895, %v1022, %v1026
      %v1029 = vshrl.u32 %v872, 16
      %v1031 = vshll.u32 %v872, 16
      %v1033 = vrot.slane %v1031, 1
      %v1034 = vor.u32 %v1029, %v1033
      %v1036 = vshll.u32 %v889, 16
      %v1038 = vrot.slane %v1036, 1
      %v1039 = vsel %vm895, %v1034, %v1038
      %v1041 = vshrl.u32 %v873, 16
      %v1043 = vshll.u32 %v873, 16
      %v1045 = vrot.slane %v1043, 1
      %v1046 = vor.u32 %v1041, %v1045
      %v1048 = vshll.u32 %v890, 16
      %v1050 = vrot.slane %v1048, 1
      %v1051 = vsel %vm895, %v1046, %v1050
      %v1053 = vshrl.u32 %v874, 16
      %v1055 = vshll.u32 %v874, 16
      %v1057 = vrot.slane %v1055, 1
      %v1058 = vor.u32 %v1053, %v1057
      %v1060 = vshll.u32 %v891, 16
      %v1062 = vrot.slane %v1060, 1
      %v1063 = vsel %vm895, %v1058, %v1062
      %v1065 = vshrl.u32 %v875, 16
      %v1067 = vshll.u32 %v875, 16
      %v1069 = vrot.slane %v1067, 1
      %v1070 = vor.u32 %v1065, %v1069
      %v1072 = vshll.u32 %v892, 16
      %v1074 = vrot.slane %v1072, 1
      %v1075 = vsel %vm895, %v1070, %v1074
      %v1077 = vshrl.u32 %v876, 16
      %v1079 = vshll.u32 %v876, 16
      %v1081 = vrot.slane %v1079, 1
      %v1082 = vor.u32 %v1077, %v1081
      %v1084 = vshll.u32 %v893, 16
      %v1086 = vrot.slane %v1084, 1
      %v1087 = vsel %vm895, %v1082, %v1086
      %1088 = vrot.lane.b32.xlu0 %v907, 4
      %v1089 = vpop.permute.xlu0 %1088
      %1090 = vrot.lane.b32.xlu0 %v919, 4
      %v1091 = vpop.permute.xlu0 %1090
      %1092 = vrot.lane.b32.xlu0 %v931, 4
      %v1093 = vpop.permute.xlu0 %1092
      %1094 = vrot.lane.b32.xlu0 %v943, 4
      %v1095 = vpop.permute.xlu0 %1094
      %1096 = vrot.lane.b32.xlu0 %v955, 4
      %v1097 = vpop.permute.xlu0 %1096
      %1098 = vrot.lane.b32.xlu0 %v967, 4
      %v1099 = vpop.permute.xlu0 %1098
      %1100 = vrot.lane.b32.xlu0 %v979, 4
      %v1101 = vpop.permute.xlu0 %1100
      %1102 = vrot.lane.b32.xlu0 %v991, 4
      %v1103 = vpop.permute.xlu0 %1102
      %1104 = vrot.lane.b32.xlu0 %v1003, 4
      %v1105 = vpop.permute.xlu0 %1104
      %1106 = vrot.lane.b32.xlu0 %v1015, 4
      %v1107 = vpop.permute.xlu0 %1106
      %1108 = vrot.lane.b32.xlu0 %v1027, 4
      %v1109 = vpop.permute.xlu0 %1108
      %1110 = vrot.lane.b32.xlu0 %v1039, 4
      %v1111 = vpop.permute.xlu0 %1110
      %1112 = vrot.lane.b32.xlu0 %v1051, 4
      %v1113 = vpop.permute.xlu0 %1112
      %1114 = vrot.lane.b32.xlu0 %v1063, 4
      %v1115 = vpop.permute.xlu0 %1114
      %1116 = vrot.lane.b32.xlu0 %v1075, 4
      %v1117 = vpop.permute.xlu0 %1116
      %1118 = vrot.lane.b32.xlu0 %v1087, 4
      %v1119 = vpop.permute.xlu0 %1118
      %vm1152 = vcmask 1046528
      %v1153 = vrot.slane %v861, 1
      %v1154 = vrot.slane %v878, 1
      %v1155 = vsel %vm1152, %v1153, %v1154
      %v1156 = vrot.slane %v862, 1
      %v1157 = vrot.slane %v879, 1
      %v1158 = vsel %vm1152, %v1156, %v1157
      %v1159 = vrot.slane %v863, 1
      %v1160 = vrot.slane %v880, 1
      %v1161 = vsel %vm1152, %v1159, %v1160
      %v1162 = vrot.slane %v864, 1
      %v1163 = vrot.slane %v881, 1
      %v1164 = vsel %vm1152, %v1162, %v1163
      %v1165 = vrot.slane %v865, 1
      %v1166 = vrot.slane %v882, 1
      %v1167 = vsel %vm1152, %v1165, %v1166
      %v1168 = vrot.slane %v866, 1
      %v1169 = vrot.slane %v883, 1
      %v1170 = vsel %vm1152, %v1168, %v1169
      %v1171 = vrot.slane %v867, 1
      %v1172 = vrot.slane %v884, 1
      %v1173 = vsel %vm1152, %v1171, %v1172
      %v1174 = vrot.slane %v868, 1
      %v1175 = vrot.slane %v885, 1
      %v1176 = vsel %vm1152, %v1174, %v1175
      %v1177 = vrot.slane %v869, 1
      %v1178 = vrot.slane %v886, 1
      %v1179 = vsel %vm1152, %v1177, %v1178
      %v1180 = vrot.slane %v870, 1
      %v1181 = vrot.slane %v887, 1
      %v1182 = vsel %vm1152, %v1180, %v1181
      %v1183 = vrot.slane %v871, 1
      %v1184 = vrot.slane %v888, 1
      %v1185 = vsel %vm1152, %v1183, %v1184
      %v1186 = vrot.slane %v872, 1
      %v1187 = vrot.slane %v889, 1
      %v1188 = vsel %vm1152, %v1186, %v1187
      %v1189 = vrot.slane %v873, 1
      %v1190 = vrot.slane %v890, 1
      %v1191 = vsel %vm1152, %v1189, %v1190
      %v1192 = vrot.slane %v874, 1
      %v1193 = vrot.slane %v891, 1
      %v1194 = vsel %vm1152, %v1192, %v1193
      %v1195 = vrot.slane %v875, 1
      %v1196 = vrot.slane %v892, 1
      %v1197 = vsel %vm1152, %v1195, %v1196
      %v1198 = vrot.slane %v876, 1
      %v1199 = vrot.slane %v893, 1
      %v1200 = vsel %vm1152, %v1198, %v1199
      %1201 = vrot.lane.b32.xlu0 %v1155, 8
      %v1202 = vpop.permute.xlu0 %1201
      %1203 = vrot.lane.b32.xlu0 %v1158, 8
      %v1204 = vpop.permute.xlu0 %1203
      %1205 = vrot.lane.b32.xlu0 %v1161, 8
      %v1206 = vpop.permute.xlu0 %1205
      %1207 = vrot.lane.b32.xlu0 %v1164, 8
      %v1208 = vpop.permute.xlu0 %1207
      %1209 = vrot.lane.b32.xlu0 %v1167, 8
      %v1210 = vpop.permute.xlu0 %1209
      %1211 = vrot.lane.b32.xlu0 %v1170, 8
      %v1212 = vpop.permute.xlu0 %1211
      %1213 = vrot.lane.b32.xlu0 %v1173, 8
      %v1214 = vpop.permute.xlu0 %1213
      %1215 = vrot.lane.b32.xlu0 %v1176, 8
      %v1216 = vpop.permute.xlu0 %1215
      %1217 = vrot.lane.b32.xlu0 %v1179, 8
      %v1218 = vpop.permute.xlu0 %1217
      %1219 = vrot.lane.b32.xlu0 %v1182, 8
      %v1220 = vpop.permute.xlu0 %1219
      %1221 = vrot.lane.b32.xlu0 %v1185, 8
      %v1222 = vpop.permute.xlu0 %1221
      %1223 = vrot.lane.b32.xlu0 %v1188, 8
      %v1224 = vpop.permute.xlu0 %1223
      %1225 = vrot.lane.b32.xlu0 %v1191, 8
      %v1226 = vpop.permute.xlu0 %1225
      %1227 = vrot.lane.b32.xlu0 %v1194, 8
      %v1228 = vpop.permute.xlu0 %1227
      %1229 = vrot.lane.b32.xlu0 %v1197, 8
      %v1230 = vpop.permute.xlu0 %1229
      %1231 = vrot.lane.b32.xlu0 %v1200, 8
      %v1232 = vpop.permute.xlu0 %1231
      %1234 = vrot.lane.b32.xlu0 %v862, 12
      %v1235 = vpop.permute.xlu0 %1234
      %1236 = vrot.lane.b32.xlu0 %v863, 12
      %v1237 = vpop.permute.xlu0 %1236
      %1238 = vrot.lane.b32.xlu0 %v864, 12
      %v1239 = vpop.permute.xlu0 %1238
      %1240 = vrot.lane.b32.xlu0 %v865, 12
      %v1241 = vpop.permute.xlu0 %1240
      %1242 = vrot.lane.b32.xlu0 %v866, 12
      %v1243 = vpop.permute.xlu0 %1242
      %1244 = vrot.lane.b32.xlu0 %v867, 12
      %v1245 = vpop.permute.xlu0 %1244
      %1246 = vrot.lane.b32.xlu0 %v868, 12
      %v1247 = vpop.permute.xlu0 %1246
      %1248 = vrot.lane.b32.xlu0 %v869, 12
      %v1249 = vpop.permute.xlu0 %1248
      %1250 = vrot.lane.b32.xlu0 %v870, 12
      %v1251 = vpop.permute.xlu0 %1250
      %1252 = vrot.lane.b32.xlu0 %v871, 12
      %v1253 = vpop.permute.xlu0 %1252
      %1254 = vrot.lane.b32.xlu0 %v872, 12
      %v1255 = vpop.permute.xlu0 %1254
      %1256 = vrot.lane.b32.xlu0 %v873, 12
      %v1257 = vpop.permute.xlu0 %1256
      %1258 = vrot.lane.b32.xlu0 %v874, 12
      %v1259 = vpop.permute.xlu0 %1258
      %1260 = vrot.lane.b32.xlu0 %v875, 12
      %v1261 = vpop.permute.xlu0 %1260
      %1262 = vrot.lane.b32.xlu0 %v876, 12
      %v1263 = vpop.permute.xlu0 %1262
      %1264 = vrot.lane.b32.xlu0 %v877, 12
      %v1265 = vpop.permute.xlu0 %1264
      %v1267 = vshrl.u32 %v877, 16
      %v1269 = vshll.u32 %v877, 16
      %v1271 = vrot.slane %v1269, 1
      %v1272 = vor.u32 %v1267, %v1271
      %v1274 = vshll.u32 %v894, 16
      %v1276 = vrot.slane %v1274, 1
      %v1277 = vsel %vm895, %v1272, %v1276
      %1278 = vrot.lane.b32.xlu0 %v919, 16
      %v1279 = vpop.permute.xlu0 %1278
      %1280 = vrot.lane.b32.xlu0 %v931, 16
      %v1281 = vpop.permute.xlu0 %1280
      %1282 = vrot.lane.b32.xlu0 %v943, 16
      %v1283 = vpop.permute.xlu0 %1282
      %1284 = vrot.lane.b32.xlu0 %v955, 16
      %v1285 = vpop.permute.xlu0 %1284
      %1286 = vrot.lane.b32.xlu0 %v967, 16
      %v1287 = vpop.permute.xlu0 %1286
      %1288 = vrot.lane.b32.xlu0 %v979, 16
      %v1289 = vpop.permute.xlu0 %1288
      %1290 = vrot.lane.b32.xlu0 %v991, 16
      %v1291 = vpop.permute.xlu0 %1290
      %1292 = vrot.lane.b32.xlu0 %v1003, 16
      %v1293 = vpop.permute.xlu0 %1292
      %1294 = vrot.lane.b32.xlu0 %v1015, 16
      %v1295 = vpop.permute.xlu0 %1294
      %1296 = vrot.lane.b32.xlu0 %v1027, 16
      %v1297 = vpop.permute.xlu0 %1296
      %1298 = vrot.lane.b32.xlu0 %v1039, 16
      %v1299 = vpop.permute.xlu0 %1298
      %1300 = vrot.lane.b32.xlu0 %v1051, 16
      %v1301 = vpop.permute.xlu0 %1300
      %1302 = vrot.lane.b32.xlu0 %v1063, 16
      %v1303 = vpop.permute.xlu0 %1302
      %1304 = vrot.lane.b32.xlu0 %v1075, 16
      %v1305 = vpop.permute.xlu0 %1304
      %1306 = vrot.lane.b32.xlu0 %v1087, 16
      %v1307 = vpop.permute.xlu0 %1306
      %1308 = vrot.lane.b32.xlu0 %v1277, 16
      %v1309 = vpop.permute.xlu0 %1308
      %v1311 = vrot.slane %v877, 1
      %v1312 = vrot.slane %v894, 1
      %v1313 = vsel %vm1152, %v1311, %v1312
      %1314 = vrot.lane.b32.xlu0 %v1158, 20
      %v1315 = vpop.permute.xlu0 %1314
      %1316 = vrot.lane.b32.xlu0 %v1161, 20
      %v1317 = vpop.permute.xlu0 %1316
      %1318 = vrot.lane.b32.xlu0 %v1164, 20
      %v1319 = vpop.permute.xlu0 %1318
      %1320 = vrot.lane.b32.xlu0 %v1167, 20
      %v1321 = vpop.permute.xlu0 %1320
      %1322 = vrot.lane.b32.xlu0 %v1170, 20
      %v1323 = vpop.permute.xlu0 %1322
      %1324 = vrot.lane.b32.xlu0 %v1173, 20
      %v1325 = vpop.permute.xlu0 %1324
      %1326 = vrot.lane.b32.xlu0 %v1176, 20
      %v1327 = vpop.permute.xlu0 %1326
      %1328 = vrot.lane.b32.xlu0 %v1179, 20
      %v1329 = vpop.permute.xlu0 %1328
      %1330 = vrot.lane.b32.xlu0 %v1182, 20
      %v1331 = vpop.permute.xlu0 %1330
      %1332 = vrot.lane.b32.xlu0 %v1185, 20
      %v1333 = vpop.permute.xlu0 %1332
      %1334 = vrot.lane.b32.xlu0 %v1188, 20
      %v1335 = vpop.permute.xlu0 %1334
      %1336 = vrot.lane.b32.xlu0 %v1191, 20
      %v1337 = vpop.permute.xlu0 %1336
      %1338 = vrot.lane.b32.xlu0 %v1194, 20
      %v1339 = vpop.permute.xlu0 %1338
      %1340 = vrot.lane.b32.xlu0 %v1197, 20
      %v1341 = vpop.permute.xlu0 %1340
      %1342 = vrot.lane.b32.xlu0 %v1200, 20
      %v1343 = vpop.permute.xlu0 %1342
      %1344 = vrot.lane.b32.xlu0 %v1313, 20
      %v1345 = vpop.permute.xlu0 %1344
      %1346 = vrot.lane.b32.xlu0 %v863, 24
      %v1347 = vpop.permute.xlu0 %1346
      %1348 = vrot.lane.b32.xlu0 %v864, 24
      %v1349 = vpop.permute.xlu0 %1348
      %1350 = vrot.lane.b32.xlu0 %v865, 24
      %v1351 = vpop.permute.xlu0 %1350
      %1352 = vrot.lane.b32.xlu0 %v866, 24
      %v1353 = vpop.permute.xlu0 %1352
      %1354 = vrot.lane.b32.xlu0 %v867, 24
      %v1355 = vpop.permute.xlu0 %1354
      %1356 = vrot.lane.b32.xlu0 %v868, 24
      %v1357 = vpop.permute.xlu0 %1356
      %1358 = vrot.lane.b32.xlu0 %v869, 24
      %v1359 = vpop.permute.xlu0 %1358
      %1360 = vrot.lane.b32.xlu0 %v870, 24
      %v1361 = vpop.permute.xlu0 %1360
      %1362 = vrot.lane.b32.xlu0 %v871, 24
      %v1363 = vpop.permute.xlu0 %1362
      %1364 = vrot.lane.b32.xlu0 %v872, 24
      %v1365 = vpop.permute.xlu0 %1364
      %1366 = vrot.lane.b32.xlu0 %v873, 24
      %v1367 = vpop.permute.xlu0 %1366
      %1368 = vrot.lane.b32.xlu0 %v874, 24
      %v1369 = vpop.permute.xlu0 %1368
      %1370 = vrot.lane.b32.xlu0 %v875, 24
      %v1371 = vpop.permute.xlu0 %1370
      %1372 = vrot.lane.b32.xlu0 %v876, 24
      %v1373 = vpop.permute.xlu0 %1372
      %1374 = vrot.lane.b32.xlu0 %v877, 24
      %v1375 = vpop.permute.xlu0 %1374
      %1376 = vrot.lane.b32.xlu0 %v861, 24
      %v1377 = vpop.permute.xlu0 %1376
      %1378 = vrot.lane.b32.xlu0 %v931, 28
      %v1379 = vpop.permute.xlu0 %1378
      %1380 = vrot.lane.b32.xlu0 %v943, 28
      %v1381 = vpop.permute.xlu0 %1380
      %1382 = vrot.lane.b32.xlu0 %v955, 28
      %v1383 = vpop.permute.xlu0 %1382
      %1384 = vrot.lane.b32.xlu0 %v967, 28
      %v1385 = vpop.permute.xlu0 %1384
      %1386 = vrot.lane.b32.xlu0 %v979, 28
      %v1387 = vpop.permute.xlu0 %1386
      %1388 = vrot.lane.b32.xlu0 %v991, 28
      %v1389 = vpop.permute.xlu0 %1388
      %1390 = vrot.lane.b32.xlu0 %v1003, 28
      %v1391 = vpop.permute.xlu0 %1390
      %1392 = vrot.lane.b32.xlu0 %v1015, 28
      %v1393 = vpop.permute.xlu0 %1392
      %1394 = vrot.lane.b32.xlu0 %v1027, 28
      %v1395 = vpop.permute.xlu0 %1394
      %1396 = vrot.lane.b32.xlu0 %v1039, 28
      %v1397 = vpop.permute.xlu0 %1396
      %1398 = vrot.lane.b32.xlu0 %v1051, 28
      %v1399 = vpop.permute.xlu0 %1398
      %1400 = vrot.lane.b32.xlu0 %v1063, 28
      %v1401 = vpop.permute.xlu0 %1400
      %1402 = vrot.lane.b32.xlu0 %v1075, 28
      %v1403 = vpop.permute.xlu0 %1402
      %1404 = vrot.lane.b32.xlu0 %v1087, 28
      %v1405 = vpop.permute.xlu0 %1404
      %1406 = vrot.lane.b32.xlu0 %v1277, 28
      %v1407 = vpop.permute.xlu0 %1406
      %1408 = vrot.lane.b32.xlu0 %v907, 28
      %v1409 = vpop.permute.xlu0 %1408
      %1410 = vrot.lane.b32.xlu0 %v1161, 32
      %v1411 = vpop.permute.xlu0 %1410
      %1412 = vrot.lane.b32.xlu0 %v1164, 32
      %v1413 = vpop.permute.xlu0 %1412
      %1414 = vrot.lane.b32.xlu0 %v1167, 32
      %v1415 = vpop.permute.xlu0 %1414
      %1416 = vrot.lane.b32.xlu0 %v1170, 32
      %v1417 = vpop.permute.xlu0 %1416
      %1418 = vrot.lane.b32.xlu0 %v1173, 32
      %v1419 = vpop.permute.xlu0 %1418
      %1420 = vrot.lane.b32.xlu0 %v1176, 32
      %v1421 = vpop.permute.xlu0 %1420
      %1422 = vrot.lane.b32.xlu0 %v1179, 32
      %v1423 = vpop.permute.xlu0 %1422
      %1424 = vrot.lane.b32.xlu0 %v1182, 32
      %v1425 = vpop.permute.xlu0 %1424
      %1426 = vrot.lane.b32.xlu0 %v1185, 32
      %v1427 = vpop.permute.xlu0 %1426
      %1428 = vrot.lane.b32.xlu0 %v1188, 32
      %v1429 = vpop.permute.xlu0 %1428
      %1430 = vrot.lane.b32.xlu0 %v1191, 32
      %v1431 = vpop.permute.xlu0 %1430
      %1432 = vrot.lane.b32.xlu0 %v1194, 32
      %v1433 = vpop.permute.xlu0 %1432
      %1434 = vrot.lane.b32.xlu0 %v1197, 32
      %v1435 = vpop.permute.xlu0 %1434
      %1436 = vrot.lane.b32.xlu0 %v1200, 32
      %v1437 = vpop.permute.xlu0 %1436
      %1438 = vrot.lane.b32.xlu0 %v1313, 32
      %v1439 = vpop.permute.xlu0 %1438
      %1440 = vrot.lane.b32.xlu0 %v1155, 32
      %v1441 = vpop.permute.xlu0 %1440
      %vm1442 = vcmask 31744
      %v1444 = vsel %vm1442, %v861, %v1089
      %v1446 = vsel %vm1442, %v862, %v1091
      %v1448 = vsel %vm1442, %v863, %v1093
      %v1450 = vsel %vm1442, %v864, %v1095
      %v1452 = vsel %vm1442, %v865, %v1097
      %v1454 = vsel %vm1442, %v866, %v1099
      %v1456 = vsel %vm1442, %v867, %v1101
      %v1458 = vsel %vm1442, %v868, %v1103
      %v1460 = vsel %vm1442, %v869, %v1105
      %v1462 = vsel %vm1442, %v870, %v1107
      %v1464 = vsel %vm1442, %v871, %v1109
      %v1466 = vsel %vm1442, %v872, %v1111
      %v1468 = vsel %vm1442, %v873, %v1113
      %v1470 = vsel %vm1442, %v874, %v1115
      %v1472 = vsel %vm1442, %v875, %v1117
      %v1474 = vsel %vm1442, %v876, %v1119
      %vm1475 = vcmask 64512
      %v1477 = vsel %vm1475, %v1444, %v1202
      %v1479 = vsel %vm1475, %v1446, %v1204
      %v1481 = vsel %vm1475, %v1448, %v1206
      %v1483 = vsel %vm1475, %v1450, %v1208
      %v1485 = vsel %vm1475, %v1452, %v1210
      %v1487 = vsel %vm1475, %v1454, %v1212
      %v1489 = vsel %vm1475, %v1456, %v1214
      %v1491 = vsel %vm1475, %v1458, %v1216
      %v1493 = vsel %vm1475, %v1460, %v1218
      %v1495 = vsel %vm1475, %v1462, %v1220
      %v1497 = vsel %vm1475, %v1464, %v1222
      %v1499 = vsel %vm1475, %v1466, %v1224
      %v1501 = vsel %vm1475, %v1468, %v1226
      %v1503 = vsel %vm1475, %v1470, %v1228
      %v1505 = vsel %vm1475, %v1472, %v1230
      %v1507 = vsel %vm1475, %v1474, %v1232
      %vm1508 = vcmask 97280
      %v1510 = vsel %vm1508, %v1477, %v1235
      %v1512 = vsel %vm1508, %v1479, %v1237
      %v1514 = vsel %vm1508, %v1481, %v1239
      %v1516 = vsel %vm1508, %v1483, %v1241
      %v1518 = vsel %vm1508, %v1485, %v1243
      %v1520 = vsel %vm1508, %v1487, %v1245
      %v1522 = vsel %vm1508, %v1489, %v1247
      %v1524 = vsel %vm1508, %v1491, %v1249
      %v1526 = vsel %vm1508, %v1493, %v1251
      %v1528 = vsel %vm1508, %v1495, %v1253
      %v1530 = vsel %vm1508, %v1497, %v1255
      %v1532 = vsel %vm1508, %v1499, %v1257
      %v1534 = vsel %vm1508, %v1501, %v1259
      %v1536 = vsel %vm1508, %v1503, %v1261
      %v1538 = vsel %vm1508, %v1505, %v1263
      %v1540 = vsel %vm1508, %v1507, %v1265
      %vm1541 = vcmask 130048
      %v1543 = vsel %vm1541, %v1510, %v1279
      %v1545 = vsel %vm1541, %v1512, %v1281
      %v1547 = vsel %vm1541, %v1514, %v1283
      %v1549 = vsel %vm1541, %v1516, %v1285
      %v1551 = vsel %vm1541, %v1518, %v1287
      %v1553 = vsel %vm1541, %v1520, %v1289
      %v1555 = vsel %vm1541, %v1522, %v1291
      %v1557 = vsel %vm1541, %v1524, %v1293
      %v1559 = vsel %vm1541, %v1526, %v1295
      %v1561 = vsel %vm1541, %v1528, %v1297
      %v1563 = vsel %vm1541, %v1530, %v1299
      %v1565 = vsel %vm1541, %v1532, %v1301
      %v1567 = vsel %vm1541, %v1534, %v1303
      %v1569 = vsel %vm1541, %v1536, %v1305
      %v1571 = vsel %vm1541, %v1538, %v1307
      %v1573 = vsel %vm1541, %v1540, %v1309
      %vm1574 = vcmask 162816
      %v1576 = vsel %vm1574, %v1543, %v1315
      %v1578 = vsel %vm1574, %v1545, %v1317
      %v1580 = vsel %vm1574, %v1547, %v1319
      %v1582 = vsel %vm1574, %v1549, %v1321
      %v1584 = vsel %vm1574, %v1551, %v1323
      %v1586 = vsel %vm1574, %v1553, %v1325
      %v1588 = vsel %vm1574, %v1555, %v1327
      %v1590 = vsel %vm1574, %v1557, %v1329
      %v1592 = vsel %vm1574, %v1559, %v1331
      %v1594 = vsel %vm1574, %v1561, %v1333
      %v1596 = vsel %vm1574, %v1563, %v1335
      %v1598 = vsel %vm1574, %v1565, %v1337
      %v1600 = vsel %vm1574, %v1567, %v1339
      %v1602 = vsel %vm1574, %v1569, %v1341
      %v1604 = vsel %vm1574, %v1571, %v1343
      %v1606 = vsel %vm1574, %v1573, %v1345
      %vm1607 = vcmask 195584
      %v1609 = vsel %vm1607, %v1576, %v1347
      %v1611 = vsel %vm1607, %v1578, %v1349
      %v1613 = vsel %vm1607, %v1580, %v1351
      %v1615 = vsel %vm1607, %v1582, %v1353
      %v1617 = vsel %vm1607, %v1584, %v1355
      %v1619 = vsel %vm1607, %v1586, %v1357
      %v1621 = vsel %vm1607, %v1588, %v1359
      %v1623 = vsel %vm1607, %v1590, %v1361
      %v1625 = vsel %vm1607, %v1592, %v1363
      %v1627 = vsel %vm1607, %v1594, %v1365
      %v1629 = vsel %vm1607, %v1596, %v1367
      %v1631 = vsel %vm1607, %v1598, %v1369
      %v1633 = vsel %vm1607, %v1600, %v1371
      %v1635 = vsel %vm1607, %v1602, %v1373
      %v1637 = vsel %vm1607, %v1604, %v1375
      %v1639 = vsel %vm1607, %v1606, %v1377
      %vm1640 = vcmask 228352
      %v1642 = vsel %vm1640, %v1609, %v1379
      %v1644 = vsel %vm1640, %v1611, %v1381
      %v1646 = vsel %vm1640, %v1613, %v1383
      %v1648 = vsel %vm1640, %v1615, %v1385
      %v1650 = vsel %vm1640, %v1617, %v1387
      %v1652 = vsel %vm1640, %v1619, %v1389
      %v1654 = vsel %vm1640, %v1621, %v1391
      %v1656 = vsel %vm1640, %v1623, %v1393
      %v1658 = vsel %vm1640, %v1625, %v1395
      %v1660 = vsel %vm1640, %v1627, %v1397
      %v1662 = vsel %vm1640, %v1629, %v1399
      %v1664 = vsel %vm1640, %v1631, %v1401
      %v1666 = vsel %vm1640, %v1633, %v1403
      %v1668 = vsel %vm1640, %v1635, %v1405
      %v1670 = vsel %vm1640, %v1637, %v1407
      %v1672 = vsel %vm1640, %v1639, %v1409
      %vm1673 = vcmask 261120
      %v1675 = vsel %vm1673, %v1642, %v1411
      %v1677 = vsel %vm1673, %v1644, %v1413
      %v1679 = vsel %vm1673, %v1646, %v1415
      %v1681 = vsel %vm1673, %v1648, %v1417
      %v1683 = vsel %vm1673, %v1650, %v1419
      %v1685 = vsel %vm1673, %v1652, %v1421
      %v1687 = vsel %vm1673, %v1654, %v1423
      %v1689 = vsel %vm1673, %v1656, %v1425
      %v1691 = vsel %vm1673, %v1658, %v1427
      %v1693 = vsel %vm1673, %v1660, %v1429
      %v1695 = vsel %vm1673, %v1662, %v1431
      %v1697 = vsel %vm1673, %v1664, %v1433
      %v1699 = vsel %vm1673, %v1666, %v1435
      %v1701 = vsel %vm1673, %v1668, %v1437
      %v1703 = vsel %vm1673, %v1670, %v1439
      %v1705 = vsel %vm1673, %v1672, %v1441
      %v1706 = vld [vmem:[%s2] sm:$0xf]
      %v1707 = vld [vmem:[%s2 + $0x4] sm:$0xf]
      %v1708 = vld [vmem:[%s2 + $0x8] sm:$0xf]
      %v1709 = vld [vmem:[%s2 + $0xc] sm:$0xf]
      %v1710 = vld [vmem:[%s2 + $0x10] sm:$0x3]
      %v1711 = vld [vmem:[%s3] sm:$0x1]
      %v1713 = vperm.slane %v1711, 0
      %v1720 = vunpack.c.l.b16 %v1706
      %v1721 = vunpack.c.l.b16 %v1707
      %v1722 = vunpack.c.l.b16 %v1708
      %v1723 = vunpack.c.l.b16 %v1709
      %v1724 = vunpack.c.l.b16 %v1710
      %v1725 = vpack.c.b16 %v1721, %v1720
      %v1726 = vpack.c.b16 %v1723, %v1722
      %v1727 = vpack.c.b16 %v1724, %v1724
      %vm1730 = vcmask 293888
      %v1731 = vsel %vm1730, %v1675, 0
      %v1733 = vsel %vm1730, %v1677, 0
      %v1735 = vsel %vm1730, %v1679, 0
      %v1737 = vsel %vm1730, %v1681, 0
      %v1739 = vsel %vm1730, %v1683, 0
      %v1741 = vsel %vm1730, %v1685, 0
      %v1743 = vsel %vm1730, %v1687, 0
      %v1745 = vsel %vm1730, %v1689, 0
      %v1747 = vsel %vm1730, %v1691, 0
      %v1749 = vsel %vm1730, %v1693, 0
      %v1751 = vsel %vm1730, %v1695, 0
      %v1753 = vsel %vm1730, %v1697, 0
      %v1755 = vsel %vm1730, %v1699, 0
      %v1757 = vsel %vm1730, %v1701, 0
      %v1759 = vsel %vm1730, %v1703, 0
      %v1761 = vsel %vm1730, %v1705, 0
      %vm1763 = vcmask 1041408
      %v1765 = vsel %vm1763, %v1727, 0
      %1767 = vmatpush.bf16.msra.mxu0 0
      %1768 = vmatpush.bf16.msra.mxu0 0
      %1769 = vmatpush.bf16.msra.mxu0 0
      %1770 = vmatpush.bf16.msra.mxu0 0
      %1771 = vmatpush.bf16.msra.mxu0 0
      %1772 = vmatpush.bf16.msra.mxu0 %v1765
      %1773 = vmatpush.bf16.msra.mxu0 %v1726
      %1774 = vmatpush.bf16.msra.mxu0 %v1725
      %1775 = vmatmul.bf16.gmra.mxu0 %v1731
      %v1776 = vpop.f32.mrf.mxu0
      %v1777 = vadd.f32 %v1713, %v1776
      %v1778 = vpop.f32.mrf.mxu0
      %v1779 = vadd.f32 %v1713, %v1778
      %1780 = vmatmul.bf16.gmra.mxu0 %v1733
      %v1781 = vpop.f32.mrf.mxu0
      %v1782 = vadd.f32 %v1713, %v1781
      %v1783 = vpop.f32.mrf.mxu0
      %v1784 = vadd.f32 %v1713, %v1783
      %1785 = vmatmul.bf16.gmra.mxu0 %v1735
      %v1786 = vpop.f32.mrf.mxu0
      %v1787 = vadd.f32 %v1713, %v1786
      %v1788 = vpop.f32.mrf.mxu0
      %v1789 = vadd.f32 %v1713, %v1788
      %1790 = vmatmul.bf16.gmra.mxu0 %v1737
      %v1791 = vpop.f32.mrf.mxu0
      %v1792 = vadd.f32 %v1713, %v1791
      %v1793 = vpop.f32.mrf.mxu0
      %v1794 = vadd.f32 %v1713, %v1793
      %1795 = vmatmul.bf16.gmra.mxu0 %v1739
      %v1796 = vpop.f32.mrf.mxu0
      %v1797 = vadd.f32 %v1713, %v1796
      %v1798 = vpop.f32.mrf.mxu0
      %v1799 = vadd.f32 %v1713, %v1798
      %1800 = vmatmul.bf16.gmra.mxu0 %v1741
      %v1801 = vpop.f32.mrf.mxu0
      %v1802 = vadd.f32 %v1713, %v1801
      %v1803 = vpop.f32.mrf.mxu0
      %v1804 = vadd.f32 %v1713, %v1803
      %1805 = vmatmul.bf16.gmra.mxu0 %v1743
      %v1806 = vpop.f32.mrf.mxu0
      %v1807 = vadd.f32 %v1713, %v1806
      %v1808 = vpop.f32.mrf.mxu0
      %v1809 = vadd.f32 %v1713, %v1808
      %1810 = vmatmul.bf16.gmra.mxu0 %v1745
      %v1811 = vpop.f32.mrf.mxu0
      %v1812 = vadd.f32 %v1713, %v1811
      %v1813 = vpop.f32.mrf.mxu0
      %v1814 = vadd.f32 %v1713, %v1813
      %1815 = vmatmul.bf16.gmra.mxu0 %v1747
      %v1816 = vpop.f32.mrf.mxu0
      %v1817 = vadd.f32 %v1713, %v1816
      %v1818 = vpop.f32.mrf.mxu0
      %v1819 = vadd.f32 %v1713, %v1818
      %1820 = vmatmul.bf16.gmra.mxu0 %v1749
      %v1821 = vpop.f32.mrf.mxu0
      %v1822 = vadd.f32 %v1713, %v1821
      %v1823 = vpop.f32.mrf.mxu0
      %v1824 = vadd.f32 %v1713, %v1823
      %1825 = vmatmul.bf16.gmra.mxu0 %v1751
      %v1826 = vpop.f32.mrf.mxu0
      %v1827 = vadd.f32 %v1713, %v1826
      %v1828 = vpop.f32.mrf.mxu0
      %v1829 = vadd.f32 %v1713, %v1828
      %1830 = vmatmul.bf16.gmra.mxu0 %v1753
      %v1831 = vpop.f32.mrf.mxu0
      %v1832 = vadd.f32 %v1713, %v1831
      %v1833 = vpop.f32.mrf.mxu0
      %v1834 = vadd.f32 %v1713, %v1833
      %1835 = vmatmul.bf16.gmra.mxu0 %v1755
      %v1836 = vpop.f32.mrf.mxu0
      %v1837 = vadd.f32 %v1713, %v1836
      %v1838 = vpop.f32.mrf.mxu0
      %v1839 = vadd.f32 %v1713, %v1838
      %1840 = vmatmul.bf16.gmra.mxu0 %v1757
      %v1841 = vpop.f32.mrf.mxu0
      %v1842 = vadd.f32 %v1713, %v1841
      %v1843 = vpop.f32.mrf.mxu0
      %v1844 = vadd.f32 %v1713, %v1843
      %1845 = vmatmul.bf16.gmra.mxu0 %v1759
      %v1846 = vpop.f32.mrf.mxu0
      %v1847 = vadd.f32 %v1713, %v1846
      %v1848 = vpop.f32.mrf.mxu0
      %v1849 = vadd.f32 %v1713, %v1848
      %1850 = vmatmul.bf16.gmra.mxu0 %v1761
      %v1851 = vpop.f32.mrf.mxu0
      %v1852 = vadd.f32 %v1713, %v1851
      %v1853 = vpop.f32.mrf.mxu0
      %v1854 = vadd.f32 %v1713, %v1853
      %1855 = vdwg.mxu0
      %v1856 = vmax.f32 %v1777, 0.0
      %v1857 = vmax.f32 %v1779, 0.0
      %v1858 = vmax.f32 %v1782, 0.0
      %v1859 = vmax.f32 %v1784, 0.0
      %v1860 = vmax.f32 %v1787, 0.0
      %v1861 = vmax.f32 %v1789, 0.0
      %v1862 = vmax.f32 %v1792, 0.0
      %v1863 = vmax.f32 %v1794, 0.0
      %v1864 = vmax.f32 %v1797, 0.0
      %v1865 = vmax.f32 %v1799, 0.0
      %v1866 = vmax.f32 %v1802, 0.0
      %v1867 = vmax.f32 %v1804, 0.0
      %v1868 = vmax.f32 %v1807, 0.0
      %v1869 = vmax.f32 %v1809, 0.0
      %v1870 = vmax.f32 %v1812, 0.0
      %v1871 = vmax.f32 %v1814, 0.0
      %v1872 = vmax.f32 %v1817, 0.0
      %v1873 = vmax.f32 %v1819, 0.0
      %v1874 = vmax.f32 %v1822, 0.0
      %v1875 = vmax.f32 %v1824, 0.0
      %v1876 = vmax.f32 %v1827, 0.0
      %v1877 = vmax.f32 %v1829, 0.0
      %v1878 = vmax.f32 %v1832, 0.0
      %v1879 = vmax.f32 %v1834, 0.0
      %v1880 = vmax.f32 %v1837, 0.0
      %v1881 = vmax.f32 %v1839, 0.0
      %v1882 = vmax.f32 %v1842, 0.0
      %v1883 = vmax.f32 %v1844, 0.0
      %v1884 = vmax.f32 %v1847, 0.0
      %v1885 = vmax.f32 %v1849, 0.0
      %v1886 = vmax.f32 %v1852, 0.0
      %v1887 = vmax.f32 %v1854, 0.0
      %v1888 = vpack.c.bf16 %v1856, %v1856
      %v1889 = vpack.c.bf16 %v1857, %v1857
      %v1890 = vpack.c.bf16 %v1858, %v1858
      %v1891 = vpack.c.bf16 %v1859, %v1859
      %v1892 = vpack.c.bf16 %v1860, %v1860
      %v1893 = vpack.c.bf16 %v1861, %v1861
      %v1894 = vpack.c.bf16 %v1862, %v1862
      %v1895 = vpack.c.bf16 %v1863, %v1863
      %v1896 = vpack.c.bf16 %v1864, %v1864
      %v1897 = vpack.c.bf16 %v1865, %v1865
      %v1898 = vpack.c.bf16 %v1866, %v1866
      %v1899 = vpack.c.bf16 %v1867, %v1867
      %v1900 = vpack.c.bf16 %v1868, %v1868
      %v1901 = vpack.c.bf16 %v1869, %v1869
      %v1902 = vpack.c.bf16 %v1870, %v1870
      %v1903 = vpack.c.bf16 %v1871, %v1871
      %v1904 = vpack.c.bf16 %v1872, %v1872
      %v1905 = vpack.c.bf16 %v1873, %v1873
      %v1906 = vpack.c.bf16 %v1874, %v1874
      %v1907 = vpack.c.bf16 %v1875, %v1875
      %v1908 = vpack.c.bf16 %v1876, %v1876
      %v1909 = vpack.c.bf16 %v1877, %v1877
      %v1910 = vpack.c.bf16 %v1878, %v1878
      %v1911 = vpack.c.bf16 %v1879, %v1879
      %v1912 = vpack.c.bf16 %v1880, %v1880
      %v1913 = vpack.c.bf16 %v1881, %v1881
      %v1914 = vpack.c.bf16 %v1882, %v1882
      %v1915 = vpack.c.bf16 %v1883, %v1883
      %v1916 = vpack.c.bf16 %v1884, %v1884
      %v1917 = vpack.c.bf16 %v1885, %v1885
      %v1918 = vpack.c.bf16 %v1886, %v1886
      %v1919 = vpack.c.bf16 %v1887, %v1887
      %v1952 = vunpack.c.l.b16 %v1888
      %v1953 = vunpack.c.l.b16 %v1889
      %v1954 = vunpack.c.l.b16 %v1890
      %v1955 = vunpack.c.l.b16 %v1891
      %v1956 = vunpack.c.l.b16 %v1892
      %v1957 = vunpack.c.l.b16 %v1893
      %v1958 = vunpack.c.l.b16 %v1894
      %v1959 = vunpack.c.l.b16 %v1895
      %v1960 = vunpack.c.l.b16 %v1896
      %v1961 = vunpack.c.l.b16 %v1897
      %v1962 = vunpack.c.l.b16 %v1898
      %v1963 = vunpack.c.l.b16 %v1899
      %v1964 = vunpack.c.l.b16 %v1900
      %v1965 = vunpack.c.l.b16 %v1901
      %v1966 = vunpack.c.l.b16 %v1902
      %v1967 = vunpack.c.l.b16 %v1903
      %v1968 = vunpack.c.l.b16 %v1904
      %v1969 = vunpack.c.l.b16 %v1905
      %v1970 = vunpack.c.l.b16 %v1906
      %v1971 = vunpack.c.l.b16 %v1907
      %v1972 = vunpack.c.l.b16 %v1908
      %v1973 = vunpack.c.l.b16 %v1909
      %v1974 = vunpack.c.l.b16 %v1910
      %v1975 = vunpack.c.l.b16 %v1911
      %v1976 = vunpack.c.l.b16 %v1912
      %v1977 = vunpack.c.l.b16 %v1913
      %v1978 = vunpack.c.l.b16 %v1914
      %v1979 = vunpack.c.l.b16 %v1915
      %v1980 = vunpack.c.l.b16 %v1916
      %v1981 = vunpack.c.l.b16 %v1917
      %v1982 = vunpack.c.l.b16 %v1918
      %v1983 = vunpack.c.l.b16 %v1919
      %v1984 = vpack.c.b16 %v1953, %v1952
      %v1985 = vpack.c.b16 %v1955, %v1954
      %v1986 = vpack.c.b16 %v1957, %v1956
      %v1987 = vpack.c.b16 %v1959, %v1958
      %v1988 = vpack.c.b16 %v1961, %v1960
      %v1989 = vpack.c.b16 %v1963, %v1962
      %v1990 = vpack.c.b16 %v1965, %v1964
      %v1991 = vpack.c.b16 %v1967, %v1966
      %v1992 = vpack.c.b16 %v1969, %v1968
      %v1993 = vpack.c.b16 %v1971, %v1970
      %v1994 = vpack.c.b16 %v1973, %v1972
      %v1995 = vpack.c.b16 %v1975, %v1974
      %v1996 = vpack.c.b16 %v1977, %v1976
      %v1997 = vpack.c.b16 %v1979, %v1978
      %v1998 = vpack.c.b16 %v1981, %v1980
      %v1999 = vpack.c.b16 %v1983, %v1982
      %v2001 = vshrl.u32 %v1984, 16
      %v2003 = vrot.slane %v2001, 7
      %v2004 = vshll.u32 %v1984, 16
      %v2006 = vor.u32 %v2003, %v2004
      %v2008 = vshrl.u32 %v1985, 16
      %v2010 = vrot.slane %v2008, 7
      %v2011 = vshll.u32 %v1985, 16
      %v2013 = vor.u32 %v2010, %v2011
      %v2015 = vshrl.u32 %v1986, 16
      %v2017 = vrot.slane %v2015, 7
      %v2018 = vshll.u32 %v1986, 16
      %v2020 = vor.u32 %v2017, %v2018
      %v2022 = vshrl.u32 %v1987, 16
      %v2024 = vrot.slane %v2022, 7
      %v2025 = vshll.u32 %v1987, 16
      %v2027 = vor.u32 %v2024, %v2025
      %v2029 = vshrl.u32 %v1988, 16
      %v2031 = vrot.slane %v2029, 7
      %v2032 = vshll.u32 %v1988, 16
      %v2034 = vor.u32 %v2031, %v2032
      %v2036 = vshrl.u32 %v1989, 16
      %v2038 = vrot.slane %v2036, 7
      %v2039 = vshll.u32 %v1989, 16
      %v2041 = vor.u32 %v2038, %v2039
      %v2043 = vshrl.u32 %v1990, 16
      %v2045 = vrot.slane %v2043, 7
      %v2046 = vshll.u32 %v1990, 16
      %v2048 = vor.u32 %v2045, %v2046
      %v2050 = vshrl.u32 %v1991, 16
      %v2052 = vrot.slane %v2050, 7
      %v2053 = vshll.u32 %v1991, 16
      %v2055 = vor.u32 %v2052, %v2053
      %v2057 = vshrl.u32 %v1992, 16
      %v2059 = vrot.slane %v2057, 7
      %v2060 = vshll.u32 %v1992, 16
      %v2062 = vor.u32 %v2059, %v2060
      %v2064 = vshrl.u32 %v1993, 16
      %v2066 = vrot.slane %v2064, 7
      %v2067 = vshll.u32 %v1993, 16
      %v2069 = vor.u32 %v2066, %v2067
      %v2071 = vshrl.u32 %v1994, 16
      %v2073 = vrot.slane %v2071, 7
      %v2074 = vshll.u32 %v1994, 16
      %v2076 = vor.u32 %v2073, %v2074
      %v2078 = vshrl.u32 %v1995, 16
      %v2080 = vrot.slane %v2078, 7
      %v2081 = vshll.u32 %v1995, 16
      %v2083 = vor.u32 %v2080, %v2081
      %v2085 = vshrl.u32 %v1996, 16
      %v2087 = vrot.slane %v2085, 7
      %v2088 = vshll.u32 %v1996, 16
      %v2090 = vor.u32 %v2087, %v2088
      %v2092 = vshrl.u32 %v1997, 16
      %v2094 = vrot.slane %v2092, 7
      %v2095 = vshll.u32 %v1997, 16
      %v2097 = vor.u32 %v2094, %v2095
      %v2099 = vshrl.u32 %v1998, 16
      %v2101 = vrot.slane %v2099, 7
      %v2102 = vshll.u32 %v1998, 16
      %v2104 = vor.u32 %v2101, %v2102
      %v2106 = vshrl.u32 %v1999, 16
      %v2108 = vrot.slane %v2106, 7
      %v2109 = vshll.u32 %v1999, 16
      %v2111 = vor.u32 %v2108, %v2109
      %v2144 = vsel %vm860, 0, %v2006
      %v2145 = vsel %vm860, 0, %v2013
      %v2146 = vsel %vm860, 0, %v2020
      %v2147 = vsel %vm860, 0, %v2027
      %v2148 = vsel %vm860, 0, %v2034
      %v2149 = vsel %vm860, 0, %v2041
      %v2150 = vsel %vm860, 0, %v2048
      %v2151 = vsel %vm860, 0, %v2055
      %v2152 = vsel %vm860, 0, %v2062
      %v2153 = vsel %vm860, 0, %v2069
      %v2154 = vsel %vm860, 0, %v2076
      %v2155 = vsel %vm860, 0, %v2083
      %v2156 = vsel %vm860, 0, %v2090
      %v2157 = vsel %vm860, 0, %v2097
      %v2158 = vsel %vm860, 0, %v2104
      %v2159 = vsel %vm860, 0, %v2111
      %v2160 = vsel %vm860, %v2003, 0
      %v2161 = vsel %vm860, %v2010, 0
      %v2162 = vsel %vm860, %v2017, 0
      %v2163 = vsel %vm860, %v2024, 0
      %v2164 = vsel %vm860, %v2031, 0
      %v2165 = vsel %vm860, %v2038, 0
      %v2166 = vsel %vm860, %v2045, 0
      %v2167 = vsel %vm860, %v2052, 0
      %v2168 = vsel %vm860, %v2059, 0
      %v2169 = vsel %vm860, %v2066, 0
      %v2170 = vsel %vm860, %v2073, 0
      %v2171 = vsel %vm860, %v2080, 0
      %v2172 = vsel %vm860, %v2087, 0
      %v2173 = vsel %vm860, %v2094, 0
      %v2174 = vsel %vm860, %v2101, 0
      %v2175 = vsel %vm860, %v2108, 0
      %v2177 = vshrl.u32 %v2144, 16
      %v2179 = vshll.u32 %v2144, 16
      %v2181 = vrot.slane %v2179, 1
      %v2182 = vor.u32 %v2177, %v2181
      %v2184 = vshll.u32 %v2160, 16
      %v2186 = vrot.slane %v2184, 1
      %v2187 = vsel %vm895, %v2182, %v2186
      %v2189 = vshrl.u32 %v2145, 16
      %v2191 = vshll.u32 %v2145, 16
      %v2193 = vrot.slane %v2191, 1
      %v2194 = vor.u32 %v2189, %v2193
      %v2196 = vshll.u32 %v2161, 16
      %v2198 = vrot.slane %v2196, 1
      %v2199 = vsel %vm895, %v2194, %v2198
      %v2201 = vshrl.u32 %v2146, 16
      %v2203 = vshll.u32 %v2146, 16
      %v2205 = vrot.slane %v2203, 1
      %v2206 = vor.u32 %v2201, %v2205
      %v2208 = vshll.u32 %v2162, 16
      %v2210 = vrot.slane %v2208, 1
      %v2211 = vsel %vm895, %v2206, %v2210
      %v2213 = vshrl.u32 %v2147, 16
      %v2215 = vshll.u32 %v2147, 16
      %v2217 = vrot.slane %v2215, 1
      %v2218 = vor.u32 %v2213, %v2217
      %v2220 = vshll.u32 %v2163, 16
      %v2222 = vrot.slane %v2220, 1
      %v2223 = vsel %vm895, %v2218, %v2222
      %v2225 = vshrl.u32 %v2148, 16
      %v2227 = vshll.u32 %v2148, 16
      %v2229 = vrot.slane %v2227, 1
      %v2230 = vor.u32 %v2225, %v2229
      %v2232 = vshll.u32 %v2164, 16
      %v2234 = vrot.slane %v2232, 1
      %v2235 = vsel %vm895, %v2230, %v2234
      %v2237 = vshrl.u32 %v2149, 16
      %v2239 = vshll.u32 %v2149, 16
      %v2241 = vrot.slane %v2239, 1
      %v2242 = vor.u32 %v2237, %v2241
      %v2244 = vshll.u32 %v2165, 16
      %v2246 = vrot.slane %v2244, 1
      %v2247 = vsel %vm895, %v2242, %v2246
      %v2249 = vshrl.u32 %v2150, 16
      %v2251 = vshll.u32 %v2150, 16
      %v2253 = vrot.slane %v2251, 1
      %v2254 = vor.u32 %v2249, %v2253
      %v2256 = vshll.u32 %v2166, 16
      %v2258 = vrot.slane %v2256, 1
      %v2259 = vsel %vm895, %v2254, %v2258
      %v2261 = vshrl.u32 %v2151, 16
      %v2263 = vshll.u32 %v2151, 16
      %v2265 = vrot.slane %v2263, 1
      %v2266 = vor.u32 %v2261, %v2265
      %v2268 = vshll.u32 %v2167, 16
      %v2270 = vrot.slane %v2268, 1
      %v2271 = vsel %vm895, %v2266, %v2270
      %v2273 = vshrl.u32 %v2152, 16
      %v2275 = vshll.u32 %v2152, 16
      %v2277 = vrot.slane %v2275, 1
      %v2278 = vor.u32 %v2273, %v2277
      %v2280 = vshll.u32 %v2168, 16
      %v2282 = vrot.slane %v2280, 1
      %v2283 = vsel %vm895, %v2278, %v2282
      %v2285 = vshrl.u32 %v2153, 16
      %v2287 = vshll.u32 %v2153, 16
      %v2289 = vrot.slane %v2287, 1
      %v2290 = vor.u32 %v2285, %v2289
      %v2292 = vshll.u32 %v2169, 16
      %v2294 = vrot.slane %v2292, 1
      %v2295 = vsel %vm895, %v2290, %v2294
      %v2297 = vshrl.u32 %v2154, 16
      %v2299 = vshll.u32 %v2154, 16
      %v2301 = vrot.slane %v2299, 1
      %v2302 = vor.u32 %v2297, %v2301
      %v2304 = vshll.u32 %v2170, 16
      %v2306 = vrot.slane %v2304, 1
      %v2307 = vsel %vm895, %v2302, %v2306
      %v2309 = vshrl.u32 %v2155, 16
      %v2311 = vshll.u32 %v2155, 16
      %v2313 = vrot.slane %v2311, 1
      %v2314 = vor.u32 %v2309, %v2313
      %v2316 = vshll.u32 %v2171, 16
      %v2318 = vrot.slane %v2316, 1
      %v2319 = vsel %vm895, %v2314, %v2318
      %v2321 = vshrl.u32 %v2156, 16
      %v2323 = vshll.u32 %v2156, 16
      %v2325 = vrot.slane %v2323, 1
      %v2326 = vor.u32 %v2321, %v2325
      %v2328 = vshll.u32 %v2172, 16
      %v2330 = vrot.slane %v2328, 1
      %v2331 = vsel %vm895, %v2326, %v2330
      %v2333 = vshrl.u32 %v2157, 16
      %v2335 = vshll.u32 %v2157, 16
      %v2337 = vrot.slane %v2335, 1
      %v2338 = vor.u32 %v2333, %v2337
      %v2340 = vshll.u32 %v2173, 16
      %v2342 = vrot.slane %v2340, 1
      %v2343 = vsel %vm895, %v2338, %v2342
      %v2345 = vshrl.u32 %v2158, 16
      %v2347 = vshll.u32 %v2158, 16
      %v2349 = vrot.slane %v2347, 1
      %v2350 = vor.u32 %v2345, %v2349
      %v2352 = vshll.u32 %v2174, 16
      %v2354 = vrot.slane %v2352, 1
      %v2355 = vsel %vm895, %v2350, %v2354
      %2356 = vrot.lane.b32.xlu0 %v907, 32
      %v2357 = vpop.permute.xlu0 %2356
      %2358 = vrot.lane.b32.xlu0 %v2187, 32
      %v2359 = vpop.permute.xlu0 %2358
      %2360 = vrot.lane.b32.xlu0 %v2199, 32
      %v2361 = vpop.permute.xlu0 %2360
      %2362 = vrot.lane.b32.xlu0 %v2211, 32
      %v2363 = vpop.permute.xlu0 %2362
      %2364 = vrot.lane.b32.xlu0 %v2223, 32
      %v2365 = vpop.permute.xlu0 %2364
      %2366 = vrot.lane.b32.xlu0 %v2235, 32
      %v2367 = vpop.permute.xlu0 %2366
      %2368 = vrot.lane.b32.xlu0 %v2247, 32
      %v2369 = vpop.permute.xlu0 %2368
      %2370 = vrot.lane.b32.xlu0 %v2259, 32
      %v2371 = vpop.permute.xlu0 %2370
      %2372 = vrot.lane.b32.xlu0 %v2271, 32
      %v2373 = vpop.permute.xlu0 %2372
      %2374 = vrot.lane.b32.xlu0 %v2283, 32
      %v2375 = vpop.permute.xlu0 %2374
      %2376 = vrot.lane.b32.xlu0 %v2295, 32
      %v2377 = vpop.permute.xlu0 %2376
      %2378 = vrot.lane.b32.xlu0 %v2307, 32
      %v2379 = vpop.permute.xlu0 %2378
      %2380 = vrot.lane.b32.xlu0 %v2319, 32
      %v2381 = vpop.permute.xlu0 %2380
      %2382 = vrot.lane.b32.xlu0 %v2331, 32
      %v2383 = vpop.permute.xlu0 %2382
      %2384 = vrot.lane.b32.xlu0 %v2343, 32
      %v2385 = vpop.permute.xlu0 %2384
      %2386 = vrot.lane.b32.xlu0 %v2355, 32
      %v2387 = vpop.permute.xlu0 %2386
      %v2418 = vrot.slane %v2144, 1
      %v2419 = vrot.slane %v2160, 1
      %v2420 = vsel %vm1152, %v2418, %v2419
      %v2421 = vrot.slane %v2145, 1
      %v2422 = vrot.slane %v2161, 1
      %v2423 = vsel %vm1152, %v2421, %v2422
      %v2424 = vrot.slane %v2146, 1
      %v2425 = vrot.slane %v2162, 1
      %v2426 = vsel %vm1152, %v2424, %v2425
      %v2427 = vrot.slane %v2147, 1
      %v2428 = vrot.slane %v2163, 1
      %v2429 = vsel %vm1152, %v2427, %v2428
      %v2430 = vrot.slane %v2148, 1
      %v2431 = vrot.slane %v2164, 1
      %v2432 = vsel %vm1152, %v2430, %v2431
      %v2433 = vrot.slane %v2149, 1
      %v2434 = vrot.slane %v2165, 1
      %v2435 = vsel %vm1152, %v2433, %v2434
      %v2436 = vrot.slane %v2150, 1
      %v2437 = vrot.slane %v2166, 1
      %v2438 = vsel %vm1152, %v2436, %v2437
      %v2439 = vrot.slane %v2151, 1
      %v2440 = vrot.slane %v2167, 1
      %v2441 = vsel %vm1152, %v2439, %v2440
      %v2442 = vrot.slane %v2152, 1
      %v2443 = vrot.slane %v2168, 1
      %v2444 = vsel %vm1152, %v2442, %v2443
      %v2445 = vrot.slane %v2153, 1
      %v2446 = vrot.slane %v2169, 1
      %v2447 = vsel %vm1152, %v2445, %v2446
      %v2448 = vrot.slane %v2154, 1
      %v2449 = vrot.slane %v2170, 1
      %v2450 = vsel %vm1152, %v2448, %v2449
      %v2451 = vrot.slane %v2155, 1
      %v2452 = vrot.slane %v2171, 1
      %v2453 = vsel %vm1152, %v2451, %v2452
      %v2454 = vrot.slane %v2156, 1
      %v2455 = vrot.slane %v2172, 1
      %v2456 = vsel %vm1152, %v2454, %v2455
      %v2457 = vrot.slane %v2157, 1
      %v2458 = vrot.slane %v2173, 1
      %v2459 = vsel %vm1152, %v2457, %v2458
      %v2460 = vrot.slane %v2158, 1
      %v2461 = vrot.slane %v2174, 1
      %v2462 = vsel %vm1152, %v2460, %v2461
      %2463 = vrot.lane.b32.xlu0 %v1155, 64
      %v2464 = vpop.permute.xlu0 %2463
      %2465 = vrot.lane.b32.xlu0 %v2420, 64
      %v2466 = vpop.permute.xlu0 %2465
      %2467 = vrot.lane.b32.xlu0 %v2423, 64
      %v2468 = vpop.permute.xlu0 %2467
      %2469 = vrot.lane.b32.xlu0 %v2426, 64
      %v2470 = vpop.permute.xlu0 %2469
      %2471 = vrot.lane.b32.xlu0 %v2429, 64
      %v2472 = vpop.permute.xlu0 %2471
      %2473 = vrot.lane.b32.xlu0 %v2432, 64
      %v2474 = vpop.permute.xlu0 %2473
      %2475 = vrot.lane.b32.xlu0 %v2435, 64
      %v2476 = vpop.permute.xlu0 %2475
      %2477 = vrot.lane.b32.xlu0 %v2438, 64
      %v2478 = vpop.permute.xlu0 %2477
      %2479 = vrot.lane.b32.xlu0 %v2441, 64
      %v2480 = vpop.permute.xlu0 %2479
      %2481 = vrot.lane.b32.xlu0 %v2444, 64
      %v2482 = vpop.permute.xlu0 %2481
      %2483 = vrot.lane.b32.xlu0 %v2447, 64
      %v2484 = vpop.permute.xlu0 %2483
      %2485 = vrot.lane.b32.xlu0 %v2450, 64
      %v2486 = vpop.permute.xlu0 %2485
      %2487 = vrot.lane.b32.xlu0 %v2453, 64
      %v2488 = vpop.permute.xlu0 %2487
      %2489 = vrot.lane.b32.xlu0 %v2456, 64
      %v2490 = vpop.permute.xlu0 %2489
      %2491 = vrot.lane.b32.xlu0 %v2459, 64
      %v2492 = vpop.permute.xlu0 %2491
      %2493 = vrot.lane.b32.xlu0 %v2462, 64
      %v2494 = vpop.permute.xlu0 %2493
      %2496 = vrot.lane.b32.xlu0 %v2144, 96
      %v2497 = vpop.permute.xlu0 %2496
      %2498 = vrot.lane.b32.xlu0 %v2145, 96
      %v2499 = vpop.permute.xlu0 %2498
      %2500 = vrot.lane.b32.xlu0 %v2146, 96
      %v2501 = vpop.permute.xlu0 %2500
      %2502 = vrot.lane.b32.xlu0 %v2147, 96
      %v2503 = vpop.permute.xlu0 %2502
      %2504 = vrot.lane.b32.xlu0 %v2148, 96
      %v2505 = vpop.permute.xlu0 %2504
      %2506 = vrot.lane.b32.xlu0 %v2149, 96
      %v2507 = vpop.permute.xlu0 %2506
      %2508 = vrot.lane.b32.xlu0 %v2150, 96
      %v2509 = vpop.permute.xlu0 %2508
      %2510 = vrot.lane.b32.xlu0 %v2151, 96
      %v2511 = vpop.permute.xlu0 %2510
      %2512 = vrot.lane.b32.xlu0 %v2152, 96
      %v2513 = vpop.permute.xlu0 %2512
      %2514 = vrot.lane.b32.xlu0 %v2153, 96
      %v2515 = vpop.permute.xlu0 %2514
      %2516 = vrot.lane.b32.xlu0 %v2154, 96
      %v2517 = vpop.permute.xlu0 %2516
      %2518 = vrot.lane.b32.xlu0 %v2155, 96
      %v2519 = vpop.permute.xlu0 %2518
      %2520 = vrot.lane.b32.xlu0 %v2156, 96
      %v2521 = vpop.permute.xlu0 %2520
      %2522 = vrot.lane.b32.xlu0 %v2157, 96
      %v2523 = vpop.permute.xlu0 %2522
      %2524 = vrot.lane.b32.xlu0 %v2158, 96
      %v2525 = vpop.permute.xlu0 %2524
      %2526 = vrot.lane.b32.xlu0 %v2159, 96
      %v2527 = vpop.permute.xlu0 %2526
      %v2529 = vshrl.u32 %v2159, 16
      %v2531 = vshll.u32 %v2159, 16
      %v2533 = vrot.slane %v2531, 1
      %v2534 = vor.u32 %v2529, %v2533
      %v2536 = vshll.u32 %v2175, 16
      %v2538 = vrot.slane %v2536, 1
      %v2539 = vsel %vm895, %v2534, %v2538
      %v2541 = vrot.slane %v2159, 1
      %v2542 = vrot.slane %v2175, 1
      %v2543 = vsel %vm1152, %v2541, %v2542
      %2544 = vrot.lane.b32.xlu0 %v2420, 32
      %v2545 = vpop.permute.xlu0 %2544
      %2546 = vrot.lane.b32.xlu0 %v2423, 32
      %v2547 = vpop.permute.xlu0 %2546
      %2548 = vrot.lane.b32.xlu0 %v2426, 32
      %v2549 = vpop.permute.xlu0 %2548
      %2550 = vrot.lane.b32.xlu0 %v2429, 32
      %v2551 = vpop.permute.xlu0 %2550
      %2552 = vrot.lane.b32.xlu0 %v2432, 32
      %v2553 = vpop.permute.xlu0 %2552
      %2554 = vrot.lane.b32.xlu0 %v2435, 32
      %v2555 = vpop.permute.xlu0 %2554
      %2556 = vrot.lane.b32.xlu0 %v2438, 32
      %v2557 = vpop.permute.xlu0 %2556
      %2558 = vrot.lane.b32.xlu0 %v2441, 32
      %v2559 = vpop.permute.xlu0 %2558
      %2560 = vrot.lane.b32.xlu0 %v2444, 32
      %v2561 = vpop.permute.xlu0 %2560
      %2562 = vrot.lane.b32.xlu0 %v2447, 32
      %v2563 = vpop.permute.xlu0 %2562
      %2564 = vrot.lane.b32.xlu0 %v2450, 32
      %v2565 = vpop.permute.xlu0 %2564
      %2566 = vrot.lane.b32.xlu0 %v2453, 32
      %v2567 = vpop.permute.xlu0 %2566
      %2568 = vrot.lane.b32.xlu0 %v2456, 32
      %v2569 = vpop.permute.xlu0 %2568
      %2570 = vrot.lane.b32.xlu0 %v2459, 32
      %v2571 = vpop.permute.xlu0 %2570
      %2572 = vrot.lane.b32.xlu0 %v2462, 32
      %v2573 = vpop.permute.xlu0 %2572
      %2574 = vrot.lane.b32.xlu0 %v2543, 32
      %v2575 = vpop.permute.xlu0 %2574
      %2576 = vrot.lane.b32.xlu0 %v2145, 64
      %v2577 = vpop.permute.xlu0 %2576
      %2578 = vrot.lane.b32.xlu0 %v2146, 64
      %v2579 = vpop.permute.xlu0 %2578
      %2580 = vrot.lane.b32.xlu0 %v2147, 64
      %v2581 = vpop.permute.xlu0 %2580
      %2582 = vrot.lane.b32.xlu0 %v2148, 64
      %v2583 = vpop.permute.xlu0 %2582
      %2584 = vrot.lane.b32.xlu0 %v2149, 64
      %v2585 = vpop.permute.xlu0 %2584
      %2586 = vrot.lane.b32.xlu0 %v2150, 64
      %v2587 = vpop.permute.xlu0 %2586
      %2588 = vrot.lane.b32.xlu0 %v2151, 64
      %v2589 = vpop.permute.xlu0 %2588
      %2590 = vrot.lane.b32.xlu0 %v2152, 64
      %v2591 = vpop.permute.xlu0 %2590
      %2592 = vrot.lane.b32.xlu0 %v2153, 64
      %v2593 = vpop.permute.xlu0 %2592
      %2594 = vrot.lane.b32.xlu0 %v2154, 64
      %v2595 = vpop.permute.xlu0 %2594
      %2596 = vrot.lane.b32.xlu0 %v2155, 64
      %v2597 = vpop.permute.xlu0 %2596
      %2598 = vrot.lane.b32.xlu0 %v2156, 64
      %v2599 = vpop.permute.xlu0 %2598
      %2600 = vrot.lane.b32.xlu0 %v2157, 64
      %v2601 = vpop.permute.xlu0 %2600
      %2602 = vrot.lane.b32.xlu0 %v2158, 64
      %v2603 = vpop.permute.xlu0 %2602
      %2604 = vrot.lane.b32.xlu0 %v2159, 64
      %v2605 = vpop.permute.xlu0 %2604
      %2606 = vrot.lane.b32.xlu0 %v861, 64
      %v2607 = vpop.permute.xlu0 %2606
      %2608 = vrot.lane.b32.xlu0 %v2199, 96
      %v2609 = vpop.permute.xlu0 %2608
      %2610 = vrot.lane.b32.xlu0 %v2211, 96
      %v2611 = vpop.permute.xlu0 %2610
      %2612 = vrot.lane.b32.xlu0 %v2223, 96
      %v2613 = vpop.permute.xlu0 %2612
      %2614 = vrot.lane.b32.xlu0 %v2235, 96
      %v2615 = vpop.permute.xlu0 %2614
      %2616 = vrot.lane.b32.xlu0 %v2247, 96
      %v2617 = vpop.permute.xlu0 %2616
      %2618 = vrot.lane.b32.xlu0 %v2259, 96
      %v2619 = vpop.permute.xlu0 %2618
      %2620 = vrot.lane.b32.xlu0 %v2271, 96
      %v2621 = vpop.permute.xlu0 %2620
      %2622 = vrot.lane.b32.xlu0 %v2283, 96
      %v2623 = vpop.permute.xlu0 %2622
      %2624 = vrot.lane.b32.xlu0 %v2295, 96
      %v2625 = vpop.permute.xlu0 %2624
      %2626 = vrot.lane.b32.xlu0 %v2307, 96
      %v2627 = vpop.permute.xlu0 %2626
      %2628 = vrot.lane.b32.xlu0 %v2319, 96
      %v2629 = vpop.permute.xlu0 %2628
      %2630 = vrot.lane.b32.xlu0 %v2331, 96
      %v2631 = vpop.permute.xlu0 %2630
      %2632 = vrot.lane.b32.xlu0 %v2343, 96
      %v2633 = vpop.permute.xlu0 %2632
      %2634 = vrot.lane.b32.xlu0 %v2355, 96
      %v2635 = vpop.permute.xlu0 %2634
      %2636 = vrot.lane.b32.xlu0 %v2539, 96
      %v2637 = vpop.permute.xlu0 %2636
      %2638 = vrot.lane.b32.xlu0 %v907, 96
      %v2639 = vpop.permute.xlu0 %2638
      %v2641 = vsel %vm1673, %v861, %v2357
      %v2643 = vsel %vm1673, %v2144, %v2359
      %v2645 = vsel %vm1673, %v2145, %v2361
      %v2647 = vsel %vm1673, %v2146, %v2363
      %v2649 = vsel %vm1673, %v2147, %v2365
      %v2651 = vsel %vm1673, %v2148, %v2367
      %v2653 = vsel %vm1673, %v2149, %v2369
      %v2655 = vsel %vm1673, %v2150, %v2371
      %v2657 = vsel %vm1673, %v2151, %v2373
      %v2659 = vsel %vm1673, %v2152, %v2375
      %v2661 = vsel %vm1673, %v2153, %v2377
      %v2663 = vsel %vm1673, %v2154, %v2379
      %v2665 = vsel %vm1673, %v2155, %v2381
      %v2667 = vsel %vm1673, %v2156, %v2383
      %v2669 = vsel %vm1673, %v2157, %v2385
      %v2671 = vsel %vm1673, %v2158, %v2387
      %vm2672 = vcmask 523264
      %v2674 = vsel %vm2672, %v2641, %v2464
      %v2676 = vsel %vm2672, %v2643, %v2466
      %v2678 = vsel %vm2672, %v2645, %v2468
      %v2680 = vsel %vm2672, %v2647, %v2470
      %v2682 = vsel %vm2672, %v2649, %v2472
      %v2684 = vsel %vm2672, %v2651, %v2474
      %v2686 = vsel %vm2672, %v2653, %v2476
      %v2688 = vsel %vm2672, %v2655, %v2478
      %v2690 = vsel %vm2672, %v2657, %v2480
      %v2692 = vsel %vm2672, %v2659, %v2482
      %v2694 = vsel %vm2672, %v2661, %v2484
      %v2696 = vsel %vm2672, %v2663, %v2486
      %v2698 = vsel %vm2672, %v2665, %v2488
      %v2700 = vsel %vm2672, %v2667, %v2490
      %v2702 = vsel %vm2672, %v2669, %v2492
      %v2704 = vsel %vm2672, %v2671, %v2494
      %vm2705 = vcmask 785408
      %v2707 = vsel %vm2705, %v2674, %v2497
      %v2710 = vsel %vm2705, %v2676, %v2499
      %v2713 = vsel %vm2705, %v2678, %v2501
      %v2716 = vsel %vm2705, %v2680, %v2503
      %v2719 = vsel %vm2705, %v2682, %v2505
      %v2722 = vsel %vm2705, %v2684, %v2507
      %v2725 = vsel %vm2705, %v2686, %v2509
      %v2728 = vsel %vm2705, %v2688, %v2511
      %v2731 = vsel %vm2705, %v2690, %v2513
      %v2734 = vsel %vm2705, %v2692, %v2515
      %v2737 = vsel %vm2705, %v2694, %v2517
      %v2740 = vsel %vm2705, %v2696, %v2519
      %v2743 = vsel %vm2705, %v2698, %v2521
      %v2746 = vsel %vm2705, %v2700, %v2523
      %v2749 = vsel %vm2705, %v2702, %v2525
      %v2752 = vsel %vm2705, %v2704, %v2527
      %v2756 = vsel %vm1673, %v2187, %v2545
      %v2759 = vsel %vm1673, %v2199, %v2547
      %v2762 = vsel %vm1673, %v2211, %v2549
      %v2765 = vsel %vm1673, %v2223, %v2551
      %v2768 = vsel %vm1673, %v2235, %v2553
      %v2771 = vsel %vm1673, %v2247, %v2555
      %v2774 = vsel %vm1673, %v2259, %v2557
      %v2777 = vsel %vm1673, %v2271, %v2559
      %v2780 = vsel %vm1673, %v2283, %v2561
      %v2783 = vsel %vm1673, %v2295, %v2563
      %v2786 = vsel %vm1673, %v2307, %v2565
      %v2789 = vsel %vm1673, %v2319, %v2567
      %v2792 = vsel %vm1673, %v2331, %v2569
      %v2795 = vsel %vm1673, %v2343, %v2571
      %v2798 = vsel %vm1673, %v2355, %v2573
      %v2801 = vsel %vm1673, %v2539, %v2575
      %v2803 = vsel %vm2672, %v2756, %v2577
      %v2805 = vsel %vm2672, %v2759, %v2579
      %v2807 = vsel %vm2672, %v2762, %v2581
      %v2809 = vsel %vm2672, %v2765, %v2583
      %v2811 = vsel %vm2672, %v2768, %v2585
      %v2813 = vsel %vm2672, %v2771, %v2587
      %v2815 = vsel %vm2672, %v2774, %v2589
      %v2817 = vsel %vm2672, %v2777, %v2591
      %v2819 = vsel %vm2672, %v2780, %v2593
      %v2821 = vsel %vm2672, %v2783, %v2595
      %v2823 = vsel %vm2672, %v2786, %v2597
      %v2825 = vsel %vm2672, %v2789, %v2599
      %v2827 = vsel %vm2672, %v2792, %v2601
      %v2829 = vsel %vm2672, %v2795, %v2603
      %v2831 = vsel %vm2672, %v2798, %v2605
      %v2833 = vsel %vm2672, %v2801, %v2607
      %v2835 = vsel %vm2705, %v2803, %v2609
      %v2838 = vsel %vm2705, %v2805, %v2611
      %v2841 = vsel %vm2705, %v2807, %v2613
      %v2844 = vsel %vm2705, %v2809, %v2615
      %v2847 = vsel %vm2705, %v2811, %v2617
      %v2850 = vsel %vm2705, %v2813, %v2619
      %v2853 = vsel %vm2705, %v2815, %v2621
      %v2856 = vsel %vm2705, %v2817, %v2623
      %v2859 = vsel %vm2705, %v2819, %v2625
      %v2862 = vsel %vm2705, %v2821, %v2627
      %v2865 = vsel %vm2705, %v2823, %v2629
      %v2868 = vsel %vm2705, %v2825, %v2631
      %v2871 = vsel %vm2705, %v2827, %v2633
      %v2874 = vsel %vm2705, %v2829, %v2635
      %v2877 = vsel %vm2705, %v2831, %v2637
      %v2880 = vsel %vm2705, %v2833, %v2639
      %v2882 = vld [vmem:[%s4] sm:$0xf]
      %v2883 = vld [vmem:[%s4 + $0x4] sm:$0xf]
      %v2884 = vld [vmem:[%s4 + $0x8] sm:$0xf]
      %v2885 = vld [vmem:[%s4 + $0xc] sm:$0xf]
      %v2886 = vld [vmem:[%s4 + $0x10] sm:$0xf]
      %v2887 = vld [vmem:[%s4 + $0x14] sm:$0xf]
      %v2888 = vld [vmem:[%s4 + $0x18] sm:$0xf]
      %v2889 = vld [vmem:[%s4 + $0x1c] sm:$0xf]
      %v2890 = vld [vmem:[%s4 + $0x20] sm:$0xf]
      %v2891 = vld [vmem:[%s4 + $0x24] sm:$0xf]
      %v2892 = vld [vmem:[%s4 + $0x28] sm:$0xf]
      %v2893 = vld [vmem:[%s4 + $0x2c] sm:$0xf]
      %v2894 = vld [vmem:[%s4 + $0x30] sm:$0xf]
      %v2895 = vld [vmem:[%s4 + $0x34] sm:$0xf]
      %v2896 = vld [vmem:[%s4 + $0x38] sm:$0xf]
      %v2897 = vld [vmem:[%s4 + $0x3c] sm:$0xf]
      %v2898 = vld [vmem:[%s4 + $0x40] sm:$0xf]
      %v2899 = vld [vmem:[%s4 + $0x44] sm:$0xf]
      %v2900 = vld [vmem:[%s4 + $0x48] sm:$0xf]
      %v2901 = vld [vmem:[%s4 + $0x4c] sm:$0xf]
      %v2902 = vld [vmem:[%s4 + $0x50] sm:$0xf]
      %v2903 = vld [vmem:[%s4 + $0x54] sm:$0xf]
      %v2904 = vld [vmem:[%s4 + $0x58] sm:$0xf]
      %v2905 = vld [vmem:[%s4 + $0x5c] sm:$0xf]
      %v2906 = vld [vmem:[%s4 + $0x60] sm:$0xf]
      %v2907 = vld [vmem:[%s4 + $0x64] sm:$0xf]
      %v2908 = vld [vmem:[%s4 + $0x68] sm:$0xf]
      %v2909 = vld [vmem:[%s4 + $0x6c] sm:$0xf]
      %v2910 = vld [vmem:[%s4 + $0x70] sm:$0xf]
      %v2911 = vld [vmem:[%s4 + $0x74] sm:$0xf]
      %v2912 = vld [vmem:[%s4 + $0x78] sm:$0xf]
      %v2913 = vld [vmem:[%s4 + $0x7c] sm:$0xf]
      %v2914 = vld [vmem:[%s4 + $0x80] sm:$0xf]
      %v2915 = vld [vmem:[%s4 + $0x84] sm:$0xf]
      %v2916 = vld [vmem:[%s4 + $0x88] sm:$0xf]
      %v2917 = vld [vmem:[%s4 + $0x8c] sm:$0xf]
      %v2918 = vld [vmem:[%s5] sm:$0x1]
      %v2920 = vperm.slane %v2918, 0
      %v2958 = vunpack.c.l.b16 %v2882
      %v2959 = vunpack.c.l.b16 %v2883
      %v2960 = vunpack.c.l.b16 %v2884
      %v2961 = vunpack.c.l.b16 %v2885
      %v2962 = vunpack.c.l.b16 %v2886
      %v2963 = vunpack.c.l.b16 %v2887
      %v2964 = vunpack.c.l.b16 %v2888
      %v2965 = vunpack.c.l.b16 %v2889
      %v2966 = vunpack.c.l.b16 %v2890
      %v2967 = vunpack.c.l.b16 %v2891
      %v2968 = vunpack.c.l.b16 %v2892
      %v2969 = vunpack.c.l.b16 %v2893
      %v2970 = vunpack.c.l.b16 %v2894
      %v2971 = vunpack.c.l.b16 %v2895
      %v2972 = vunpack.c.l.b16 %v2896
      %v2973 = vunpack.c.l.b16 %v2897
      %v2974 = vunpack.c.l.b16 %v2898
      %v2975 = vunpack.c.l.b16 %v2899
      %v2976 = vunpack.c.l.b16 %v2900
      %v2977 = vunpack.c.l.b16 %v2901
      %v2978 = vunpack.c.l.b16 %v2902
      %v2979 = vunpack.c.l.b16 %v2903
      %v2980 = vunpack.c.l.b16 %v2904
      %v2981 = vunpack.c.l.b16 %v2905
      %v2982 = vunpack.c.l.b16 %v2906
      %v2983 = vunpack.c.l.b16 %v2907
      %v2984 = vunpack.c.l.b16 %v2908
      %v2985 = vunpack.c.l.b16 %v2909
      %v2986 = vunpack.c.l.b16 %v2910
      %v2987 = vunpack.c.l.b16 %v2911
      %v2988 = vunpack.c.l.b16 %v2912
      %v2989 = vunpack.c.l.b16 %v2913
      %v2990 = vunpack.c.l.b16 %v2914
      %v2991 = vunpack.c.l.b16 %v2915
      %v2992 = vunpack.c.l.b16 %v2916
      %v2993 = vunpack.c.l.b16 %v2917
      %v2994 = vpack.c.b16 %v2959, %v2958
      %v2995 = vpack.c.b16 %v2961, %v2960
      %v2996 = vpack.c.b16 %v2963, %v2962
      %v2997 = vpack.c.b16 %v2965, %v2964
      %v2998 = vpack.c.b16 %v2967, %v2966
      %v2999 = vpack.c.b16 %v2969, %v2968
      %v3000 = vpack.c.b16 %v2971, %v2970
      %v3001 = vpack.c.b16 %v2973, %v2972
      %v3002 = vpack.c.b16 %v2975, %v2974
      %v3003 = vpack.c.b16 %v2977, %v2976
      %v3004 = vpack.c.b16 %v2979, %v2978
      %v3005 = vpack.c.b16 %v2981, %v2980
      %v3006 = vpack.c.b16 %v2983, %v2982
      %v3007 = vpack.c.b16 %v2985, %v2984
      %v3008 = vpack.c.b16 %v2987, %v2986
      %v3009 = vpack.c.b16 %v2989, %v2988
      %v3010 = vpack.c.b16 %v2991, %v2990
      %v3011 = vpack.c.b16 %v2993, %v2992
      %v3031 = vsel %vm1673, %v2423, 0
      %v3034 = vsel %vm1673, %v2426, 0
      %v3037 = vsel %vm1673, %v2429, 0
      %v3040 = vsel %vm1673, %v2432, 0
      %v3043 = vsel %vm1673, %v2435, 0
      %v3046 = vsel %vm1673, %v2438, 0
      %v3049 = vsel %vm1673, %v2441, 0
      %v3052 = vsel %vm1673, %v2444, 0
      %v3055 = vsel %vm1673, %v2447, 0
      %v3058 = vsel %vm1673, %v2450, 0
      %v3061 = vsel %vm1673, %v2453, 0
      %v3064 = vsel %vm1673, %v2456, 0
      %v3067 = vsel %vm1673, %v2459, 0
      %v3070 = vsel %vm1673, %v2462, 0
      %v3073 = vsel %vm1673, %v2543, 0
      %v3076 = vsel %vm1673, %v1155, 0
      %3078 = vmatpush.bf16.msra.mxu0 %v3001
      %3079 = vmatpush.bf16.msra.mxu0 %v3000
      %3080 = vmatpush.bf16.msra.mxu0 %v2999
      %3081 = vmatpush.bf16.msra.mxu0 %v2998
      %3082 = vmatpush.bf16.msra.mxu0 %v2997
      %3083 = vmatpush.bf16.msra.mxu0 %v2996
      %3084 = vmatpush.bf16.msra.mxu0 %v2995
      %3085 = vmatpush.bf16.msra.mxu0 %v2994
      %3086 = vmatmul.bf16.gmra.mxu0 %v2707
      %v3087 = vpop.f32.mrf.mxu0
      %v3088 = vadd.f32 %v2920, %v3087
      %v3089 = vpop.f32.mrf.mxu0
      %v3090 = vadd.f32 %v2920, %v3089
      %3091 = vmatmul.bf16.gmra.mxu0 %v2710
      %v3092 = vpop.f32.mrf.mxu0
      %v3093 = vadd.f32 %v2920, %v3092
      %v3094 = vpop.f32.mrf.mxu0
      %v3095 = vadd.f32 %v2920, %v3094
      %3096 = vmatmul.bf16.gmra.mxu0 %v2713
      %v3097 = vpop.f32.mrf.mxu0
      %v3098 = vadd.f32 %v2920, %v3097
      %v3099 = vpop.f32.mrf.mxu0
      %v3100 = vadd.f32 %v2920, %v3099
      %3101 = vmatmul.bf16.gmra.mxu0 %v2716
      %v3102 = vpop.f32.mrf.mxu0
      %v3103 = vadd.f32 %v2920, %v3102
      %v3104 = vpop.f32.mrf.mxu0
      %v3105 = vadd.f32 %v2920, %v3104
      %3106 = vmatmul.bf16.gmra.mxu0 %v2719
      %v3107 = vpop.f32.mrf.mxu0
      %v3108 = vadd.f32 %v2920, %v3107
      %v3109 = vpop.f32.mrf.mxu0
      %v3110 = vadd.f32 %v2920, %v3109
      %3111 = vmatmul.bf16.gmra.mxu0 %v2722
      %v3112 = vpop.f32.mrf.mxu0
      %v3113 = vadd.f32 %v2920, %v3112
      %v3114 = vpop.f32.mrf.mxu0
      %v3115 = vadd.f32 %v2920, %v3114
      %3116 = vmatmul.bf16.gmra.mxu0 %v2725
      %v3117 = vpop.f32.mrf.mxu0
      %v3118 = vadd.f32 %v2920, %v3117
      %v3119 = vpop.f32.mrf.mxu0
      %v3120 = vadd.f32 %v2920, %v3119
      %3121 = vmatmul.bf16.gmra.mxu0 %v2728
      %v3122 = vpop.f32.mrf.mxu0
      %v3123 = vadd.f32 %v2920, %v3122
      %v3124 = vpop.f32.mrf.mxu0
      %v3125 = vadd.f32 %v2920, %v3124
      %3126 = vmatmul.bf16.gmra.mxu0 %v2731
      %v3127 = vpop.f32.mrf.mxu0
      %v3128 = vadd.f32 %v2920, %v3127
      %v3129 = vpop.f32.mrf.mxu0
      %v3130 = vadd.f32 %v2920, %v3129
      %3131 = vmatmul.bf16.gmra.mxu0 %v2734
      %v3132 = vpop.f32.mrf.mxu0
      %v3133 = vadd.f32 %v2920, %v3132
      %v3134 = vpop.f32.mrf.mxu0
      %v3135 = vadd.f32 %v2920, %v3134
      %3136 = vmatmul.bf16.gmra.mxu0 %v2737
      %v3137 = vpop.f32.mrf.mxu0
      %v3138 = vadd.f32 %v2920, %v3137
      %v3139 = vpop.f32.mrf.mxu0
      %v3140 = vadd.f32 %v2920, %v3139
      %3141 = vmatmul.bf16.gmra.mxu0 %v2740
      %v3142 = vpop.f32.mrf.mxu0
      %v3143 = vadd.f32 %v2920, %v3142
      %v3144 = vpop.f32.mrf.mxu0
      %v3145 = vadd.f32 %v2920, %v3144
      %3146 = vmatmul.bf16.gmra.mxu0 %v2743
      %v3147 = vpop.f32.mrf.mxu0
      %v3148 = vadd.f32 %v2920, %v3147
      %v3149 = vpop.f32.mrf.mxu0
      %v3150 = vadd.f32 %v2920, %v3149
      %3151 = vmatmul.bf16.gmra.mxu0 %v2746
      %v3152 = vpop.f32.mrf.mxu0
      %v3153 = vadd.f32 %v2920, %v3152
      %v3154 = vpop.f32.mrf.mxu0
      %v3155 = vadd.f32 %v2920, %v3154
      %3156 = vmatmul.bf16.gmra.mxu0 %v2749
      %v3157 = vpop.f32.mrf.mxu0
      %v3158 = vadd.f32 %v2920, %v3157
      %v3159 = vpop.f32.mrf.mxu0
      %v3160 = vadd.f32 %v2920, %v3159
      %3161 = vmatmul.bf16.gmra.mxu0 %v2752
      %v3162 = vpop.f32.mrf.mxu0
      %v3163 = vadd.f32 %v2920, %v3162
      %v3164 = vpop.f32.mrf.mxu0
      %v3165 = vadd.f32 %v2920, %v3164
      %3166 = vdwg.mxu0
      %3167 = vmatpush.bf16.msra.mxu0 %v3009
      %3168 = vmatpush.bf16.msra.mxu0 %v3008
      %3169 = vmatpush.bf16.msra.mxu0 %v3007
      %3170 = vmatpush.bf16.msra.mxu0 %v3006
      %3171 = vmatpush.bf16.msra.mxu0 %v3005
      %3172 = vmatpush.bf16.msra.mxu0 %v3004
      %3173 = vmatpush.bf16.msra.mxu0 %v3003
      %3174 = vmatpush.bf16.msra.mxu0 %v3002
      %3175 = vmatmul.bf16.gmra.mxu0 %v2835
      %v3176 = vpop.f32.mrf.mxu0
      %v3177 = vadd.f32 %v3088, %v3176
      %v3178 = vpop.f32.mrf.mxu0
      %v3179 = vadd.f32 %v3090, %v3178
      %3180 = vmatmul.bf16.gmra.mxu0 %v2838
      %v3181 = vpop.f32.mrf.mxu0
      %v3182 = vadd.f32 %v3093, %v3181
      %v3183 = vpop.f32.mrf.mxu0
      %v3184 = vadd.f32 %v3095, %v3183
      %3185 = vmatmul.bf16.gmra.mxu0 %v2841
      %v3186 = vpop.f32.mrf.mxu0
      %v3187 = vadd.f32 %v3098, %v3186
      %v3188 = vpop.f32.mrf.mxu0
      %v3189 = vadd.f32 %v3100, %v3188
      %3190 = vmatmul.bf16.gmra.mxu0 %v2844
      %v3191 = vpop.f32.mrf.mxu0
      %v3192 = vadd.f32 %v3103, %v3191
      %v3193 = vpop.f32.mrf.mxu0
      %v3194 = vadd.f32 %v3105, %v3193
      %3195 = vmatmul.bf16.gmra.mxu0 %v2847
      %v3196 = vpop.f32.mrf.mxu0
      %v3197 = vadd.f32 %v3108, %v3196
      %v3198 = vpop.f32.mrf.mxu0
      %v3199 = vadd.f32 %v3110, %v3198
      %3200 = vmatmul.bf16.gmra.mxu0 %v2850
      %v3201 = vpop.f32.mrf.mxu0
      %v3202 = vadd.f32 %v3113, %v3201
      %v3203 = vpop.f32.mrf.mxu0
      %v3204 = vadd.f32 %v3115, %v3203
      %3205 = vmatmul.bf16.gmra.mxu0 %v2853
      %v3206 = vpop.f32.mrf.mxu0
      %v3207 = vadd.f32 %v3118, %v3206
      %v3208 = vpop.f32.mrf.mxu0
      %v3209 = vadd.f32 %v3120, %v3208
      %3210 = vmatmul.bf16.gmra.mxu0 %v2856
      %v3211 = vpop.f32.mrf.mxu0
      %v3212 = vadd.f32 %v3123, %v3211
      %v3213 = vpop.f32.mrf.mxu0
      %v3214 = vadd.f32 %v3125, %v3213
      %3215 = vmatmul.bf16.gmra.mxu0 %v2859
      %v3216 = vpop.f32.mrf.mxu0
      %v3217 = vadd.f32 %v3128, %v3216
      %v3218 = vpop.f32.mrf.mxu0
      %v3219 = vadd.f32 %v3130, %v3218
      %3220 = vmatmul.bf16.gmra.mxu0 %v2862
      %v3221 = vpop.f32.mrf.mxu0
      %v3222 = vadd.f32 %v3133, %v3221
      %v3223 = vpop.f32.mrf.mxu0
      %v3224 = vadd.f32 %v3135, %v3223
      %3225 = vmatmul.bf16.gmra.mxu0 %v2865
      %v3226 = vpop.f32.mrf.mxu0
      %v3227 = vadd.f32 %v3138, %v3226
      %v3228 = vpop.f32.mrf.mxu0
      %v3229 = vadd.f32 %v3140, %v3228
      %3230 = vmatmul.bf16.gmra.mxu0 %v2868
      %v3231 = vpop.f32.mrf.mxu0
      %v3232 = vadd.f32 %v3143, %v3231
      %v3233 = vpop.f32.mrf.mxu0
      %v3234 = vadd.f32 %v3145, %v3233
      %3235 = vmatmul.bf16.gmra.mxu0 %v2871
      %v3236 = vpop.f32.mrf.mxu0
      %v3237 = vadd.f32 %v3148, %v3236
      %v3238 = vpop.f32.mrf.mxu0
      %v3239 = vadd.f32 %v3150, %v3238
      %3240 = vmatmul.bf16.gmra.mxu0 %v2874
      %v3241 = vpop.f32.mrf.mxu0
      %v3242 = vadd.f32 %v3153, %v3241
      %v3243 = vpop.f32.mrf.mxu0
      %v3244 = vadd.f32 %v3155, %v3243
      %3245 = vmatmul.bf16.gmra.mxu0 %v2877
      %v3246 = vpop.f32.mrf.mxu0
      %v3247 = vadd.f32 %v3158, %v3246
      %v3248 = vpop.f32.mrf.mxu0
      %v3249 = vadd.f32 %v3160, %v3248
      %3250 = vmatmul.bf16.gmra.mxu0 %v2880
      %v3251 = vpop.f32.mrf.mxu0
      %v3252 = vadd.f32 %v3163, %v3251
      %v3253 = vpop.f32.mrf.mxu0
      %v3254 = vadd.f32 %v3165, %v3253
      %3255 = vdwg.mxu0
      %3256 = vmatpush.bf16.msra.mxu0 0
      %3257 = vmatpush.bf16.msra.mxu0 0
      %3258 = vmatpush.bf16.msra.mxu0 0
      %3259 = vmatpush.bf16.msra.mxu0 0
      %3260 = vmatpush.bf16.msra.mxu0 0
      %3261 = vmatpush.bf16.msra.mxu0 0
      %3262 = vmatpush.bf16.msra.mxu0 %v3011
      %3263 = vmatpush.bf16.msra.mxu0 %v3010
      %3264 = vmatmul.bf16.gmra.mxu0 %v3031
      %v3265 = vpop.f32.mrf.mxu0
      %v3266 = vadd.f32 %v3177, %v3265
      %v3267 = vpop.f32.mrf.mxu0
      %v3268 = vadd.f32 %v3179, %v3267
      %3269 = vmatmul.bf16.gmra.mxu0 %v3034
      %v3270 = vpop.f32.mrf.mxu0
      %v3271 = vadd.f32 %v3182, %v3270
      %v3272 = vpop.f32.mrf.mxu0
      %v3273 = vadd.f32 %v3184, %v3272
      %3274 = vmatmul.bf16.gmra.mxu0 %v3037
      %v3275 = vpop.f32.mrf.mxu0
      %v3276 = vadd.f32 %v3187, %v3275
      %v3277 = vpop.f32.mrf.mxu0
      %v3278 = vadd.f32 %v3189, %v3277
      %3279 = vmatmul.bf16.gmra.mxu0 %v3040
      %v3280 = vpop.f32.mrf.mxu0
      %v3281 = vadd.f32 %v3192, %v3280
      %v3282 = vpop.f32.mrf.mxu0
      %v3283 = vadd.f32 %v3194, %v3282
      %3284 = vmatmul.bf16.gmra.mxu0 %v3043
      %v3285 = vpop.f32.mrf.mxu0
      %v3286 = vadd.f32 %v3197, %v3285
      %v3287 = vpop.f32.mrf.mxu0
      %v3288 = vadd.f32 %v3199, %v3287
      %3289 = vmatmul.bf16.gmra.mxu0 %v3046
      %v3290 = vpop.f32.mrf.mxu0
      %v3291 = vadd.f32 %v3202, %v3290
      %v3292 = vpop.f32.mrf.mxu0
      %v3293 = vadd.f32 %v3204, %v3292
      %3294 = vmatmul.bf16.gmra.mxu0 %v3049
      %v3295 = vpop.f32.mrf.mxu0
      %v3296 = vadd.f32 %v3207, %v3295
      %v3297 = vpop.f32.mrf.mxu0
      %v3298 = vadd.f32 %v3209, %v3297
      %3299 = vmatmul.bf16.gmra.mxu0 %v3052
      %v3300 = vpop.f32.mrf.mxu0
      %v3301 = vadd.f32 %v3212, %v3300
      %v3302 = vpop.f32.mrf.mxu0
      %v3303 = vadd.f32 %v3214, %v3302
      %3304 = vmatmul.bf16.gmra.mxu0 %v3055
      %v3305 = vpop.f32.mrf.mxu0
      %v3306 = vadd.f32 %v3217, %v3305
      %v3307 = vpop.f32.mrf.mxu0
      %v3308 = vadd.f32 %v3219, %v3307
      %3309 = vmatmul.bf16.gmra.mxu0 %v3058
      %v3310 = vpop.f32.mrf.mxu0
      %v3311 = vadd.f32 %v3222, %v3310
      %v3312 = vpop.f32.mrf.mxu0
      %v3313 = vadd.f32 %v3224, %v3312
      %3314 = vmatmul.bf16.gmra.mxu0 %v3061
      %v3315 = vpop.f32.mrf.mxu0
      %v3316 = vadd.f32 %v3227, %v3315
      %v3317 = vpop.f32.mrf.mxu0
      %v3318 = vadd.f32 %v3229, %v3317
      %3319 = vmatmul.bf16.gmra.mxu0 %v3064
      %v3320 = vpop.f32.mrf.mxu0
      %v3321 = vadd.f32 %v3232, %v3320
      %v3322 = vpop.f32.mrf.mxu0
      %v3323 = vadd.f32 %v3234, %v3322
      %3324 = vmatmul.bf16.gmra.mxu0 %v3067
      %v3325 = vpop.f32.mrf.mxu0
      %v3326 = vadd.f32 %v3237, %v3325
      %v3327 = vpop.f32.mrf.mxu0
      %v3328 = vadd.f32 %v3239, %v3327
      %3329 = vmatmul.bf16.gmra.mxu0 %v3070
      %v3330 = vpop.f32.mrf.mxu0
      %v3331 = vadd.f32 %v3242, %v3330
      %v3332 = vpop.f32.mrf.mxu0
      %v3333 = vadd.f32 %v3244, %v3332
      %3334 = vmatmul.bf16.gmra.mxu0 %v3073
      %v3335 = vpop.f32.mrf.mxu0
      %v3336 = vadd.f32 %v3247, %v3335
      %v3337 = vpop.f32.mrf.mxu0
      %v3338 = vadd.f32 %v3249, %v3337
      %3339 = vmatmul.bf16.gmra.mxu0 %v3076
      %v3340 = vpop.f32.mrf.mxu0
      %v3341 = vadd.f32 %v3252, %v3340
      %v3342 = vpop.f32.mrf.mxu0
      %v3343 = vadd.f32 %v3254, %v3342
      %3344 = vdwg.mxu0
      %v3345 = vadd.f32 %v529, %v3266
      %v3346 = vadd.f32 %v530, %v3268
      %v3347 = vadd.f32 %v531, %v3271
      %v3348 = vadd.f32 %v532, %v3273
      %v3349 = vadd.f32 %v533, %v3276
      %v3350 = vadd.f32 %v534, %v3278
      %v3351 = vadd.f32 %v535, %v3281
      %v3352 = vadd.f32 %v536, %v3283
      %v3353 = vadd.f32 %v537, %v3286
      %v3354 = vadd.f32 %v538, %v3288
      %v3355 = vadd.f32 %v539, %v3291
      %v3356 = vadd.f32 %v540, %v3293
      %v3357 = vadd.f32 %v541, %v3296
      %v3358 = vadd.f32 %v542, %v3298
      %v3359 = vadd.f32 %v543, %v3301
      %v3360 = vadd.f32 %v544, %v3303
      %v3361 = vadd.f32 %v545, %v3306
      %v3362 = vadd.f32 %v546, %v3308
      %v3363 = vadd.f32 %v547, %v3311
      %v3364 = vadd.f32 %v548, %v3313
      %v3365 = vadd.f32 %v549, %v3316
      %v3366 = vadd.f32 %v550, %v3318
      %v3367 = vadd.f32 %v551, %v3321
      %v3368 = vadd.f32 %v552, %v3323
      %v3369 = vadd.f32 %v553, %v3326
      %v3370 = vadd.f32 %v554, %v3328
      %v3371 = vadd.f32 %v555, %v3331
      %v3372 = vadd.f32 %v556, %v3333
      %v3373 = vadd.f32 %v557, %v3336
      %v3374 = vadd.f32 %v558, %v3338
      %v3375 = vadd.f32 %v559, %v3341
      %v3376 = vadd.f32 %v560, %v3343
      %v3377 = vpack.c.bf16 %v3345, %v3345
      %v3378 = vpack.c.bf16 %v3346, %v3346
      %v3379 = vpack.c.bf16 %v3347, %v3347
      %v3380 = vpack.c.bf16 %v3348, %v3348
      %v3381 = vpack.c.bf16 %v3349, %v3349
      %v3382 = vpack.c.bf16 %v3350, %v3350
      %v3383 = vpack.c.bf16 %v3351, %v3351
      %v3384 = vpack.c.bf16 %v3352, %v3352
      %v3385 = vpack.c.bf16 %v3353, %v3353
      %v3386 = vpack.c.bf16 %v3354, %v3354
      %v3387 = vpack.c.bf16 %v3355, %v3355
      %v3388 = vpack.c.bf16 %v3356, %v3356
      %v3389 = vpack.c.bf16 %v3357, %v3357
      %v3390 = vpack.c.bf16 %v3358, %v3358
      %v3391 = vpack.c.bf16 %v3359, %v3359
      %v3392 = vpack.c.bf16 %v3360, %v3360
      %v3393 = vpack.c.bf16 %v3361, %v3361
      %v3394 = vpack.c.bf16 %v3362, %v3362
      %v3395 = vpack.c.bf16 %v3363, %v3363
      %v3396 = vpack.c.bf16 %v3364, %v3364
      %v3397 = vpack.c.bf16 %v3365, %v3365
      %v3398 = vpack.c.bf16 %v3366, %v3366
      %v3399 = vpack.c.bf16 %v3367, %v3367
      %v3400 = vpack.c.bf16 %v3368, %v3368
      %v3401 = vpack.c.bf16 %v3369, %v3369
      %v3402 = vpack.c.bf16 %v3370, %v3370
      %v3403 = vpack.c.bf16 %v3371, %v3371
      %v3404 = vpack.c.bf16 %v3372, %v3372
      %v3405 = vpack.c.bf16 %v3373, %v3373
      %v3406 = vpack.c.bf16 %v3374, %v3374
      %v3407 = vpack.c.bf16 %v3375, %v3375
      %v3408 = vpack.c.bf16 %v3376, %v3376
      %v3441 = vunpack.c.l.b16 %v3377
      %v3442 = vunpack.c.l.b16 %v3378
      %v3443 = vunpack.c.l.b16 %v3379
      %v3444 = vunpack.c.l.b16 %v3380
      %v3445 = vunpack.c.l.b16 %v3381
      %v3446 = vunpack.c.l.b16 %v3382
      %v3447 = vunpack.c.l.b16 %v3383
      %v3448 = vunpack.c.l.b16 %v3384
      %v3449 = vunpack.c.l.b16 %v3385
      %v3450 = vunpack.c.l.b16 %v3386
      %v3451 = vunpack.c.l.b16 %v3387
      %v3452 = vunpack.c.l.b16 %v3388
      %v3453 = vunpack.c.l.b16 %v3389
      %v3454 = vunpack.c.l.b16 %v3390
      %v3455 = vunpack.c.l.b16 %v3391
      %v3456 = vunpack.c.l.b16 %v3392
      %v3457 = vunpack.c.l.b16 %v3393
      %v3458 = vunpack.c.l.b16 %v3394
      %v3459 = vunpack.c.l.b16 %v3395
      %v3460 = vunpack.c.l.b16 %v3396
      %v3461 = vunpack.c.l.b16 %v3397
      %v3462 = vunpack.c.l.b16 %v3398
      %v3463 = vunpack.c.l.b16 %v3399
      %v3464 = vunpack.c.l.b16 %v3400
      %v3465 = vunpack.c.l.b16 %v3401
      %v3466 = vunpack.c.l.b16 %v3402
      %v3467 = vunpack.c.l.b16 %v3403
      %v3468 = vunpack.c.l.b16 %v3404
      %v3469 = vunpack.c.l.b16 %v3405
      %v3470 = vunpack.c.l.b16 %v3406
      %v3471 = vunpack.c.l.b16 %v3407
      %v3472 = vunpack.c.l.b16 %v3408
      %v3473 = vpack.c.b16 %v3442, %v3441
      %v3474 = vpack.c.b16 %v3444, %v3443
      %v3475 = vpack.c.b16 %v3446, %v3445
      %v3476 = vpack.c.b16 %v3448, %v3447
      %v3477 = vpack.c.b16 %v3450, %v3449
      %v3478 = vpack.c.b16 %v3452, %v3451
      %v3479 = vpack.c.b16 %v3454, %v3453
      %v3480 = vpack.c.b16 %v3456, %v3455
      %v3481 = vpack.c.b16 %v3458, %v3457
      %v3482 = vpack.c.b16 %v3460, %v3459
      %v3483 = vpack.c.b16 %v3462, %v3461
      %v3484 = vpack.c.b16 %v3464, %v3463
      %v3485 = vpack.c.b16 %v3466, %v3465
      %v3486 = vpack.c.b16 %v3468, %v3467
      %v3487 = vpack.c.b16 %v3470, %v3469
      %v3488 = vpack.c.b16 %v3472, %v3471
      %v3490 = vshrl.u32 %v3473, 16
      %v3492 = vrot.slane %v3490, 7
      %v3493 = vshll.u32 %v3473, 16
      %v3495 = vor.u32 %v3492, %v3493
      %v3497 = vshrl.u32 %v3474, 16
      %v3499 = vrot.slane %v3497, 7
      %v3500 = vshll.u32 %v3474, 16
      %v3502 = vor.u32 %v3499, %v3500
      %v3504 = vshrl.u32 %v3475, 16
      %v3506 = vrot.slane %v3504, 7
      %v3507 = vshll.u32 %v3475, 16
      %v3509 = vor.u32 %v3506, %v3507
      %v3511 = vshrl.u32 %v3476, 16
      %v3513 = vrot.slane %v3511, 7
      %v3514 = vshll.u32 %v3476, 16
      %v3516 = vor.u32 %v3513, %v3514
      %v3518 = vshrl.u32 %v3477, 16
      %v3520 = vrot.slane %v3518, 7
      %v3521 = vshll.u32 %v3477, 16
      %v3523 = vor.u32 %v3520, %v3521
      %v3525 = vshrl.u32 %v3478, 16
      %v3527 = vrot.slane %v3525, 7
      %v3528 = vshll.u32 %v3478, 16
      %v3530 = vor.u32 %v3527, %v3528
      %v3532 = vshrl.u32 %v3479, 16
      %v3534 = vrot.slane %v3532, 7
      %v3535 = vshll.u32 %v3479, 16
      %v3537 = vor.u32 %v3534, %v3535
      %v3539 = vshrl.u32 %v3480, 16
      %v3541 = vrot.slane %v3539, 7
      %v3542 = vshll.u32 %v3480, 16
      %v3544 = vor.u32 %v3541, %v3542
      %v3546 = vshrl.u32 %v3481, 16
      %v3548 = vrot.slane %v3546, 7
      %v3549 = vshll.u32 %v3481, 16
      %v3551 = vor.u32 %v3548, %v3549
      %v3553 = vshrl.u32 %v3482, 16
      %v3555 = vrot.slane %v3553, 7
      %v3556 = vshll.u32 %v3482, 16
      %v3558 = vor.u32 %v3555, %v3556
      %v3560 = vshrl.u32 %v3483, 16
      %v3562 = vrot.slane %v3560, 7
      %v3563 = vshll.u32 %v3483, 16
      %v3565 = vor.u32 %v3562, %v3563
      %v3567 = vshrl.u32 %v3484, 16
      %v3569 = vrot.slane %v3567, 7
      %v3570 = vshll.u32 %v3484, 16
      %v3572 = vor.u32 %v3569, %v3570
      %v3574 = vshrl.u32 %v3485, 16
      %v3576 = vrot.slane %v3574, 7
      %v3577 = vshll.u32 %v3485, 16
      %v3579 = vor.u32 %v3576, %v3577
      %v3581 = vshrl.u32 %v3486, 16
      %v3583 = vrot.slane %v3581, 7
      %v3584 = vshll.u32 %v3486, 16
      %v3586 = vor.u32 %v3583, %v3584
      %v3588 = vshrl.u32 %v3487, 16
      %v3590 = vrot.slane %v3588, 7
      %v3591 = vshll.u32 %v3487, 16
      %v3593 = vor.u32 %v3590, %v3591
      %v3595 = vshrl.u32 %v3488, 16
      %v3597 = vrot.slane %v3595, 7
      %v3598 = vshll.u32 %v3488, 16
      %v3600 = vor.u32 %v3597, %v3598
      %v3633 = vsel %vm860, 0, %v3495
      %v3634 = vsel %vm860, 0, %v3502
      %v3635 = vsel %vm860, 0, %v3509
      %v3636 = vsel %vm860, 0, %v3516
      %v3637 = vsel %vm860, 0, %v3523
      %v3638 = vsel %vm860, 0, %v3530
      %v3639 = vsel %vm860, 0, %v3537
      %v3640 = vsel %vm860, 0, %v3544
      %v3641 = vsel %vm860, 0, %v3551
      %v3642 = vsel %vm860, 0, %v3558
      %v3643 = vsel %vm860, 0, %v3565
      %v3644 = vsel %vm860, 0, %v3572
      %v3645 = vsel %vm860, 0, %v3579
      %v3646 = vsel %vm860, 0, %v3586
      %v3647 = vsel %vm860, 0, %v3593
      %v3648 = vsel %vm860, 0, %v3600
      %v3649 = vsel %vm860, %v3492, 0
      %v3650 = vsel %vm860, %v3499, 0
      %v3651 = vsel %vm860, %v3506, 0
      %v3652 = vsel %vm860, %v3513, 0
      %v3653 = vsel %vm860, %v3520, 0
      %v3654 = vsel %vm860, %v3527, 0
      %v3655 = vsel %vm860, %v3534, 0
      %v3656 = vsel %vm860, %v3541, 0
      %v3657 = vsel %vm860, %v3548, 0
      %v3658 = vsel %vm860, %v3555, 0
      %v3659 = vsel %vm860, %v3562, 0
      %v3660 = vsel %vm860, %v3569, 0
      %v3661 = vsel %vm860, %v3576, 0
      %v3662 = vsel %vm860, %v3583, 0
      %v3663 = vsel %vm860, %v3590, 0
      %v3664 = vsel %vm860, %v3597, 0
      %v3666 = vshrl.u32 %v3633, 16
      %v3668 = vshll.u32 %v3633, 16
      %v3670 = vrot.slane %v3668, 1
      %v3671 = vor.u32 %v3666, %v3670
      %v3673 = vshll.u32 %v3649, 16
      %v3675 = vrot.slane %v3673, 1
      %v3676 = vsel %vm895, %v3671, %v3675
      %v3678 = vshrl.u32 %v3634, 16
      %v3680 = vshll.u32 %v3634, 16
      %v3682 = vrot.slane %v3680, 1
      %v3683 = vor.u32 %v3678, %v3682
      %v3685 = vshll.u32 %v3650, 16
      %v3687 = vrot.slane %v3685, 1
      %v3688 = vsel %vm895, %v3683, %v3687
      %v3690 = vshrl.u32 %v3635, 16
      %v3692 = vshll.u32 %v3635, 16
      %v3694 = vrot.slane %v3692, 1
      %v3695 = vor.u32 %v3690, %v3694
      %v3697 = vshll.u32 %v3651, 16
      %v3699 = vrot.slane %v3697, 1
      %v3700 = vsel %vm895, %v3695, %v3699
      %v3702 = vshrl.u32 %v3636, 16
      %v3704 = vshll.u32 %v3636, 16
      %v3706 = vrot.slane %v3704, 1
      %v3707 = vor.u32 %v3702, %v3706
      %v3709 = vshll.u32 %v3652, 16
      %v3711 = vrot.slane %v3709, 1
      %v3712 = vsel %vm895, %v3707, %v3711
      %v3714 = vshrl.u32 %v3637, 16
      %v3716 = vshll.u32 %v3637, 16
      %v3718 = vrot.slane %v3716, 1
      %v3719 = vor.u32 %v3714, %v3718
      %v3721 = vshll.u32 %v3653, 16
      %v3723 = vrot.slane %v3721, 1
      %v3724 = vsel %vm895, %v3719, %v3723
      %v3726 = vshrl.u32 %v3638, 16
      %v3728 = vshll.u32 %v3638, 16
      %v3730 = vrot.slane %v3728, 1
      %v3731 = vor.u32 %v3726, %v3730
      %v3733 = vshll.u32 %v3654, 16
      %v3735 = vrot.slane %v3733, 1
      %v3736 = vsel %vm895, %v3731, %v3735
      %v3738 = vshrl.u32 %v3639, 16
      %v3740 = vshll.u32 %v3639, 16
      %v3742 = vrot.slane %v3740, 1
      %v3743 = vor.u32 %v3738, %v3742
      %v3745 = vshll.u32 %v3655, 16
      %v3747 = vrot.slane %v3745, 1
      %v3748 = vsel %vm895, %v3743, %v3747
      %v3750 = vshrl.u32 %v3640, 16
      %v3752 = vshll.u32 %v3640, 16
      %v3754 = vrot.slane %v3752, 1
      %v3755 = vor.u32 %v3750, %v3754
      %v3757 = vshll.u32 %v3656, 16
      %v3759 = vrot.slane %v3757, 1
      %v3760 = vsel %vm895, %v3755, %v3759
      %v3762 = vshrl.u32 %v3641, 16
      %v3764 = vshll.u32 %v3641, 16
      %v3766 = vrot.slane %v3764, 1
      %v3767 = vor.u32 %v3762, %v3766
      %v3769 = vshll.u32 %v3657, 16
      %v3771 = vrot.slane %v3769, 1
      %v3772 = vsel %vm895, %v3767, %v3771
      %v3774 = vshrl.u32 %v3642, 16
      %v3776 = vshll.u32 %v3642, 16
      %v3778 = vrot.slane %v3776, 1
      %v3779 = vor.u32 %v3774, %v3778
      %v3781 = vshll.u32 %v3658, 16
      %v3783 = vrot.slane %v3781, 1
      %v3784 = vsel %vm895, %v3779, %v3783
      %v3786 = vshrl.u32 %v3643, 16
      %v3788 = vshll.u32 %v3643, 16
      %v3790 = vrot.slane %v3788, 1
      %v3791 = vor.u32 %v3786, %v3790
      %v3793 = vshll.u32 %v3659, 16
      %v3795 = vrot.slane %v3793, 1
      %v3796 = vsel %vm895, %v3791, %v3795
      %v3798 = vshrl.u32 %v3644, 16
      %v3800 = vshll.u32 %v3644, 16
      %v3802 = vrot.slane %v3800, 1
      %v3803 = vor.u32 %v3798, %v3802
      %v3805 = vshll.u32 %v3660, 16
      %v3807 = vrot.slane %v3805, 1
      %v3808 = vsel %vm895, %v3803, %v3807
      %v3810 = vshrl.u32 %v3645, 16
      %v3812 = vshll.u32 %v3645, 16
      %v3814 = vrot.slane %v3812, 1
      %v3815 = vor.u32 %v3810, %v3814
      %v3817 = vshll.u32 %v3661, 16
      %v3819 = vrot.slane %v3817, 1
      %v3820 = vsel %vm895, %v3815, %v3819
      %v3822 = vshrl.u32 %v3646, 16
      %v3824 = vshll.u32 %v3646, 16
      %v3826 = vrot.slane %v3824, 1
      %v3827 = vor.u32 %v3822, %v3826
      %v3829 = vshll.u32 %v3662, 16
      %v3831 = vrot.slane %v3829, 1
      %v3832 = vsel %vm895, %v3827, %v3831
      %v3834 = vshrl.u32 %v3647, 16
      %v3836 = vshll.u32 %v3647, 16
      %v3838 = vrot.slane %v3836, 1
      %v3839 = vor.u32 %v3834, %v3838
      %v3841 = vshll.u32 %v3663, 16
      %v3843 = vrot.slane %v3841, 1
      %v3844 = vsel %vm895, %v3839, %v3843
      %3845 = vrot.lane.b32.xlu0 %v3676, 4
      %v3846 = vpop.permute.xlu0 %3845
      %3847 = vrot.lane.b32.xlu0 %v3688, 4
      %v3848 = vpop.permute.xlu0 %3847
      %3849 = vrot.lane.b32.xlu0 %v3700, 4
      %v3850 = vpop.permute.xlu0 %3849
      %3851 = vrot.lane.b32.xlu0 %v3712, 4
      %v3852 = vpop.permute.xlu0 %3851
      %3853 = vrot.lane.b32.xlu0 %v3724, 4
      %v3854 = vpop.permute.xlu0 %3853
      %3855 = vrot.lane.b32.xlu0 %v3736, 4
      %v3856 = vpop.permute.xlu0 %3855
      %3857 = vrot.lane.b32.xlu0 %v3748, 4
      %v3858 = vpop.permute.xlu0 %3857
      %3859 = vrot.lane.b32.xlu0 %v3760, 4
      %v3860 = vpop.permute.xlu0 %3859
      %3861 = vrot.lane.b32.xlu0 %v3772, 4
      %v3862 = vpop.permute.xlu0 %3861
      %3863 = vrot.lane.b32.xlu0 %v3784, 4
      %v3864 = vpop.permute.xlu0 %3863
      %3865 = vrot.lane.b32.xlu0 %v3796, 4
      %v3866 = vpop.permute.xlu0 %3865
      %3867 = vrot.lane.b32.xlu0 %v3808, 4
      %v3868 = vpop.permute.xlu0 %3867
      %3869 = vrot.lane.b32.xlu0 %v3820, 4
      %v3870 = vpop.permute.xlu0 %3869
      %3871 = vrot.lane.b32.xlu0 %v3832, 4
      %v3872 = vpop.permute.xlu0 %3871
      %3873 = vrot.lane.b32.xlu0 %v3844, 4
      %v3874 = vpop.permute.xlu0 %3873
      %v3905 = vrot.slane %v3633, 1
      %v3906 = vrot.slane %v3649, 1
      %v3907 = vsel %vm1152, %v3905, %v3906
      %v3908 = vrot.slane %v3634, 1
      %v3909 = vrot.slane %v3650, 1
      %v3910 = vsel %vm1152, %v3908, %v3909
      %v3911 = vrot.slane %v3635, 1
      %v3912 = vrot.slane %v3651, 1
      %v3913 = vsel %vm1152, %v3911, %v3912
      %v3914 = vrot.slane %v3636, 1
      %v3915 = vrot.slane %v3652, 1
      %v3916 = vsel %vm1152, %v3914, %v3915
      %v3917 = vrot.slane %v3637, 1
      %v3918 = vrot.slane %v3653, 1
      %v3919 = vsel %vm1152, %v3917, %v3918
      %v3920 = vrot.slane %v3638, 1
      %v3921 = vrot.slane %v3654, 1
      %v3922 = vsel %vm1152, %v3920, %v3921
      %v3923 = vrot.slane %v3639, 1
      %v3924 = vrot.slane %v3655, 1
      %v3925 = vsel %vm1152, %v3923, %v3924
      %v3926 = vrot.slane %v3640, 1
      %v3927 = vrot.slane %v3656, 1
      %v3928 = vsel %vm1152, %v3926, %v3927
      %v3929 = vrot.slane %v3641, 1
      %v3930 = vrot.slane %v3657, 1
      %v3931 = vsel %vm1152, %v3929, %v3930
      %v3932 = vrot.slane %v3642, 1
      %v3933 = vrot.slane %v3658, 1
      %v3934 = vsel %vm1152, %v3932, %v3933
      %v3935 = vrot.slane %v3643, 1
      %v3936 = vrot.slane %v3659, 1
      %v3937 = vsel %vm1152, %v3935, %v3936
      %v3938 = vrot.slane %v3644, 1
      %v3939 = vrot.slane %v3660, 1
      %v3940 = vsel %vm1152, %v3938, %v3939
      %v3941 = vrot.slane %v3645, 1
      %v3942 = vrot.slane %v3661, 1
      %v3943 = vsel %vm1152, %v3941, %v3942
      %v3944 = vrot.slane %v3646, 1
      %v3945 = vrot.slane %v3662, 1
      %v3946 = vsel %vm1152, %v3944, %v3945
      %v3947 = vrot.slane %v3647, 1
      %v3948 = vrot.slane %v3663, 1
      %v3949 = vsel %vm1152, %v3947, %v3948
      %3950 = vrot.lane.b32.xlu0 %v3907, 8
      %v3951 = vpop.permute.xlu0 %3950
      %3952 = vrot.lane.b32.xlu0 %v3910, 8
      %v3953 = vpop.permute.xlu0 %3952
      %3954 = vrot.lane.b32.xlu0 %v3913, 8
      %v3955 = vpop.permute.xlu0 %3954
      %3956 = vrot.lane.b32.xlu0 %v3916, 8
      %v3957 = vpop.permute.xlu0 %3956
      %3958 = vrot.lane.b32.xlu0 %v3919, 8
      %v3959 = vpop.permute.xlu0 %3958
      %3960 = vrot.lane.b32.xlu0 %v3922, 8
      %v3961 = vpop.permute.xlu0 %3960
      %3962 = vrot.lane.b32.xlu0 %v3925, 8
      %v3963 = vpop.permute.xlu0 %3962
      %3964 = vrot.lane.b32.xlu0 %v3928, 8
      %v3965 = vpop.permute.xlu0 %3964
      %3966 = vrot.lane.b32.xlu0 %v3931, 8
      %v3967 = vpop.permute.xlu0 %3966
      %3968 = vrot.lane.b32.xlu0 %v3934, 8
      %v3969 = vpop.permute.xlu0 %3968
      %3970 = vrot.lane.b32.xlu0 %v3937, 8
      %v3971 = vpop.permute.xlu0 %3970
      %3972 = vrot.lane.b32.xlu0 %v3940, 8
      %v3973 = vpop.permute.xlu0 %3972
      %3974 = vrot.lane.b32.xlu0 %v3943, 8
      %v3975 = vpop.permute.xlu0 %3974
      %3976 = vrot.lane.b32.xlu0 %v3946, 8
      %v3977 = vpop.permute.xlu0 %3976
      %3978 = vrot.lane.b32.xlu0 %v3949, 8
      %v3979 = vpop.permute.xlu0 %3978
      %3981 = vrot.lane.b32.xlu0 %v3633, 12
      %v3982 = vpop.permute.xlu0 %3981
      %3983 = vrot.lane.b32.xlu0 %v3634, 12
      %v3984 = vpop.permute.xlu0 %3983
      %3985 = vrot.lane.b32.xlu0 %v3635, 12
      %v3986 = vpop.permute.xlu0 %3985
      %3987 = vrot.lane.b32.xlu0 %v3636, 12
      %v3988 = vpop.permute.xlu0 %3987
      %3989 = vrot.lane.b32.xlu0 %v3637, 12
      %v3990 = vpop.permute.xlu0 %3989
      %3991 = vrot.lane.b32.xlu0 %v3638, 12
      %v3992 = vpop.permute.xlu0 %3991
      %3993 = vrot.lane.b32.xlu0 %v3639, 12
      %v3994 = vpop.permute.xlu0 %3993
      %3995 = vrot.lane.b32.xlu0 %v3640, 12
      %v3996 = vpop.permute.xlu0 %3995
      %3997 = vrot.lane.b32.xlu0 %v3641, 12
      %v3998 = vpop.permute.xlu0 %3997
      %3999 = vrot.lane.b32.xlu0 %v3642, 12
      %v4000 = vpop.permute.xlu0 %3999
      %4001 = vrot.lane.b32.xlu0 %v3643, 12
      %v4002 = vpop.permute.xlu0 %4001
      %4003 = vrot.lane.b32.xlu0 %v3644, 12
      %v4004 = vpop.permute.xlu0 %4003
      %4005 = vrot.lane.b32.xlu0 %v3645, 12
      %v4006 = vpop.permute.xlu0 %4005
      %4007 = vrot.lane.b32.xlu0 %v3646, 12
      %v4008 = vpop.permute.xlu0 %4007
      %4009 = vrot.lane.b32.xlu0 %v3647, 12
      %v4010 = vpop.permute.xlu0 %4009
      %4011 = vrot.lane.b32.xlu0 %v3648, 12
      %v4012 = vpop.permute.xlu0 %4011
      %v4014 = vshrl.u32 %v3648, 16
      %v4016 = vshll.u32 %v3648, 16
      %v4018 = vrot.slane %v4016, 1
      %v4019 = vor.u32 %v4014, %v4018
      %v4021 = vshll.u32 %v3664, 16
      %v4023 = vrot.slane %v4021, 1
      %v4024 = vsel %vm895, %v4019, %v4023
      %4025 = vrot.lane.b32.xlu0 %v3676, 16
      %v4026 = vpop.permute.xlu0 %4025
      %4027 = vrot.lane.b32.xlu0 %v3688, 16
      %v4028 = vpop.permute.xlu0 %4027
      %4029 = vrot.lane.b32.xlu0 %v3700, 16
      %v4030 = vpop.permute.xlu0 %4029
      %4031 = vrot.lane.b32.xlu0 %v3712, 16
      %v4032 = vpop.permute.xlu0 %4031
      %4033 = vrot.lane.b32.xlu0 %v3724, 16
      %v4034 = vpop.permute.xlu0 %4033
      %4035 = vrot.lane.b32.xlu0 %v3736, 16
      %v4036 = vpop.permute.xlu0 %4035
      %4037 = vrot.lane.b32.xlu0 %v3748, 16
      %v4038 = vpop.permute.xlu0 %4037
      %4039 = vrot.lane.b32.xlu0 %v3760, 16
      %v4040 = vpop.permute.xlu0 %4039
      %4041 = vrot.lane.b32.xlu0 %v3772, 16
      %v4042 = vpop.permute.xlu0 %4041
      %4043 = vrot.lane.b32.xlu0 %v3784, 16
      %v4044 = vpop.permute.xlu0 %4043
      %4045 = vrot.lane.b32.xlu0 %v3796, 16
      %v4046 = vpop.permute.xlu0 %4045
      %4047 = vrot.lane.b32.xlu0 %v3808, 16
      %v4048 = vpop.permute.xlu0 %4047
      %4049 = vrot.lane.b32.xlu0 %v3820, 16
      %v4050 = vpop.permute.xlu0 %4049
      %4051 = vrot.lane.b32.xlu0 %v3832, 16
      %v4052 = vpop.permute.xlu0 %4051
      %4053 = vrot.lane.b32.xlu0 %v3844, 16
      %v4054 = vpop.permute.xlu0 %4053
      %4055 = vrot.lane.b32.xlu0 %v4024, 16
      %v4056 = vpop.permute.xlu0 %4055
      %v4058 = vrot.slane %v3648, 1
      %v4059 = vrot.slane %v3664, 1
      %v4060 = vsel %vm1152, %v4058, %v4059
      %4061 = vrot.lane.b32.xlu0 %v3907, 20
      %v4062 = vpop.permute.xlu0 %4061
      %4063 = vrot.lane.b32.xlu0 %v3910, 20
      %v4064 = vpop.permute.xlu0 %4063
      %4065 = vrot.lane.b32.xlu0 %v3913, 20
      %v4066 = vpop.permute.xlu0 %4065
      %4067 = vrot.lane.b32.xlu0 %v3916, 20
      %v4068 = vpop.permute.xlu0 %4067
      %4069 = vrot.lane.b32.xlu0 %v3919, 20
      %v4070 = vpop.permute.xlu0 %4069
      %4071 = vrot.lane.b32.xlu0 %v3922, 20
      %v4072 = vpop.permute.xlu0 %4071
      %4073 = vrot.lane.b32.xlu0 %v3925, 20
      %v4074 = vpop.permute.xlu0 %4073
      %4075 = vrot.lane.b32.xlu0 %v3928, 20
      %v4076 = vpop.permute.xlu0 %4075
      %4077 = vrot.lane.b32.xlu0 %v3931, 20
      %v4078 = vpop.permute.xlu0 %4077
      %4079 = vrot.lane.b32.xlu0 %v3934, 20
      %v4080 = vpop.permute.xlu0 %4079
      %4081 = vrot.lane.b32.xlu0 %v3937, 20
      %v4082 = vpop.permute.xlu0 %4081
      %4083 = vrot.lane.b32.xlu0 %v3940, 20
      %v4084 = vpop.permute.xlu0 %4083
      %4085 = vrot.lane.b32.xlu0 %v3943, 20
      %v4086 = vpop.permute.xlu0 %4085
      %4087 = vrot.lane.b32.xlu0 %v3946, 20
      %v4088 = vpop.permute.xlu0 %4087
      %4089 = vrot.lane.b32.xlu0 %v3949, 20
      %v4090 = vpop.permute.xlu0 %4089
      %4091 = vrot.lane.b32.xlu0 %v4060, 20
      %v4092 = vpop.permute.xlu0 %4091
      %4093 = vrot.lane.b32.xlu0 %v3634, 24
      %v4094 = vpop.permute.xlu0 %4093
      %4095 = vrot.lane.b32.xlu0 %v3635, 24
      %v4096 = vpop.permute.xlu0 %4095
      %4097 = vrot.lane.b32.xlu0 %v3636, 24
      %v4098 = vpop.permute.xlu0 %4097
      %4099 = vrot.lane.b32.xlu0 %v3637, 24
      %v4100 = vpop.permute.xlu0 %4099
      %4101 = vrot.lane.b32.xlu0 %v3638, 24
      %v4102 = vpop.permute.xlu0 %4101
      %4103 = vrot.lane.b32.xlu0 %v3639, 24
      %v4104 = vpop.permute.xlu0 %4103
      %4105 = vrot.lane.b32.xlu0 %v3640, 24
      %v4106 = vpop.permute.xlu0 %4105
      %4107 = vrot.lane.b32.xlu0 %v3641, 24
      %v4108 = vpop.permute.xlu0 %4107
      %4109 = vrot.lane.b32.xlu0 %v3642, 24
      %v4110 = vpop.permute.xlu0 %4109
      %4111 = vrot.lane.b32.xlu0 %v3643, 24
      %v4112 = vpop.permute.xlu0 %4111
      %4113 = vrot.lane.b32.xlu0 %v3644, 24
      %v4114 = vpop.permute.xlu0 %4113
      %4115 = vrot.lane.b32.xlu0 %v3645, 24
      %v4116 = vpop.permute.xlu0 %4115
      %4117 = vrot.lane.b32.xlu0 %v3646, 24
      %v4118 = vpop.permute.xlu0 %4117
      %4119 = vrot.lane.b32.xlu0 %v3647, 24
      %v4120 = vpop.permute.xlu0 %4119
      %4121 = vrot.lane.b32.xlu0 %v3648, 24
      %v4122 = vpop.permute.xlu0 %4121
      %4123 = vrot.lane.b32.xlu0 %v3688, 28
      %v4124 = vpop.permute.xlu0 %4123
      %4125 = vrot.lane.b32.xlu0 %v3700, 28
      %v4126 = vpop.permute.xlu0 %4125
      %4127 = vrot.lane.b32.xlu0 %v3712, 28
      %v4128 = vpop.permute.xlu0 %4127
      %4129 = vrot.lane.b32.xlu0 %v3724, 28
      %v4130 = vpop.permute.xlu0 %4129
      %4131 = vrot.lane.b32.xlu0 %v3736, 28
      %v4132 = vpop.permute.xlu0 %4131
      %4133 = vrot.lane.b32.xlu0 %v3748, 28
      %v4134 = vpop.permute.xlu0 %4133
      %4135 = vrot.lane.b32.xlu0 %v3760, 28
      %v4136 = vpop.permute.xlu0 %4135
      %4137 = vrot.lane.b32.xlu0 %v3772, 28
      %v4138 = vpop.permute.xlu0 %4137
      %4139 = vrot.lane.b32.xlu0 %v3784, 28
      %v4140 = vpop.permute.xlu0 %4139
      %4141 = vrot.lane.b32.xlu0 %v3796, 28
      %v4142 = vpop.permute.xlu0 %4141
      %4143 = vrot.lane.b32.xlu0 %v3808, 28
      %v4144 = vpop.permute.xlu0 %4143
      %4145 = vrot.lane.b32.xlu0 %v3820, 28
      %v4146 = vpop.permute.xlu0 %4145
      %4147 = vrot.lane.b32.xlu0 %v3832, 28
      %v4148 = vpop.permute.xlu0 %4147
      %4149 = vrot.lane.b32.xlu0 %v3844, 28
      %v4150 = vpop.permute.xlu0 %4149
      %4151 = vrot.lane.b32.xlu0 %v4024, 28
      %v4152 = vpop.permute.xlu0 %4151
      %4153 = vrot.lane.b32.xlu0 %v3910, 32
      %v4154 = vpop.permute.xlu0 %4153
      %4155 = vrot.lane.b32.xlu0 %v3913, 32
      %v4156 = vpop.permute.xlu0 %4155
      %4157 = vrot.lane.b32.xlu0 %v3916, 32
      %v4158 = vpop.permute.xlu0 %4157
      %4159 = vrot.lane.b32.xlu0 %v3919, 32
      %v4160 = vpop.permute.xlu0 %4159
      %4161 = vrot.lane.b32.xlu0 %v3922, 32
      %v4162 = vpop.permute.xlu0 %4161
      %4163 = vrot.lane.b32.xlu0 %v3925, 32
      %v4164 = vpop.permute.xlu0 %4163
      %4165 = vrot.lane.b32.xlu0 %v3928, 32
      %v4166 = vpop.permute.xlu0 %4165
      %4167 = vrot.lane.b32.xlu0 %v3931, 32
      %v4168 = vpop.permute.xlu0 %4167
      %4169 = vrot.lane.b32.xlu0 %v3934, 32
      %v4170 = vpop.permute.xlu0 %4169
      %4171 = vrot.lane.b32.xlu0 %v3937, 32
      %v4172 = vpop.permute.xlu0 %4171
      %4173 = vrot.lane.b32.xlu0 %v3940, 32
      %v4174 = vpop.permute.xlu0 %4173
      %4175 = vrot.lane.b32.xlu0 %v3943, 32
      %v4176 = vpop.permute.xlu0 %4175
      %4177 = vrot.lane.b32.xlu0 %v3946, 32
      %v4178 = vpop.permute.xlu0 %4177
      %4179 = vrot.lane.b32.xlu0 %v3949, 32
      %v4180 = vpop.permute.xlu0 %4179
      %4181 = vrot.lane.b32.xlu0 %v4060, 32
      %v4182 = vpop.permute.xlu0 %4181
      %v4184 = vsel %vm1442, %v3633, %v3846
      %v4186 = vsel %vm1442, %v3634, %v3848
      %v4188 = vsel %vm1442, %v3635, %v3850
      %v4190 = vsel %vm1442, %v3636, %v3852
      %v4192 = vsel %vm1442, %v3637, %v3854
      %v4194 = vsel %vm1442, %v3638, %v3856
      %v4196 = vsel %vm1442, %v3639, %v3858
      %v4198 = vsel %vm1442, %v3640, %v3860
      %v4200 = vsel %vm1442, %v3641, %v3862
      %v4202 = vsel %vm1442, %v3642, %v3864
      %v4204 = vsel %vm1442, %v3643, %v3866
      %v4206 = vsel %vm1442, %v3644, %v3868
      %v4208 = vsel %vm1442, %v3645, %v3870
      %v4210 = vsel %vm1442, %v3646, %v3872
      %v4212 = vsel %vm1442, %v3647, %v3874
      %v4214 = vsel %vm1475, %v4184, %v3951
      %v4216 = vsel %vm1475, %v4186, %v3953
      %v4218 = vsel %vm1475, %v4188, %v3955
      %v4220 = vsel %vm1475, %v4190, %v3957
      %v4222 = vsel %vm1475, %v4192, %v3959
      %v4224 = vsel %vm1475, %v4194, %v3961
      %v4226 = vsel %vm1475, %v4196, %v3963
      %v4228 = vsel %vm1475, %v4198, %v3965
      %v4230 = vsel %vm1475, %v4200, %v3967
      %v4232 = vsel %vm1475, %v4202, %v3969
      %v4234 = vsel %vm1475, %v4204, %v3971
      %v4236 = vsel %vm1475, %v4206, %v3973
      %v4238 = vsel %vm1475, %v4208, %v3975
      %v4240 = vsel %vm1475, %v4210, %v3977
      %v4242 = vsel %vm1475, %v4212, %v3979
      %v4244 = vsel %vm1508, %v1477, %v3982
      %v4246 = vsel %vm1508, %v4214, %v3984
      %v4248 = vsel %vm1508, %v4216, %v3986
      %v4250 = vsel %vm1508, %v4218, %v3988
      %v4252 = vsel %vm1508, %v4220, %v3990
      %v4254 = vsel %vm1508, %v4222, %v3992
      %v4256 = vsel %vm1508, %v4224, %v3994
      %v4258 = vsel %vm1508, %v4226, %v3996
      %v4260 = vsel %vm1508, %v4228, %v3998
      %v4262 = vsel %vm1508, %v4230, %v4000
      %v4264 = vsel %vm1508, %v4232, %v4002
      %v4266 = vsel %vm1508, %v4234, %v4004
      %v4268 = vsel %vm1508, %v4236, %v4006
      %v4270 = vsel %vm1508, %v4238, %v4008
      %v4272 = vsel %vm1508, %v4240, %v4010
      %v4274 = vsel %vm1508, %v4242, %v4012
      %v4276 = vsel %vm1541, %v4244, %v4026
      %v4278 = vsel %vm1541, %v4246, %v4028
      %v4280 = vsel %vm1541, %v4248, %v4030
      %v4282 = vsel %vm1541, %v4250, %v4032
      %v4284 = vsel %vm1541, %v4252, %v4034
      %v4286 = vsel %vm1541, %v4254, %v4036
      %v4288 = vsel %vm1541, %v4256, %v4038
      %v4290 = vsel %vm1541, %v4258, %v4040
      %v4292 = vsel %vm1541, %v4260, %v4042
      %v4294 = vsel %vm1541, %v4262, %v4044
      %v4296 = vsel %vm1541, %v4264, %v4046
      %v4298 = vsel %vm1541, %v4266, %v4048
      %v4300 = vsel %vm1541, %v4268, %v4050
      %v4302 = vsel %vm1541, %v4270, %v4052
      %v4304 = vsel %vm1541, %v4272, %v4054
      %v4306 = vsel %vm1541, %v4274, %v4056
      %v4308 = vsel %vm1574, %v4276, %v4062
      %v4310 = vsel %vm1574, %v4278, %v4064
      %v4312 = vsel %vm1574, %v4280, %v4066
      %v4314 = vsel %vm1574, %v4282, %v4068
      %v4316 = vsel %vm1574, %v4284, %v4070
      %v4318 = vsel %vm1574, %v4286, %v4072
      %v4320 = vsel %vm1574, %v4288, %v4074
      %v4322 = vsel %vm1574, %v4290, %v4076
      %v4324 = vsel %vm1574, %v4292, %v4078
      %v4326 = vsel %vm1574, %v4294, %v4080
      %v4328 = vsel %vm1574, %v4296, %v4082
      %v4330 = vsel %vm1574, %v4298, %v4084
      %v4332 = vsel %vm1574, %v4300, %v4086
      %v4334 = vsel %vm1574, %v4302, %v4088
      %v4336 = vsel %vm1574, %v4304, %v4090
      %v4338 = vsel %vm1574, %v4306, %v4092
      %v4340 = vsel %vm1607, %v4308, %v4094
      %v4342 = vsel %vm1607, %v4310, %v4096
      %v4344 = vsel %vm1607, %v4312, %v4098
      %v4346 = vsel %vm1607, %v4314, %v4100
      %v4348 = vsel %vm1607, %v4316, %v4102
      %v4350 = vsel %vm1607, %v4318, %v4104
      %v4352 = vsel %vm1607, %v4320, %v4106
      %v4354 = vsel %vm1607, %v4322, %v4108
      %v4356 = vsel %vm1607, %v4324, %v4110
      %v4358 = vsel %vm1607, %v4326, %v4112
      %v4360 = vsel %vm1607, %v4328, %v4114
      %v4362 = vsel %vm1607, %v4330, %v4116
      %v4364 = vsel %vm1607, %v4332, %v4118
      %v4366 = vsel %vm1607, %v4334, %v4120
      %v4368 = vsel %vm1607, %v4336, %v4122
      %v4369 = vsel %vm1607, %v4338, %v1377
      %v4371 = vsel %vm1640, %v4340, %v4124
      %v4373 = vsel %vm1640, %v4342, %v4126
      %v4375 = vsel %vm1640, %v4344, %v4128
      %v4377 = vsel %vm1640, %v4346, %v4130
      %v4379 = vsel %vm1640, %v4348, %v4132
      %v4381 = vsel %vm1640, %v4350, %v4134
      %v4383 = vsel %vm1640, %v4352, %v4136
      %v4385 = vsel %vm1640, %v4354, %v4138
      %v4387 = vsel %vm1640, %v4356, %v4140
      %v4389 = vsel %vm1640, %v4358, %v4142
      %v4391 = vsel %vm1640, %v4360, %v4144
      %v4393 = vsel %vm1640, %v4362, %v4146
      %v4395 = vsel %vm1640, %v4364, %v4148
      %v4397 = vsel %vm1640, %v4366, %v4150
      %v4399 = vsel %vm1640, %v4368, %v4152
      %v4400 = vsel %vm1640, %v4369, %v1409
      %v4402 = vsel %vm1673, %v4371, %v4154
      %v4404 = vsel %vm1673, %v4373, %v4156
      %v4406 = vsel %vm1673, %v4375, %v4158
      %v4408 = vsel %vm1673, %v4377, %v4160
      %v4410 = vsel %vm1673, %v4379, %v4162
      %v4412 = vsel %vm1673, %v4381, %v4164
      %v4414 = vsel %vm1673, %v4383, %v4166
      %v4416 = vsel %vm1673, %v4385, %v4168
      %v4418 = vsel %vm1673, %v4387, %v4170
      %v4420 = vsel %vm1673, %v4389, %v4172
      %v4422 = vsel %vm1673, %v4391, %v4174
      %v4424 = vsel %vm1673, %v4393, %v4176
      %v4426 = vsel %vm1673, %v4395, %v4178
      %v4428 = vsel %vm1673, %v4397, %v4180
      %v4430 = vsel %vm1673, %v4399, %v4182
      %v4431 = vsel %vm1673, %v4400, %v1441
      %v4432 = vld [vmem:[%s6] sm:$0xf]
      %v4433 = vld [vmem:[%s6 + $0x4] sm:$0xf]
      %v4434 = vld [vmem:[%s6 + $0x8] sm:$0xf]
      %v4435 = vld [vmem:[%s6 + $0xc] sm:$0xf]
      %v4436 = vld [vmem:[%s6 + $0x10] sm:$0x3]
      %v4437 = vld [vmem:[%s7] sm:$0x1]
      %v4439 = vperm.slane %v4437, 0
      %v4446 = vunpack.c.l.b16 %v4432
      %v4447 = vunpack.c.l.b16 %v4433
      %v4448 = vunpack.c.l.b16 %v4434
      %v4449 = vunpack.c.l.b16 %v4435
      %v4450 = vunpack.c.l.b16 %v4436
      %v4451 = vpack.c.b16 %v4447, %v4446
      %v4452 = vpack.c.b16 %v4449, %v4448
      %v4453 = vpack.c.b16 %v4450, %v4450
      %v4456 = vsel %vm1730, %v4402, 0
      %v4458 = vsel %vm1730, %v4404, 0
      %v4460 = vsel %vm1730, %v4406, 0
      %v4462 = vsel %vm1730, %v4408, 0
      %v4464 = vsel %vm1730, %v4410, 0
      %v4466 = vsel %vm1730, %v4412, 0
      %v4468 = vsel %vm1730, %v4414, 0
      %v4470 = vsel %vm1730, %v4416, 0
      %v4472 = vsel %vm1730, %v4418, 0
      %v4474 = vsel %vm1730, %v4420, 0
      %v4476 = vsel %vm1730, %v4422, 0
      %v4478 = vsel %vm1730, %v4424, 0
      %v4480 = vsel %vm1730, %v4426, 0
      %v4482 = vsel %vm1730, %v4428, 0
      %v4484 = vsel %vm1730, %v4430, 0
      %v4486 = vsel %vm1730, %v4431, 0
      %v4489 = vsel %vm1763, %v4453, 0
      %4491 = vmatpush.bf16.msra.mxu0 0
      %4492 = vmatpush.bf16.msra.mxu0 0
      %4493 = vmatpush.bf16.msra.mxu0 0
      %4494 = vmatpush.bf16.msra.mxu0 0
      %4495 = vmatpush.bf16.msra.mxu0 0
      %4496 = vmatpush.bf16.msra.mxu0 %v4489
      %4497 = vmatpush.bf16.msra.mxu0 %v4452
      %4498 = vmatpush.bf16.msra.mxu0 %v4451
      %4499 = vmatmul.bf16.gmra.mxu0 %v4456
      %v4500 = vpop.f32.mrf.mxu0
      %v4501 = vadd.f32 %v4439, %v4500
      %v4502 = vpop.f32.mrf.mxu0
      %v4503 = vadd.f32 %v4439, %v4502
      %4504 = vmatmul.bf16.gmra.mxu0 %v4458
      %v4505 = vpop.f32.mrf.mxu0
      %v4506 = vadd.f32 %v4439, %v4505
      %v4507 = vpop.f32.mrf.mxu0
      %v4508 = vadd.f32 %v4439, %v4507
      %4509 = vmatmul.bf16.gmra.mxu0 %v4460
      %v4510 = vpop.f32.mrf.mxu0
      %v4511 = vadd.f32 %v4439, %v4510
      %v4512 = vpop.f32.mrf.mxu0
      %v4513 = vadd.f32 %v4439, %v4512
      %4514 = vmatmul.bf16.gmra.mxu0 %v4462
      %v4515 = vpop.f32.mrf.mxu0
      %v4516 = vadd.f32 %v4439, %v4515
      %v4517 = vpop.f32.mrf.mxu0
      %v4518 = vadd.f32 %v4439, %v4517
      %4519 = vmatmul.bf16.gmra.mxu0 %v4464
      %v4520 = vpop.f32.mrf.mxu0
      %v4521 = vadd.f32 %v4439, %v4520
      %v4522 = vpop.f32.mrf.mxu0
      %v4523 = vadd.f32 %v4439, %v4522
      %4524 = vmatmul.bf16.gmra.mxu0 %v4466
      %v4525 = vpop.f32.mrf.mxu0
      %v4526 = vadd.f32 %v4439, %v4525
      %v4527 = vpop.f32.mrf.mxu0
      %v4528 = vadd.f32 %v4439, %v4527
      %4529 = vmatmul.bf16.gmra.mxu0 %v4468
      %v4530 = vpop.f32.mrf.mxu0
      %v4531 = vadd.f32 %v4439, %v4530
      %v4532 = vpop.f32.mrf.mxu0
      %v4533 = vadd.f32 %v4439, %v4532
      %4534 = vmatmul.bf16.gmra.mxu0 %v4470
      %v4535 = vpop.f32.mrf.mxu0
      %v4536 = vadd.f32 %v4439, %v4535
      %v4537 = vpop.f32.mrf.mxu0
      %v4538 = vadd.f32 %v4439, %v4537
      %4539 = vmatmul.bf16.gmra.mxu0 %v4472
      %v4540 = vpop.f32.mrf.mxu0
      %v4541 = vadd.f32 %v4439, %v4540
      %v4542 = vpop.f32.mrf.mxu0
      %v4543 = vadd.f32 %v4439, %v4542
      %4544 = vmatmul.bf16.gmra.mxu0 %v4474
      %v4545 = vpop.f32.mrf.mxu0
      %v4546 = vadd.f32 %v4439, %v4545
      %v4547 = vpop.f32.mrf.mxu0
      %v4548 = vadd.f32 %v4439, %v4547
      %4549 = vmatmul.bf16.gmra.mxu0 %v4476
      %v4550 = vpop.f32.mrf.mxu0
      %v4551 = vadd.f32 %v4439, %v4550
      %v4552 = vpop.f32.mrf.mxu0
      %v4553 = vadd.f32 %v4439, %v4552
      %4554 = vmatmul.bf16.gmra.mxu0 %v4478
      %v4555 = vpop.f32.mrf.mxu0
      %v4556 = vadd.f32 %v4439, %v4555
      %v4557 = vpop.f32.mrf.mxu0
      %v4558 = vadd.f32 %v4439, %v4557
      %4559 = vmatmul.bf16.gmra.mxu0 %v4480
      %v4560 = vpop.f32.mrf.mxu0
      %v4561 = vadd.f32 %v4439, %v4560
      %v4562 = vpop.f32.mrf.mxu0
      %v4563 = vadd.f32 %v4439, %v4562
      %4564 = vmatmul.bf16.gmra.mxu0 %v4482
      %v4565 = vpop.f32.mrf.mxu0
      %v4566 = vadd.f32 %v4439, %v4565
      %v4567 = vpop.f32.mrf.mxu0
      %v4568 = vadd.f32 %v4439, %v4567
      %4569 = vmatmul.bf16.gmra.mxu0 %v4484
      %v4570 = vpop.f32.mrf.mxu0
      %v4571 = vadd.f32 %v4439, %v4570
      %v4572 = vpop.f32.mrf.mxu0
      %v4573 = vadd.f32 %v4439, %v4572
      %4574 = vmatmul.bf16.gmra.mxu0 %v4486
      %v4575 = vpop.f32.mrf.mxu0
      %v4576 = vadd.f32 %v4439, %v4575
      %v4577 = vpop.f32.mrf.mxu0
      %v4578 = vadd.f32 %v4439, %v4577
      %4579 = vdwg.mxu0
      %v4580 = vmax.f32 %v4501, 0.0
      %v4581 = vmax.f32 %v4503, 0.0
      %v4582 = vmax.f32 %v4506, 0.0
      %v4583 = vmax.f32 %v4508, 0.0
      %v4584 = vmax.f32 %v4511, 0.0
      %v4585 = vmax.f32 %v4513, 0.0
      %v4586 = vmax.f32 %v4516, 0.0
      %v4587 = vmax.f32 %v4518, 0.0
      %v4588 = vmax.f32 %v4521, 0.0
      %v4589 = vmax.f32 %v4523, 0.0
      %v4590 = vmax.f32 %v4526, 0.0
      %v4591 = vmax.f32 %v4528, 0.0
      %v4592 = vmax.f32 %v4531, 0.0
      %v4593 = vmax.f32 %v4533, 0.0
      %v4594 = vmax.f32 %v4536, 0.0
      %v4595 = vmax.f32 %v4538, 0.0
      %v4596 = vmax.f32 %v4541, 0.0
      %v4597 = vmax.f32 %v4543, 0.0
      %v4598 = vmax.f32 %v4546, 0.0
      %v4599 = vmax.f32 %v4548, 0.0
      %v4600 = vmax.f32 %v4551, 0.0
      %v4601 = vmax.f32 %v4553, 0.0
      %v4602 = vmax.f32 %v4556, 0.0
      %v4603 = vmax.f32 %v4558, 0.0
      %v4604 = vmax.f32 %v4561, 0.0
      %v4605 = vmax.f32 %v4563, 0.0
      %v4606 = vmax.f32 %v4566, 0.0
      %v4607 = vmax.f32 %v4568, 0.0
      %v4608 = vmax.f32 %v4571, 0.0
      %v4609 = vmax.f32 %v4573, 0.0
      %v4610 = vmax.f32 %v4576, 0.0
      %v4611 = vmax.f32 %v4578, 0.0
      %v4612 = vld [vmem:[%s10] sm:$0xf]
      %v4613 = vld [vmem:[%s10 + $0x4] sm:$0xf]
      %v4614 = vld [vmem:[%s10 + $0x8] sm:$0xf]
      %v4615 = vld [vmem:[%s10 + $0xc] sm:$0xf]
      %v4616 = vld [vmem:[%s10 + $0x10] sm:$0x3]
      %v4617 = vld [vmem:[%s11] sm:$0x1]
      %v4619 = vperm.slane %v4617, 0
      %v4626 = vunpack.c.l.b16 %v4612
      %v4627 = vunpack.c.l.b16 %v4613
      %v4628 = vunpack.c.l.b16 %v4614
      %v4629 = vunpack.c.l.b16 %v4615
      %v4630 = vunpack.c.l.b16 %v4616
      %v4631 = vpack.c.b16 %v4627, %v4626
      %v4632 = vpack.c.b16 %v4629, %v4628
      %v4633 = vpack.c.b16 %v4630, %v4630
      %v4637 = vsel %vm1763, %v4633, 0
      %4639 = vmatpush.bf16.msra.mxu0 0
      %4640 = vmatpush.bf16.msra.mxu0 0
      %4641 = vmatpush.bf16.msra.mxu0 0
      %4642 = vmatpush.bf16.msra.mxu0 0
      %4643 = vmatpush.bf16.msra.mxu0 0
      %4644 = vmatpush.bf16.msra.mxu0 %v4637
      %4645 = vmatpush.bf16.msra.mxu0 %v4632
      %4646 = vmatpush.bf16.msra.mxu0 %v4631
      %4647 = vmatmul.bf16.gmra.mxu0 %v4456
      %v4648 = vpop.f32.mrf.mxu0
      %v4649 = vadd.f32 %v4619, %v4648
      %v4650 = vpop.f32.mrf.mxu0
      %v4651 = vadd.f32 %v4619, %v4650
      %4652 = vmatmul.bf16.gmra.mxu0 %v4458
      %v4653 = vpop.f32.mrf.mxu0
      %v4654 = vadd.f32 %v4619, %v4653
      %v4655 = vpop.f32.mrf.mxu0
      %v4656 = vadd.f32 %v4619, %v4655
      %4657 = vmatmul.bf16.gmra.mxu0 %v4460
      %v4658 = vpop.f32.mrf.mxu0
      %v4659 = vadd.f32 %v4619, %v4658
      %v4660 = vpop.f32.mrf.mxu0
      %v4661 = vadd.f32 %v4619, %v4660
      %4662 = vmatmul.bf16.gmra.mxu0 %v4462
      %v4663 = vpop.f32.mrf.mxu0
      %v4664 = vadd.f32 %v4619, %v4663
      %v4665 = vpop.f32.mrf.mxu0
      %v4666 = vadd.f32 %v4619, %v4665
      %4667 = vmatmul.bf16.gmra.mxu0 %v4464
      %v4668 = vpop.f32.mrf.mxu0
      %v4669 = vadd.f32 %v4619, %v4668
      %v4670 = vpop.f32.mrf.mxu0
      %v4671 = vadd.f32 %v4619, %v4670
      %4672 = vmatmul.bf16.gmra.mxu0 %v4466
      %v4673 = vpop.f32.mrf.mxu0
      %v4674 = vadd.f32 %v4619, %v4673
      %v4675 = vpop.f32.mrf.mxu0
      %v4676 = vadd.f32 %v4619, %v4675
      %4677 = vmatmul.bf16.gmra.mxu0 %v4468
      %v4678 = vpop.f32.mrf.mxu0
      %v4679 = vadd.f32 %v4619, %v4678
      %v4680 = vpop.f32.mrf.mxu0
      %v4681 = vadd.f32 %v4619, %v4680
      %4682 = vmatmul.bf16.gmra.mxu0 %v4470
      %v4683 = vpop.f32.mrf.mxu0
      %v4684 = vadd.f32 %v4619, %v4683
      %v4685 = vpop.f32.mrf.mxu0
      %v4686 = vadd.f32 %v4619, %v4685
      %4687 = vmatmul.bf16.gmra.mxu0 %v4472
      %v4688 = vpop.f32.mrf.mxu0
      %v4689 = vadd.f32 %v4619, %v4688
      %v4690 = vpop.f32.mrf.mxu0
      %v4691 = vadd.f32 %v4619, %v4690
      %4692 = vmatmul.bf16.gmra.mxu0 %v4474
      %v4693 = vpop.f32.mrf.mxu0
      %v4694 = vadd.f32 %v4619, %v4693
      %v4695 = vpop.f32.mrf.mxu0
      %v4696 = vadd.f32 %v4619, %v4695
      %4697 = vmatmul.bf16.gmra.mxu0 %v4476
      %v4698 = vpop.f32.mrf.mxu0
      %v4699 = vadd.f32 %v4619, %v4698
      %v4700 = vpop.f32.mrf.mxu0
      %v4701 = vadd.f32 %v4619, %v4700
      %4702 = vmatmul.bf16.gmra.mxu0 %v4478
      %v4703 = vpop.f32.mrf.mxu0
      %v4704 = vadd.f32 %v4619, %v4703
      %v4705 = vpop.f32.mrf.mxu0
      %v4706 = vadd.f32 %v4619, %v4705
      %4707 = vmatmul.bf16.gmra.mxu0 %v4480
      %v4708 = vpop.f32.mrf.mxu0
      %v4709 = vadd.f32 %v4619, %v4708
      %v4710 = vpop.f32.mrf.mxu0
      %v4711 = vadd.f32 %v4619, %v4710
      %4712 = vmatmul.bf16.gmra.mxu0 %v4482
      %v4713 = vpop.f32.mrf.mxu0
      %v4714 = vadd.f32 %v4619, %v4713
      %v4715 = vpop.f32.mrf.mxu0
      %v4716 = vadd.f32 %v4619, %v4715
      %4717 = vmatmul.bf16.gmra.mxu0 %v4484
      %v4718 = vpop.f32.mrf.mxu0
      %v4719 = vadd.f32 %v4619, %v4718
      %v4720 = vpop.f32.mrf.mxu0
      %v4721 = vadd.f32 %v4619, %v4720
      %4722 = vmatmul.bf16.gmra.mxu0 %v4486
      %v4723 = vpop.f32.mrf.mxu0
      %v4724 = vadd.f32 %v4619, %v4723
      %v4725 = vpop.f32.mrf.mxu0
      %v4726 = vadd.f32 %v4619, %v4725
      %4727 = vdwg.mxu0
      %v4728 = vmax.f32 %v4649, 0.0
      %v4729 = vmax.f32 %v4651, 0.0
      %v4730 = vmax.f32 %v4654, 0.0
      %v4731 = vmax.f32 %v4656, 0.0
      %v4732 = vmax.f32 %v4659, 0.0
      %v4733 = vmax.f32 %v4661, 0.0
      %v4734 = vmax.f32 %v4664, 0.0
      %v4735 = vmax.f32 %v4666, 0.0
      %v4736 = vmax.f32 %v4669, 0.0
      %v4737 = vmax.f32 %v4671, 0.0
      %v4738 = vmax.f32 %v4674, 0.0
      %v4739 = vmax.f32 %v4676, 0.0
      %v4740 = vmax.f32 %v4679, 0.0
      %v4741 = vmax.f32 %v4681, 0.0
      %v4742 = vmax.f32 %v4684, 0.0
      %v4743 = vmax.f32 %v4686, 0.0
      %v4744 = vmax.f32 %v4689, 0.0
      %v4745 = vmax.f32 %v4691, 0.0
      %v4746 = vmax.f32 %v4694, 0.0
      %v4747 = vmax.f32 %v4696, 0.0
      %v4748 = vmax.f32 %v4699, 0.0
      %v4749 = vmax.f32 %v4701, 0.0
      %v4750 = vmax.f32 %v4704, 0.0
      %v4751 = vmax.f32 %v4706, 0.0
      %v4752 = vmax.f32 %v4709, 0.0
      %v4753 = vmax.f32 %v4711, 0.0
      %v4754 = vmax.f32 %v4714, 0.0
      %v4755 = vmax.f32 %v4716, 0.0
      %v4756 = vmax.f32 %v4719, 0.0
      %v4757 = vmax.f32 %v4721, 0.0
      %v4758 = vmax.f32 %v4724, 0.0
      %v4759 = vmax.f32 %v4726, 0.0
      %v4760 = vpack.c.bf16 %v4580, %v4580
      %v4761 = vpack.c.bf16 %v4581, %v4581
      %v4762 = vpack.c.bf16 %v4582, %v4582
      %v4763 = vpack.c.bf16 %v4583, %v4583
      %v4764 = vpack.c.bf16 %v4584, %v4584
      %v4765 = vpack.c.bf16 %v4585, %v4585
      %v4766 = vpack.c.bf16 %v4586, %v4586
      %v4767 = vpack.c.bf16 %v4587, %v4587
      %v4768 = vpack.c.bf16 %v4588, %v4588
      %v4769 = vpack.c.bf16 %v4589, %v4589
      %v4770 = vpack.c.bf16 %v4590, %v4590
      %v4771 = vpack.c.bf16 %v4591, %v4591
      %v4772 = vpack.c.bf16 %v4592, %v4592
      %v4773 = vpack.c.bf16 %v4593, %v4593
      %v4774 = vpack.c.bf16 %v4594, %v4594
      %v4775 = vpack.c.bf16 %v4595, %v4595
      %v4776 = vpack.c.bf16 %v4596, %v4596
      %v4777 = vpack.c.bf16 %v4597, %v4597
      %v4778 = vpack.c.bf16 %v4598, %v4598
      %v4779 = vpack.c.bf16 %v4599, %v4599
      %v4780 = vpack.c.bf16 %v4600, %v4600
      %v4781 = vpack.c.bf16 %v4601, %v4601
      %v4782 = vpack.c.bf16 %v4602, %v4602
      %v4783 = vpack.c.bf16 %v4603, %v4603
      %v4784 = vpack.c.bf16 %v4604, %v4604
      %v4785 = vpack.c.bf16 %v4605, %v4605
      %v4786 = vpack.c.bf16 %v4606, %v4606
      %v4787 = vpack.c.bf16 %v4607, %v4607
      %v4788 = vpack.c.bf16 %v4608, %v4608
      %v4789 = vpack.c.bf16 %v4609, %v4609
      %v4790 = vpack.c.bf16 %v4610, %v4610
      %v4791 = vpack.c.bf16 %v4611, %v4611
      %v4824 = vunpack.c.l.b16 %v4760
      %v4825 = vunpack.c.l.b16 %v4761
      %v4826 = vunpack.c.l.b16 %v4762
      %v4827 = vunpack.c.l.b16 %v4763
      %v4828 = vunpack.c.l.b16 %v4764
      %v4829 = vunpack.c.l.b16 %v4765
      %v4830 = vunpack.c.l.b16 %v4766
      %v4831 = vunpack.c.l.b16 %v4767
      %v4832 = vunpack.c.l.b16 %v4768
      %v4833 = vunpack.c.l.b16 %v4769
      %v4834 = vunpack.c.l.b16 %v4770
      %v4835 = vunpack.c.l.b16 %v4771
      %v4836 = vunpack.c.l.b16 %v4772
      %v4837 = vunpack.c.l.b16 %v4773
      %v4838 = vunpack.c.l.b16 %v4774
      %v4839 = vunpack.c.l.b16 %v4775
      %v4840 = vunpack.c.l.b16 %v4776
      %v4841 = vunpack.c.l.b16 %v4777
      %v4842 = vunpack.c.l.b16 %v4778
      %v4843 = vunpack.c.l.b16 %v4779
      %v4844 = vunpack.c.l.b16 %v4780
      %v4845 = vunpack.c.l.b16 %v4781
      %v4846 = vunpack.c.l.b16 %v4782
      %v4847 = vunpack.c.l.b16 %v4783
      %v4848 = vunpack.c.l.b16 %v4784
      %v4849 = vunpack.c.l.b16 %v4785
      %v4850 = vunpack.c.l.b16 %v4786
      %v4851 = vunpack.c.l.b16 %v4787
      %v4852 = vunpack.c.l.b16 %v4788
      %v4853 = vunpack.c.l.b16 %v4789
      %v4854 = vunpack.c.l.b16 %v4790
      %v4855 = vunpack.c.l.b16 %v4791
      %v4856 = vpack.c.b16 %v4825, %v4824
      %v4857 = vpack.c.b16 %v4827, %v4826
      %v4858 = vpack.c.b16 %v4829, %v4828
      %v4859 = vpack.c.b16 %v4831, %v4830
      %v4860 = vpack.c.b16 %v4833, %v4832
      %v4861 = vpack.c.b16 %v4835, %v4834
      %v4862 = vpack.c.b16 %v4837, %v4836
      %v4863 = vpack.c.b16 %v4839, %v4838
      %v4864 = vpack.c.b16 %v4841, %v4840
      %v4865 = vpack.c.b16 %v4843, %v4842
      %v4866 = vpack.c.b16 %v4845, %v4844
      %v4867 = vpack.c.b16 %v4847, %v4846
      %v4868 = vpack.c.b16 %v4849, %v4848
      %v4869 = vpack.c.b16 %v4851, %v4850
      %v4870 = vpack.c.b16 %v4853, %v4852
      %v4871 = vpack.c.b16 %v4855, %v4854
      %v4873 = vshrl.u32 %v4856, 16
      %v4875 = vrot.slane %v4873, 7
      %v4876 = vshll.u32 %v4856, 16
      %v4878 = vor.u32 %v4875, %v4876
      %v4880 = vshrl.u32 %v4857, 16
      %v4882 = vrot.slane %v4880, 7
      %v4883 = vshll.u32 %v4857, 16
      %v4885 = vor.u32 %v4882, %v4883
      %v4887 = vshrl.u32 %v4858, 16
      %v4889 = vrot.slane %v4887, 7
      %v4890 = vshll.u32 %v4858, 16
      %v4892 = vor.u32 %v4889, %v4890
      %v4894 = vshrl.u32 %v4859, 16
      %v4896 = vrot.slane %v4894, 7
      %v4897 = vshll.u32 %v4859, 16
      %v4899 = vor.u32 %v4896, %v4897
      %v4901 = vshrl.u32 %v4860, 16
      %v4903 = vrot.slane %v4901, 7
      %v4904 = vshll.u32 %v4860, 16
      %v4906 = vor.u32 %v4903, %v4904
      %v4908 = vshrl.u32 %v4861, 16
      %v4910 = vrot.slane %v4908, 7
      %v4911 = vshll.u32 %v4861, 16
      %v4913 = vor.u32 %v4910, %v4911
      %v4915 = vshrl.u32 %v4862, 16
      %v4917 = vrot.slane %v4915, 7
      %v4918 = vshll.u32 %v4862, 16
      %v4920 = vor.u32 %v4917, %v4918
      %v4922 = vshrl.u32 %v4863, 16
      %v4924 = vrot.slane %v4922, 7
      %v4925 = vshll.u32 %v4863, 16
      %v4927 = vor.u32 %v4924, %v4925
      %v4929 = vshrl.u32 %v4864, 16
      %v4931 = vrot.slane %v4929, 7
      %v4932 = vshll.u32 %v4864, 16
      %v4934 = vor.u32 %v4931, %v4932
      %v4936 = vshrl.u32 %v4865, 16
      %v4938 = vrot.slane %v4936, 7
      %v4939 = vshll.u32 %v4865, 16
      %v4941 = vor.u32 %v4938, %v4939
      %v4943 = vshrl.u32 %v4866, 16
      %v4945 = vrot.slane %v4943, 7
      %v4946 = vshll.u32 %v4866, 16
      %v4948 = vor.u32 %v4945, %v4946
      %v4950 = vshrl.u32 %v4867, 16
      %v4952 = vrot.slane %v4950, 7
      %v4953 = vshll.u32 %v4867, 16
      %v4955 = vor.u32 %v4952, %v4953
      %v4957 = vshrl.u32 %v4868, 16
      %v4959 = vrot.slane %v4957, 7
      %v4960 = vshll.u32 %v4868, 16
      %v4962 = vor.u32 %v4959, %v4960
      %v4964 = vshrl.u32 %v4869, 16
      %v4966 = vrot.slane %v4964, 7
      %v4967 = vshll.u32 %v4869, 16
      %v4969 = vor.u32 %v4966, %v4967
      %v4971 = vshrl.u32 %v4870, 16
      %v4973 = vrot.slane %v4971, 7
      %v4974 = vshll.u32 %v4870, 16
      %v4976 = vor.u32 %v4973, %v4974
      %v4978 = vshrl.u32 %v4871, 16
      %v4980 = vrot.slane %v4978, 7
      %v4981 = vshll.u32 %v4871, 16
      %v4983 = vor.u32 %v4980, %v4981
      %v5016 = vsel %vm860, 0, %v4878
      %v5017 = vsel %vm860, 0, %v4885
      %v5018 = vsel %vm860, 0, %v4892
      %v5019 = vsel %vm860, 0, %v4899
      %v5020 = vsel %vm860, 0, %v4906
      %v5021 = vsel %vm860, 0, %v4913
      %v5022 = vsel %vm860, 0, %v4920
      %v5023 = vsel %vm860, 0, %v4927
      %v5024 = vsel %vm860, 0, %v4934
      %v5025 = vsel %vm860, 0, %v4941
      %v5026 = vsel %vm860, 0, %v4948
      %v5027 = vsel %vm860, 0, %v4955
      %v5028 = vsel %vm860, 0, %v4962
      %v5029 = vsel %vm860, 0, %v4969
      %v5030 = vsel %vm860, 0, %v4976
      %v5031 = vsel %vm860, 0, %v4983
      %v5032 = vsel %vm860, %v4875, 0
      %v5033 = vsel %vm860, %v4882, 0
      %v5034 = vsel %vm860, %v4889, 0
      %v5035 = vsel %vm860, %v4896, 0
      %v5036 = vsel %vm860, %v4903, 0
      %v5037 = vsel %vm860, %v4910, 0
      %v5038 = vsel %vm860, %v4917, 0
      %v5039 = vsel %vm860, %v4924, 0
      %v5040 = vsel %vm860, %v4931, 0
      %v5041 = vsel %vm860, %v4938, 0
      %v5042 = vsel %vm860, %v4945, 0
      %v5043 = vsel %vm860, %v4952, 0
      %v5044 = vsel %vm860, %v4959, 0
      %v5045 = vsel %vm860, %v4966, 0
      %v5046 = vsel %vm860, %v4973, 0
      %v5047 = vsel %vm860, %v4980, 0
      %v5049 = vshrl.u32 %v5016, 16
      %v5051 = vshll.u32 %v5016, 16
      %v5053 = vrot.slane %v5051, 1
      %v5054 = vor.u32 %v5049, %v5053
      %v5056 = vshll.u32 %v5032, 16
      %v5058 = vrot.slane %v5056, 1
      %v5059 = vsel %vm895, %v5054, %v5058
      %v5061 = vshrl.u32 %v5017, 16
      %v5063 = vshll.u32 %v5017, 16
      %v5065 = vrot.slane %v5063, 1
      %v5066 = vor.u32 %v5061, %v5065
      %v5068 = vshll.u32 %v5033, 16
      %v5070 = vrot.slane %v5068, 1
      %v5071 = vsel %vm895, %v5066, %v5070
      %v5073 = vshrl.u32 %v5018, 16
      %v5075 = vshll.u32 %v5018, 16
      %v5077 = vrot.slane %v5075, 1
      %v5078 = vor.u32 %v5073, %v5077
      %v5080 = vshll.u32 %v5034, 16
      %v5082 = vrot.slane %v5080, 1
      %v5083 = vsel %vm895, %v5078, %v5082
      %v5085 = vshrl.u32 %v5019, 16
      %v5087 = vshll.u32 %v5019, 16
      %v5089 = vrot.slane %v5087, 1
      %v5090 = vor.u32 %v5085, %v5089
      %v5092 = vshll.u32 %v5035, 16
      %v5094 = vrot.slane %v5092, 1
      %v5095 = vsel %vm895, %v5090, %v5094
      %v5097 = vshrl.u32 %v5020, 16
      %v5099 = vshll.u32 %v5020, 16
      %v5101 = vrot.slane %v5099, 1
      %v5102 = vor.u32 %v5097, %v5101
      %v5104 = vshll.u32 %v5036, 16
      %v5106 = vrot.slane %v5104, 1
      %v5107 = vsel %vm895, %v5102, %v5106
      %v5109 = vshrl.u32 %v5021, 16
      %v5111 = vshll.u32 %v5021, 16
      %v5113 = vrot.slane %v5111, 1
      %v5114 = vor.u32 %v5109, %v5113
      %v5116 = vshll.u32 %v5037, 16
      %v5118 = vrot.slane %v5116, 1
      %v5119 = vsel %vm895, %v5114, %v5118
      %v5121 = vshrl.u32 %v5022, 16
      %v5123 = vshll.u32 %v5022, 16
      %v5125 = vrot.slane %v5123, 1
      %v5126 = vor.u32 %v5121, %v5125
      %v5128 = vshll.u32 %v5038, 16
      %v5130 = vrot.slane %v5128, 1
      %v5131 = vsel %vm895, %v5126, %v5130
      %v5133 = vshrl.u32 %v5023, 16
      %v5135 = vshll.u32 %v5023, 16
      %v5137 = vrot.slane %v5135, 1
      %v5138 = vor.u32 %v5133, %v5137
      %v5140 = vshll.u32 %v5039, 16
      %v5142 = vrot.slane %v5140, 1
      %v5143 = vsel %vm895, %v5138, %v5142
      %v5145 = vshrl.u32 %v5024, 16
      %v5147 = vshll.u32 %v5024, 16
      %v5149 = vrot.slane %v5147, 1
      %v5150 = vor.u32 %v5145, %v5149
      %v5152 = vshll.u32 %v5040, 16
      %v5154 = vrot.slane %v5152, 1
      %v5155 = vsel %vm895, %v5150, %v5154
      %v5157 = vshrl.u32 %v5025, 16
      %v5159 = vshll.u32 %v5025, 16
      %v5161 = vrot.slane %v5159, 1
      %v5162 = vor.u32 %v5157, %v5161
      %v5164 = vshll.u32 %v5041, 16
      %v5166 = vrot.slane %v5164, 1
      %v5167 = vsel %vm895, %v5162, %v5166
      %v5169 = vshrl.u32 %v5026, 16
      %v5171 = vshll.u32 %v5026, 16
      %v5173 = vrot.slane %v5171, 1
      %v5174 = vor.u32 %v5169, %v5173
      %v5176 = vshll.u32 %v5042, 16
      %v5178 = vrot.slane %v5176, 1
      %v5179 = vsel %vm895, %v5174, %v5178
      %v5181 = vshrl.u32 %v5027, 16
      %v5183 = vshll.u32 %v5027, 16
      %v5185 = vrot.slane %v5183, 1
      %v5186 = vor.u32 %v5181, %v5185
      %v5188 = vshll.u32 %v5043, 16
      %v5190 = vrot.slane %v5188, 1
      %v5191 = vsel %vm895, %v5186, %v5190
      %v5193 = vshrl.u32 %v5028, 16
      %v5195 = vshll.u32 %v5028, 16
      %v5197 = vrot.slane %v5195, 1
      %v5198 = vor.u32 %v5193, %v5197
      %v5200 = vshll.u32 %v5044, 16
      %v5202 = vrot.slane %v5200, 1
      %v5203 = vsel %vm895, %v5198, %v5202
      %v5205 = vshrl.u32 %v5029, 16
      %v5207 = vshll.u32 %v5029, 16
      %v5209 = vrot.slane %v5207, 1
      %v5210 = vor.u32 %v5205, %v5209
      %v5212 = vshll.u32 %v5045, 16
      %v5214 = vrot.slane %v5212, 1
      %v5215 = vsel %vm895, %v5210, %v5214
      %v5217 = vshrl.u32 %v5030, 16
      %v5219 = vshll.u32 %v5030, 16
      %v5221 = vrot.slane %v5219, 1
      %v5222 = vor.u32 %v5217, %v5221
      %v5224 = vshll.u32 %v5046, 16
      %v5226 = vrot.slane %v5224, 1
      %v5227 = vsel %vm895, %v5222, %v5226
      %5228 = vrot.lane.b32.xlu0 %v5059, 32
      %v5229 = vpop.permute.xlu0 %5228
      %5230 = vrot.lane.b32.xlu0 %v5071, 32
      %v5231 = vpop.permute.xlu0 %5230
      %5232 = vrot.lane.b32.xlu0 %v5083, 32
      %v5233 = vpop.permute.xlu0 %5232
      %5234 = vrot.lane.b32.xlu0 %v5095, 32
      %v5235 = vpop.permute.xlu0 %5234
      %5236 = vrot.lane.b32.xlu0 %v5107, 32
      %v5237 = vpop.permute.xlu0 %5236
      %5238 = vrot.lane.b32.xlu0 %v5119, 32
      %v5239 = vpop.permute.xlu0 %5238
      %5240 = vrot.lane.b32.xlu0 %v5131, 32
      %v5241 = vpop.permute.xlu0 %5240
      %5242 = vrot.lane.b32.xlu0 %v5143, 32
      %v5243 = vpop.permute.xlu0 %5242
      %5244 = vrot.lane.b32.xlu0 %v5155, 32
      %v5245 = vpop.permute.xlu0 %5244
      %5246 = vrot.lane.b32.xlu0 %v5167, 32
      %v5247 = vpop.permute.xlu0 %5246
      %5248 = vrot.lane.b32.xlu0 %v5179, 32
      %v5249 = vpop.permute.xlu0 %5248
      %5250 = vrot.lane.b32.xlu0 %v5191, 32
      %v5251 = vpop.permute.xlu0 %5250
      %5252 = vrot.lane.b32.xlu0 %v5203, 32
      %v5253 = vpop.permute.xlu0 %5252
      %5254 = vrot.lane.b32.xlu0 %v5215, 32
      %v5255 = vpop.permute.xlu0 %5254
      %5256 = vrot.lane.b32.xlu0 %v5227, 32
      %v5257 = vpop.permute.xlu0 %5256
      %v5288 = vrot.slane %v5016, 1
      %v5289 = vrot.slane %v5032, 1
      %v5290 = vsel %vm1152, %v5288, %v5289
      %v5291 = vrot.slane %v5017, 1
      %v5292 = vrot.slane %v5033, 1
      %v5293 = vsel %vm1152, %v5291, %v5292
      %v5294 = vrot.slane %v5018, 1
      %v5295 = vrot.slane %v5034, 1
      %v5296 = vsel %vm1152, %v5294, %v5295
      %v5297 = vrot.slane %v5019, 1
      %v5298 = vrot.slane %v5035, 1
      %v5299 = vsel %vm1152, %v5297, %v5298
      %v5300 = vrot.slane %v5020, 1
      %v5301 = vrot.slane %v5036, 1
      %v5302 = vsel %vm1152, %v5300, %v5301
      %v5303 = vrot.slane %v5021, 1
      %v5304 = vrot.slane %v5037, 1
      %v5305 = vsel %vm1152, %v5303, %v5304
      %v5306 = vrot.slane %v5022, 1
      %v5307 = vrot.slane %v5038, 1
      %v5308 = vsel %vm1152, %v5306, %v5307
      %v5309 = vrot.slane %v5023, 1
      %v5310 = vrot.slane %v5039, 1
      %v5311 = vsel %vm1152, %v5309, %v5310
      %v5312 = vrot.slane %v5024, 1
      %v5313 = vrot.slane %v5040, 1
      %v5314 = vsel %vm1152, %v5312, %v5313
      %v5315 = vrot.slane %v5025, 1
      %v5316 = vrot.slane %v5041, 1
      %v5317 = vsel %vm1152, %v5315, %v5316
      %v5318 = vrot.slane %v5026, 1
      %v5319 = vrot.slane %v5042, 1
      %v5320 = vsel %vm1152, %v5318, %v5319
      %v5321 = vrot.slane %v5027, 1
      %v5322 = vrot.slane %v5043, 1
      %v5323 = vsel %vm1152, %v5321, %v5322
      %v5324 = vrot.slane %v5028, 1
      %v5325 = vrot.slane %v5044, 1
      %v5326 = vsel %vm1152, %v5324, %v5325
      %v5327 = vrot.slane %v5029, 1
      %v5328 = vrot.slane %v5045, 1
      %v5329 = vsel %vm1152, %v5327, %v5328
      %v5330 = vrot.slane %v5030, 1
      %v5331 = vrot.slane %v5046, 1
      %v5332 = vsel %vm1152, %v5330, %v5331
      %5333 = vrot.lane.b32.xlu0 %v5290, 64
      %v5334 = vpop.permute.xlu0 %5333
      %5335 = vrot.lane.b32.xlu0 %v5293, 64
      %v5336 = vpop.permute.xlu0 %5335
      %5337 = vrot.lane.b32.xlu0 %v5296, 64
      %v5338 = vpop.permute.xlu0 %5337
      %5339 = vrot.lane.b32.xlu0 %v5299, 64
      %v5340 = vpop.permute.xlu0 %5339
      %5341 = vrot.lane.b32.xlu0 %v5302, 64
      %v5342 = vpop.permute.xlu0 %5341
      %5343 = vrot.lane.b32.xlu0 %v5305, 64
      %v5344 = vpop.permute.xlu0 %5343
      %5345 = vrot.lane.b32.xlu0 %v5308, 64
      %v5346 = vpop.permute.xlu0 %5345
      %5347 = vrot.lane.b32.xlu0 %v5311, 64
      %v5348 = vpop.permute.xlu0 %5347
      %5349 = vrot.lane.b32.xlu0 %v5314, 64
      %v5350 = vpop.permute.xlu0 %5349
      %5351 = vrot.lane.b32.xlu0 %v5317, 64
      %v5352 = vpop.permute.xlu0 %5351
      %5353 = vrot.lane.b32.xlu0 %v5320, 64
      %v5354 = vpop.permute.xlu0 %5353
      %5355 = vrot.lane.b32.xlu0 %v5323, 64
      %v5356 = vpop.permute.xlu0 %5355
      %5357 = vrot.lane.b32.xlu0 %v5326, 64
      %v5358 = vpop.permute.xlu0 %5357
      %5359 = vrot.lane.b32.xlu0 %v5329, 64
      %v5360 = vpop.permute.xlu0 %5359
      %5361 = vrot.lane.b32.xlu0 %v5332, 64
      %v5362 = vpop.permute.xlu0 %5361
      %5364 = vrot.lane.b32.xlu0 %v5016, 96
      %v5365 = vpop.permute.xlu0 %5364
      %5366 = vrot.lane.b32.xlu0 %v5017, 96
      %v5367 = vpop.permute.xlu0 %5366
      %5368 = vrot.lane.b32.xlu0 %v5018, 96
      %v5369 = vpop.permute.xlu0 %5368
      %5370 = vrot.lane.b32.xlu0 %v5019, 96
      %v5371 = vpop.permute.xlu0 %5370
      %5372 = vrot.lane.b32.xlu0 %v5020, 96
      %v5373 = vpop.permute.xlu0 %5372
      %5374 = vrot.lane.b32.xlu0 %v5021, 96
      %v5375 = vpop.permute.xlu0 %5374
      %5376 = vrot.lane.b32.xlu0 %v5022, 96
      %v5377 = vpop.permute.xlu0 %5376
      %5378 = vrot.lane.b32.xlu0 %v5023, 96
      %v5379 = vpop.permute.xlu0 %5378
      %5380 = vrot.lane.b32.xlu0 %v5024, 96
      %v5381 = vpop.permute.xlu0 %5380
      %5382 = vrot.lane.b32.xlu0 %v5025, 96
      %v5383 = vpop.permute.xlu0 %5382
      %5384 = vrot.lane.b32.xlu0 %v5026, 96
      %v5385 = vpop.permute.xlu0 %5384
      %5386 = vrot.lane.b32.xlu0 %v5027, 96
      %v5387 = vpop.permute.xlu0 %5386
      %5388 = vrot.lane.b32.xlu0 %v5028, 96
      %v5389 = vpop.permute.xlu0 %5388
      %5390 = vrot.lane.b32.xlu0 %v5029, 96
      %v5391 = vpop.permute.xlu0 %5390
      %5392 = vrot.lane.b32.xlu0 %v5030, 96
      %v5393 = vpop.permute.xlu0 %5392
      %5394 = vrot.lane.b32.xlu0 %v5031, 96
      %v5395 = vpop.permute.xlu0 %5394
      %v5397 = vshrl.u32 %v5031, 16
      %v5399 = vshll.u32 %v5031, 16
      %v5401 = vrot.slane %v5399, 1
      %v5402 = vor.u32 %v5397, %v5401
      %v5404 = vshll.u32 %v5047, 16
      %v5406 = vrot.slane %v5404, 1
      %v5407 = vsel %vm895, %v5402, %v5406
      %v5409 = vrot.slane %v5031, 1
      %v5410 = vrot.slane %v5047, 1
      %v5411 = vsel %vm1152, %v5409, %v5410
      %5412 = vrot.lane.b32.xlu0 %v5290, 32
      %v5413 = vpop.permute.xlu0 %5412
      %5414 = vrot.lane.b32.xlu0 %v5293, 32
      %v5415 = vpop.permute.xlu0 %5414
      %5416 = vrot.lane.b32.xlu0 %v5296, 32
      %v5417 = vpop.permute.xlu0 %5416
      %5418 = vrot.lane.b32.xlu0 %v5299, 32
      %v5419 = vpop.permute.xlu0 %5418
      %5420 = vrot.lane.b32.xlu0 %v5302, 32
      %v5421 = vpop.permute.xlu0 %5420
      %5422 = vrot.lane.b32.xlu0 %v5305, 32
      %v5423 = vpop.permute.xlu0 %5422
      %5424 = vrot.lane.b32.xlu0 %v5308, 32
      %v5425 = vpop.permute.xlu0 %5424
      %5426 = vrot.lane.b32.xlu0 %v5311, 32
      %v5427 = vpop.permute.xlu0 %5426
      %5428 = vrot.lane.b32.xlu0 %v5314, 32
      %v5429 = vpop.permute.xlu0 %5428
      %5430 = vrot.lane.b32.xlu0 %v5317, 32
      %v5431 = vpop.permute.xlu0 %5430
      %5432 = vrot.lane.b32.xlu0 %v5320, 32
      %v5433 = vpop.permute.xlu0 %5432
      %5434 = vrot.lane.b32.xlu0 %v5323, 32
      %v5435 = vpop.permute.xlu0 %5434
      %5436 = vrot.lane.b32.xlu0 %v5326, 32
      %v5437 = vpop.permute.xlu0 %5436
      %5438 = vrot.lane.b32.xlu0 %v5329, 32
      %v5439 = vpop.permute.xlu0 %5438
      %5440 = vrot.lane.b32.xlu0 %v5332, 32
      %v5441 = vpop.permute.xlu0 %5440
      %5442 = vrot.lane.b32.xlu0 %v5411, 32
      %v5443 = vpop.permute.xlu0 %5442
      %5444 = vrot.lane.b32.xlu0 %v5017, 64
      %v5445 = vpop.permute.xlu0 %5444
      %5446 = vrot.lane.b32.xlu0 %v5018, 64
      %v5447 = vpop.permute.xlu0 %5446
      %5448 = vrot.lane.b32.xlu0 %v5019, 64
      %v5449 = vpop.permute.xlu0 %5448
      %5450 = vrot.lane.b32.xlu0 %v5020, 64
      %v5451 = vpop.permute.xlu0 %5450
      %5452 = vrot.lane.b32.xlu0 %v5021, 64
      %v5453 = vpop.permute.xlu0 %5452
      %5454 = vrot.lane.b32.xlu0 %v5022, 64
      %v5455 = vpop.permute.xlu0 %5454
      %5456 = vrot.lane.b32.xlu0 %v5023, 64
      %v5457 = vpop.permute.xlu0 %5456
      %5458 = vrot.lane.b32.xlu0 %v5024, 64
      %v5459 = vpop.permute.xlu0 %5458
      %5460 = vrot.lane.b32.xlu0 %v5025, 64
      %v5461 = vpop.permute.xlu0 %5460
      %5462 = vrot.lane.b32.xlu0 %v5026, 64
      %v5463 = vpop.permute.xlu0 %5462
      %5464 = vrot.lane.b32.xlu0 %v5027, 64
      %v5465 = vpop.permute.xlu0 %5464
      %5466 = vrot.lane.b32.xlu0 %v5028, 64
      %v5467 = vpop.permute.xlu0 %5466
      %5468 = vrot.lane.b32.xlu0 %v5029, 64
      %v5469 = vpop.permute.xlu0 %5468
      %5470 = vrot.lane.b32.xlu0 %v5030, 64
      %v5471 = vpop.permute.xlu0 %5470
      %5472 = vrot.lane.b32.xlu0 %v5031, 64
      %v5473 = vpop.permute.xlu0 %5472
      %5474 = vrot.lane.b32.xlu0 %v5071, 96
      %v5475 = vpop.permute.xlu0 %5474
      %5476 = vrot.lane.b32.xlu0 %v5083, 96
      %v5477 = vpop.permute.xlu0 %5476
      %5478 = vrot.lane.b32.xlu0 %v5095, 96
      %v5479 = vpop.permute.xlu0 %5478
      %5480 = vrot.lane.b32.xlu0 %v5107, 96
      %v5481 = vpop.permute.xlu0 %5480
      %5482 = vrot.lane.b32.xlu0 %v5119, 96
      %v5483 = vpop.permute.xlu0 %5482
      %5484 = vrot.lane.b32.xlu0 %v5131, 96
      %v5485 = vpop.permute.xlu0 %5484
      %5486 = vrot.lane.b32.xlu0 %v5143, 96
      %v5487 = vpop.permute.xlu0 %5486
      %5488 = vrot.lane.b32.xlu0 %v5155, 96
      %v5489 = vpop.permute.xlu0 %5488
      %5490 = vrot.lane.b32.xlu0 %v5167, 96
      %v5491 = vpop.permute.xlu0 %5490
      %5492 = vrot.lane.b32.xlu0 %v5179, 96
      %v5493 = vpop.permute.xlu0 %5492
      %5494 = vrot.lane.b32.xlu0 %v5191, 96
      %v5495 = vpop.permute.xlu0 %5494
      %5496 = vrot.lane.b32.xlu0 %v5203, 96
      %v5497 = vpop.permute.xlu0 %5496
      %5498 = vrot.lane.b32.xlu0 %v5215, 96
      %v5499 = vpop.permute.xlu0 %5498
      %5500 = vrot.lane.b32.xlu0 %v5227, 96
      %v5501 = vpop.permute.xlu0 %5500
      %5502 = vrot.lane.b32.xlu0 %v5407, 96
      %v5503 = vpop.permute.xlu0 %5502
      %v5505 = vsel %vm1673, %v5016, %v5229
      %v5507 = vsel %vm1673, %v5017, %v5231
      %v5509 = vsel %vm1673, %v5018, %v5233
      %v5511 = vsel %vm1673, %v5019, %v5235
      %v5513 = vsel %vm1673, %v5020, %v5237
      %v5515 = vsel %vm1673, %v5021, %v5239
      %v5517 = vsel %vm1673, %v5022, %v5241
      %v5519 = vsel %vm1673, %v5023, %v5243
      %v5521 = vsel %vm1673, %v5024, %v5245
      %v5523 = vsel %vm1673, %v5025, %v5247
      %v5525 = vsel %vm1673, %v5026, %v5249
      %v5527 = vsel %vm1673, %v5027, %v5251
      %v5529 = vsel %vm1673, %v5028, %v5253
      %v5531 = vsel %vm1673, %v5029, %v5255
      %v5533 = vsel %vm1673, %v5030, %v5257
      %v5535 = vsel %vm2672, %v5505, %v5334
      %v5537 = vsel %vm2672, %v5507, %v5336
      %v5539 = vsel %vm2672, %v5509, %v5338
      %v5541 = vsel %vm2672, %v5511, %v5340
      %v5543 = vsel %vm2672, %v5513, %v5342
      %v5545 = vsel %vm2672, %v5515, %v5344
      %v5547 = vsel %vm2672, %v5517, %v5346
      %v5549 = vsel %vm2672, %v5519, %v5348
      %v5551 = vsel %vm2672, %v5521, %v5350
      %v5553 = vsel %vm2672, %v5523, %v5352
      %v5555 = vsel %vm2672, %v5525, %v5354
      %v5557 = vsel %vm2672, %v5527, %v5356
      %v5559 = vsel %vm2672, %v5529, %v5358
      %v5561 = vsel %vm2672, %v5531, %v5360
      %v5563 = vsel %vm2672, %v5533, %v5362
      %v5565 = vsel %vm2705, %v2674, %v5365
      %v5568 = vsel %vm2705, %v5535, %v5367
      %v5571 = vsel %vm2705, %v5537, %v5369
      %v5574 = vsel %vm2705, %v5539, %v5371
      %v5577 = vsel %vm2705, %v5541, %v5373
      %v5580 = vsel %vm2705, %v5543, %v5375
      %v5583 = vsel %vm2705, %v5545, %v5377
      %v5586 = vsel %vm2705, %v5547, %v5379
      %v5589 = vsel %vm2705, %v5549, %v5381
      %v5592 = vsel %vm2705, %v5551, %v5383
      %v5595 = vsel %vm2705, %v5553, %v5385
      %v5598 = vsel %vm2705, %v5555, %v5387
      %v5601 = vsel %vm2705, %v5557, %v5389
      %v5604 = vsel %vm2705, %v5559, %v5391
      %v5607 = vsel %vm2705, %v5561, %v5393
      %v5610 = vsel %vm2705, %v5563, %v5395
      %v5614 = vsel %vm1673, %v5059, %v5413
      %v5617 = vsel %vm1673, %v5071, %v5415
      %v5620 = vsel %vm1673, %v5083, %v5417
      %v5623 = vsel %vm1673, %v5095, %v5419
      %v5626 = vsel %vm1673, %v5107, %v5421
      %v5629 = vsel %vm1673, %v5119, %v5423
      %v5632 = vsel %vm1673, %v5131, %v5425
      %v5635 = vsel %vm1673, %v5143, %v5427
      %v5638 = vsel %vm1673, %v5155, %v5429
      %v5641 = vsel %vm1673, %v5167, %v5431
      %v5644 = vsel %vm1673, %v5179, %v5433
      %v5647 = vsel %vm1673, %v5191, %v5435
      %v5650 = vsel %vm1673, %v5203, %v5437
      %v5653 = vsel %vm1673, %v5215, %v5439
      %v5656 = vsel %vm1673, %v5227, %v5441
      %v5659 = vsel %vm1673, %v5407, %v5443
      %v5661 = vsel %vm2672, %v5614, %v5445
      %v5663 = vsel %vm2672, %v5617, %v5447
      %v5665 = vsel %vm2672, %v5620, %v5449
      %v5667 = vsel %vm2672, %v5623, %v5451
      %v5669 = vsel %vm2672, %v5626, %v5453
      %v5671 = vsel %vm2672, %v5629, %v5455
      %v5673 = vsel %vm2672, %v5632, %v5457
      %v5675 = vsel %vm2672, %v5635, %v5459
      %v5677 = vsel %vm2672, %v5638, %v5461
      %v5679 = vsel %vm2672, %v5641, %v5463
      %v5681 = vsel %vm2672, %v5644, %v5465
      %v5683 = vsel %vm2672, %v5647, %v5467
      %v5685 = vsel %vm2672, %v5650, %v5469
      %v5687 = vsel %vm2672, %v5653, %v5471
      %v5689 = vsel %vm2672, %v5656, %v5473
      %v5690 = vsel %vm2672, %v5659, %v2607
      %v5692 = vsel %vm2705, %v5661, %v5475
      %v5695 = vsel %vm2705, %v5663, %v5477
      %v5698 = vsel %vm2705, %v5665, %v5479
      %v5701 = vsel %vm2705, %v5667, %v5481
      %v5704 = vsel %vm2705, %v5669, %v5483
      %v5707 = vsel %vm2705, %v5671, %v5485
      %v5710 = vsel %vm2705, %v5673, %v5487
      %v5713 = vsel %vm2705, %v5675, %v5489
      %v5716 = vsel %vm2705, %v5677, %v5491
      %v5719 = vsel %vm2705, %v5679, %v5493
      %v5722 = vsel %vm2705, %v5681, %v5495
      %v5725 = vsel %vm2705, %v5683, %v5497
      %v5728 = vsel %vm2705, %v5685, %v5499
      %v5731 = vsel %vm2705, %v5687, %v5501
      %v5734 = vsel %vm2705, %v5689, %v5503
      %v5736 = vsel %vm2705, %v5690, %v2639
      %v5738 = vld [vmem:[%s8] sm:$0xf]
      %v5739 = vld [vmem:[%s8 + $0x4] sm:$0xf]
      %v5740 = vld [vmem:[%s8 + $0x8] sm:$0xf]
      %v5741 = vld [vmem:[%s8 + $0xc] sm:$0xf]
      %v5742 = vld [vmem:[%s8 + $0x10] sm:$0xf]
      %v5743 = vld [vmem:[%s8 + $0x14] sm:$0xf]
      %v5744 = vld [vmem:[%s8 + $0x18] sm:$0xf]
      %v5745 = vld [vmem:[%s8 + $0x1c] sm:$0xf]
      %v5746 = vld [vmem:[%s8 + $0x20] sm:$0xf]
      %v5747 = vld [vmem:[%s8 + $0x24] sm:$0xf]
      %v5748 = vld [vmem:[%s8 + $0x28] sm:$0xf]
      %v5749 = vld [vmem:[%s8 + $0x2c] sm:$0xf]
      %v5750 = vld [vmem:[%s8 + $0x30] sm:$0xf]
      %v5751 = vld [vmem:[%s8 + $0x34] sm:$0xf]
      %v5752 = vld [vmem:[%s8 + $0x38] sm:$0xf]
      %v5753 = vld [vmem:[%s8 + $0x3c] sm:$0xf]
      %v5754 = vld [vmem:[%s8 + $0x40] sm:$0xf]
      %v5755 = vld [vmem:[%s8 + $0x44] sm:$0xf]
      %v5756 = vld [vmem:[%s8 + $0x48] sm:$0xf]
      %v5757 = vld [vmem:[%s8 + $0x4c] sm:$0xf]
      %v5758 = vld [vmem:[%s8 + $0x50] sm:$0xf]
      %v5759 = vld [vmem:[%s8 + $0x54] sm:$0xf]
      %v5760 = vld [vmem:[%s8 + $0x58] sm:$0xf]
      %v5761 = vld [vmem:[%s8 + $0x5c] sm:$0xf]
      %v5762 = vld [vmem:[%s8 + $0x60] sm:$0xf]
      %v5763 = vld [vmem:[%s8 + $0x64] sm:$0xf]
      %v5764 = vld [vmem:[%s8 + $0x68] sm:$0xf]
      %v5765 = vld [vmem:[%s8 + $0x6c] sm:$0xf]
      %v5766 = vld [vmem:[%s8 + $0x70] sm:$0xf]
      %v5767 = vld [vmem:[%s8 + $0x74] sm:$0xf]
      %v5768 = vld [vmem:[%s8 + $0x78] sm:$0xf]
      %v5769 = vld [vmem:[%s8 + $0x7c] sm:$0xf]
      %v5770 = vld [vmem:[%s8 + $0x80] sm:$0xf]
      %v5771 = vld [vmem:[%s8 + $0x84] sm:$0xf]
      %v5772 = vld [vmem:[%s8 + $0x88] sm:$0xf]
      %v5773 = vld [vmem:[%s8 + $0x8c] sm:$0xf]
      %v5774 = vld [vmem:[%s9] sm:$0x1]
      %v5776 = vperm.slane %v5774, 0
      %v5814 = vunpack.c.l.b16 %v5738
      %v5815 = vunpack.c.l.b16 %v5739
      %v5816 = vunpack.c.l.b16 %v5740
      %v5817 = vunpack.c.l.b16 %v5741
      %v5818 = vunpack.c.l.b16 %v5742
      %v5819 = vunpack.c.l.b16 %v5743
      %v5820 = vunpack.c.l.b16 %v5744
      %v5821 = vunpack.c.l.b16 %v5745
      %v5822 = vunpack.c.l.b16 %v5746
      %v5823 = vunpack.c.l.b16 %v5747
      %v5824 = vunpack.c.l.b16 %v5748
      %v5825 = vunpack.c.l.b16 %v5749
      %v5826 = vunpack.c.l.b16 %v5750
      %v5827 = vunpack.c.l.b16 %v5751
      %v5828 = vunpack.c.l.b16 %v5752
      %v5829 = vunpack.c.l.b16 %v5753
      %v5830 = vunpack.c.l.b16 %v5754
      %v5831 = vunpack.c.l.b16 %v5755
      %v5832 = vunpack.c.l.b16 %v5756
      %v5833 = vunpack.c.l.b16 %v5757
      %v5834 = vunpack.c.l.b16 %v5758
      %v5835 = vunpack.c.l.b16 %v5759
      %v5836 = vunpack.c.l.b16 %v5760
      %v5837 = vunpack.c.l.b16 %v5761
      %v5838 = vunpack.c.l.b16 %v5762
      %v5839 = vunpack.c.l.b16 %v5763
      %v5840 = vunpack.c.l.b16 %v5764
      %v5841 = vunpack.c.l.b16 %v5765
      %v5842 = vunpack.c.l.b16 %v5766
      %v5843 = vunpack.c.l.b16 %v5767
      %v5844 = vunpack.c.l.b16 %v5768
      %v5845 = vunpack.c.l.b16 %v5769
      %v5846 = vunpack.c.l.b16 %v5770
      %v5847 = vunpack.c.l.b16 %v5771
      %v5848 = vunpack.c.l.b16 %v5772
      %v5849 = vunpack.c.l.b16 %v5773
      %v5850 = vpack.c.b16 %v5815, %v5814
      %v5851 = vpack.c.b16 %v5817, %v5816
      %v5852 = vpack.c.b16 %v5819, %v5818
      %v5853 = vpack.c.b16 %v5821, %v5820
      %v5854 = vpack.c.b16 %v5823, %v5822
      %v5855 = vpack.c.b16 %v5825, %v5824
      %v5856 = vpack.c.b16 %v5827, %v5826
      %v5857 = vpack.c.b16 %v5829, %v5828
      %v5858 = vpack.c.b16 %v5831, %v5830
      %v5859 = vpack.c.b16 %v5833, %v5832
      %v5860 = vpack.c.b16 %v5835, %v5834
      %v5861 = vpack.c.b16 %v5837, %v5836
      %v5862 = vpack.c.b16 %v5839, %v5838
      %v5863 = vpack.c.b16 %v5841, %v5840
      %v5864 = vpack.c.b16 %v5843, %v5842
      %v5865 = vpack.c.b16 %v5845, %v5844
      %v5866 = vpack.c.b16 %v5847, %v5846
      %v5867 = vpack.c.b16 %v5849, %v5848
      %v5887 = vsel %vm1673, %v5293, 0
      %v5890 = vsel %vm1673, %v5296, 0
      %v5893 = vsel %vm1673, %v5299, 0
      %v5896 = vsel %vm1673, %v5302, 0
      %v5899 = vsel %vm1673, %v5305, 0
      %v5902 = vsel %vm1673, %v5308, 0
      %v5905 = vsel %vm1673, %v5311, 0
      %v5908 = vsel %vm1673, %v5314, 0
      %v5911 = vsel %vm1673, %v5317, 0
      %v5914 = vsel %vm1673, %v5320, 0
      %v5917 = vsel %vm1673, %v5323, 0
      %v5920 = vsel %vm1673, %v5326, 0
      %v5923 = vsel %vm1673, %v5329, 0
      %v5926 = vsel %vm1673, %v5332, 0
      %v5929 = vsel %vm1673, %v5411, 0
      %5931 = vmatpush.bf16.msra.mxu0 %v5857
      %5932 = vmatpush.bf16.msra.mxu0 %v5856
      %5933 = vmatpush.bf16.msra.mxu0 %v5855
      %5934 = vmatpush.bf16.msra.mxu0 %v5854
      %5935 = vmatpush.bf16.msra.mxu0 %v5853
      %5936 = vmatpush.bf16.msra.mxu0 %v5852
      %5937 = vmatpush.bf16.msra.mxu0 %v5851
      %5938 = vmatpush.bf16.msra.mxu0 %v5850
      %5939 = vmatmul.bf16.gmra.mxu0 %v5565
      %v5940 = vpop.f32.mrf.mxu0
      %v5941 = vadd.f32 %v5776, %v5940
      %v5942 = vpop.f32.mrf.mxu0
      %v5943 = vadd.f32 %v5776, %v5942
      %5944 = vmatmul.bf16.gmra.mxu0 %v5568
      %v5945 = vpop.f32.mrf.mxu0
      %v5946 = vadd.f32 %v5776, %v5945
      %v5947 = vpop.f32.mrf.mxu0
      %v5948 = vadd.f32 %v5776, %v5947
      %5949 = vmatmul.bf16.gmra.mxu0 %v5571
      %v5950 = vpop.f32.mrf.mxu0
      %v5951 = vadd.f32 %v5776, %v5950
      %v5952 = vpop.f32.mrf.mxu0
      %v5953 = vadd.f32 %v5776, %v5952
      %5954 = vmatmul.bf16.gmra.mxu0 %v5574
      %v5955 = vpop.f32.mrf.mxu0
      %v5956 = vadd.f32 %v5776, %v5955
      %v5957 = vpop.f32.mrf.mxu0
      %v5958 = vadd.f32 %v5776, %v5957
      %5959 = vmatmul.bf16.gmra.mxu0 %v5577
      %v5960 = vpop.f32.mrf.mxu0
      %v5961 = vadd.f32 %v5776, %v5960
      %v5962 = vpop.f32.mrf.mxu0
      %v5963 = vadd.f32 %v5776, %v5962
      %5964 = vmatmul.bf16.gmra.mxu0 %v5580
      %v5965 = vpop.f32.mrf.mxu0
      %v5966 = vadd.f32 %v5776, %v5965
      %v5967 = vpop.f32.mrf.mxu0
      %v5968 = vadd.f32 %v5776, %v5967
      %5969 = vmatmul.bf16.gmra.mxu0 %v5583
      %v5970 = vpop.f32.mrf.mxu0
      %v5971 = vadd.f32 %v5776, %v5970
      %v5972 = vpop.f32.mrf.mxu0
      %v5973 = vadd.f32 %v5776, %v5972
      %5974 = vmatmul.bf16.gmra.mxu0 %v5586
      %v5975 = vpop.f32.mrf.mxu0
      %v5976 = vadd.f32 %v5776, %v5975
      %v5977 = vpop.f32.mrf.mxu0
      %v5978 = vadd.f32 %v5776, %v5977
      %5979 = vmatmul.bf16.gmra.mxu0 %v5589
      %v5980 = vpop.f32.mrf.mxu0
      %v5981 = vadd.f32 %v5776, %v5980
      %v5982 = vpop.f32.mrf.mxu0
      %v5983 = vadd.f32 %v5776, %v5982
      %5984 = vmatmul.bf16.gmra.mxu0 %v5592
      %v5985 = vpop.f32.mrf.mxu0
      %v5986 = vadd.f32 %v5776, %v5985
      %v5987 = vpop.f32.mrf.mxu0
      %v5988 = vadd.f32 %v5776, %v5987
      %5989 = vmatmul.bf16.gmra.mxu0 %v5595
      %v5990 = vpop.f32.mrf.mxu0
      %v5991 = vadd.f32 %v5776, %v5990
      %v5992 = vpop.f32.mrf.mxu0
      %v5993 = vadd.f32 %v5776, %v5992
      %5994 = vmatmul.bf16.gmra.mxu0 %v5598
      %v5995 = vpop.f32.mrf.mxu0
      %v5996 = vadd.f32 %v5776, %v5995
      %v5997 = vpop.f32.mrf.mxu0
      %v5998 = vadd.f32 %v5776, %v5997
      %5999 = vmatmul.bf16.gmra.mxu0 %v5601
      %v6000 = vpop.f32.mrf.mxu0
      %v6001 = vadd.f32 %v5776, %v6000
      %v6002 = vpop.f32.mrf.mxu0
      %v6003 = vadd.f32 %v5776, %v6002
      %6004 = vmatmul.bf16.gmra.mxu0 %v5604
      %v6005 = vpop.f32.mrf.mxu0
      %v6006 = vadd.f32 %v5776, %v6005
      %v6007 = vpop.f32.mrf.mxu0
      %v6008 = vadd.f32 %v5776, %v6007
      %6009 = vmatmul.bf16.gmra.mxu0 %v5607
      %v6010 = vpop.f32.mrf.mxu0
      %v6011 = vadd.f32 %v5776, %v6010
      %v6012 = vpop.f32.mrf.mxu0
      %v6013 = vadd.f32 %v5776, %v6012
      %6014 = vmatmul.bf16.gmra.mxu0 %v5610
      %v6015 = vpop.f32.mrf.mxu0
      %v6016 = vadd.f32 %v5776, %v6015
      %v6017 = vpop.f32.mrf.mxu0
      %v6018 = vadd.f32 %v5776, %v6017
      %6019 = vdwg.mxu0
      %6020 = vmatpush.bf16.msra.mxu0 %v5865
      %6021 = vmatpush.bf16.msra.mxu0 %v5864
      %6022 = vmatpush.bf16.msra.mxu0 %v5863
      %6023 = vmatpush.bf16.msra.mxu0 %v5862
      %6024 = vmatpush.bf16.msra.mxu0 %v5861
      %6025 = vmatpush.bf16.msra.mxu0 %v5860
      %6026 = vmatpush.bf16.msra.mxu0 %v5859
      %6027 = vmatpush.bf16.msra.mxu0 %v5858
      %6028 = vmatmul.bf16.gmra.mxu0 %v5692
      %v6029 = vpop.f32.mrf.mxu0
      %v6030 = vadd.f32 %v5941, %v6029
      %v6031 = vpop.f32.mrf.mxu0
      %v6032 = vadd.f32 %v5943, %v6031
      %6033 = vmatmul.bf16.gmra.mxu0 %v5695
      %v6034 = vpop.f32.mrf.mxu0
      %v6035 = vadd.f32 %v5946, %v6034
      %v6036 = vpop.f32.mrf.mxu0
      %v6037 = vadd.f32 %v5948, %v6036
      %6038 = vmatmul.bf16.gmra.mxu0 %v5698
      %v6039 = vpop.f32.mrf.mxu0
      %v6040 = vadd.f32 %v5951, %v6039
      %v6041 = vpop.f32.mrf.mxu0
      %v6042 = vadd.f32 %v5953, %v6041
      %6043 = vmatmul.bf16.gmra.mxu0 %v5701
      %v6044 = vpop.f32.mrf.mxu0
      %v6045 = vadd.f32 %v5956, %v6044
      %v6046 = vpop.f32.mrf.mxu0
      %v6047 = vadd.f32 %v5958, %v6046
      %6048 = vmatmul.bf16.gmra.mxu0 %v5704
      %v6049 = vpop.f32.mrf.mxu0
      %v6050 = vadd.f32 %v5961, %v6049
      %v6051 = vpop.f32.mrf.mxu0
      %v6052 = vadd.f32 %v5963, %v6051
      %6053 = vmatmul.bf16.gmra.mxu0 %v5707
      %v6054 = vpop.f32.mrf.mxu0
      %v6055 = vadd.f32 %v5966, %v6054
      %v6056 = vpop.f32.mrf.mxu0
      %v6057 = vadd.f32 %v5968, %v6056
      %6058 = vmatmul.bf16.gmra.mxu0 %v5710
      %v6059 = vpop.f32.mrf.mxu0
      %v6060 = vadd.f32 %v5971, %v6059
      %v6061 = vpop.f32.mrf.mxu0
      %v6062 = vadd.f32 %v5973, %v6061
      %6063 = vmatmul.bf16.gmra.mxu0 %v5713
      %v6064 = vpop.f32.mrf.mxu0
      %v6065 = vadd.f32 %v5976, %v6064
      %v6066 = vpop.f32.mrf.mxu0
      %v6067 = vadd.f32 %v5978, %v6066
      %6068 = vmatmul.bf16.gmra.mxu0 %v5716
      %v6069 = vpop.f32.mrf.mxu0
      %v6070 = vadd.f32 %v5981, %v6069
      %v6071 = vpop.f32.mrf.mxu0
      %v6072 = vadd.f32 %v5983, %v6071
      %6073 = vmatmul.bf16.gmra.mxu0 %v5719
      %v6074 = vpop.f32.mrf.mxu0
      %v6075 = vadd.f32 %v5986, %v6074
      %v6076 = vpop.f32.mrf.mxu0
      %v6077 = vadd.f32 %v5988, %v6076
      %6078 = vmatmul.bf16.gmra.mxu0 %v5722
      %v6079 = vpop.f32.mrf.mxu0
      %v6080 = vadd.f32 %v5991, %v6079
      %v6081 = vpop.f32.mrf.mxu0
      %v6082 = vadd.f32 %v5993, %v6081
      %6083 = vmatmul.bf16.gmra.mxu0 %v5725
      %v6084 = vpop.f32.mrf.mxu0
      %v6085 = vadd.f32 %v5996, %v6084
      %v6086 = vpop.f32.mrf.mxu0
      %v6087 = vadd.f32 %v5998, %v6086
      %6088 = vmatmul.bf16.gmra.mxu0 %v5728
      %v6089 = vpop.f32.mrf.mxu0
      %v6090 = vadd.f32 %v6001, %v6089
      %v6091 = vpop.f32.mrf.mxu0
      %v6092 = vadd.f32 %v6003, %v6091
      %6093 = vmatmul.bf16.gmra.mxu0 %v5731
      %v6094 = vpop.f32.mrf.mxu0
      %v6095 = vadd.f32 %v6006, %v6094
      %v6096 = vpop.f32.mrf.mxu0
      %v6097 = vadd.f32 %v6008, %v6096
      %6098 = vmatmul.bf16.gmra.mxu0 %v5734
      %v6099 = vpop.f32.mrf.mxu0
      %v6100 = vadd.f32 %v6011, %v6099
      %v6101 = vpop.f32.mrf.mxu0
      %v6102 = vadd.f32 %v6013, %v6101
      %6103 = vmatmul.bf16.gmra.mxu0 %v5736
      %v6104 = vpop.f32.mrf.mxu0
      %v6105 = vadd.f32 %v6016, %v6104
      %v6106 = vpop.f32.mrf.mxu0
      %v6107 = vadd.f32 %v6018, %v6106
      %6108 = vdwg.mxu0
      %6109 = vmatpush.bf16.msra.mxu0 0
      %6110 = vmatpush.bf16.msra.mxu0 0
      %6111 = vmatpush.bf16.msra.mxu0 0
      %6112 = vmatpush.bf16.msra.mxu0 0
      %6113 = vmatpush.bf16.msra.mxu0 0
      %6114 = vmatpush.bf16.msra.mxu0 0
      %6115 = vmatpush.bf16.msra.mxu0 %v5867
      %6116 = vmatpush.bf16.msra.mxu0 %v5866
      %6117 = vmatmul.bf16.gmra.mxu0 %v5887
      %v6118 = vpop.f32.mrf.mxu0
      %v6119 = vadd.f32 %v6030, %v6118
      %v6120 = vpop.f32.mrf.mxu0
      %v6121 = vadd.f32 %v6032, %v6120
      %6122 = vmatmul.bf16.gmra.mxu0 %v5890
      %v6123 = vpop.f32.mrf.mxu0
      %v6124 = vadd.f32 %v6035, %v6123
      %v6125 = vpop.f32.mrf.mxu0
      %v6126 = vadd.f32 %v6037, %v6125
      %6127 = vmatmul.bf16.gmra.mxu0 %v5893
      %v6128 = vpop.f32.mrf.mxu0
      %v6129 = vadd.f32 %v6040, %v6128
      %v6130 = vpop.f32.mrf.mxu0
      %v6131 = vadd.f32 %v6042, %v6130
      %6132 = vmatmul.bf16.gmra.mxu0 %v5896
      %v6133 = vpop.f32.mrf.mxu0
      %v6134 = vadd.f32 %v6045, %v6133
      %v6135 = vpop.f32.mrf.mxu0
      %v6136 = vadd.f32 %v6047, %v6135
      %6137 = vmatmul.bf16.gmra.mxu0 %v5899
      %v6138 = vpop.f32.mrf.mxu0
      %v6139 = vadd.f32 %v6050, %v6138
      %v6140 = vpop.f32.mrf.mxu0
      %v6141 = vadd.f32 %v6052, %v6140
      %6142 = vmatmul.bf16.gmra.mxu0 %v5902
      %v6143 = vpop.f32.mrf.mxu0
      %v6144 = vadd.f32 %v6055, %v6143
      %v6145 = vpop.f32.mrf.mxu0
      %v6146 = vadd.f32 %v6057, %v6145
      %6147 = vmatmul.bf16.gmra.mxu0 %v5905
      %v6148 = vpop.f32.mrf.mxu0
      %v6149 = vadd.f32 %v6060, %v6148
      %v6150 = vpop.f32.mrf.mxu0
      %v6151 = vadd.f32 %v6062, %v6150
      %6152 = vmatmul.bf16.gmra.mxu0 %v5908
      %v6153 = vpop.f32.mrf.mxu0
      %v6154 = vadd.f32 %v6065, %v6153
      %v6155 = vpop.f32.mrf.mxu0
      %v6156 = vadd.f32 %v6067, %v6155
      %6157 = vmatmul.bf16.gmra.mxu0 %v5911
      %v6158 = vpop.f32.mrf.mxu0
      %v6159 = vadd.f32 %v6070, %v6158
      %v6160 = vpop.f32.mrf.mxu0
      %v6161 = vadd.f32 %v6072, %v6160
      %6162 = vmatmul.bf16.gmra.mxu0 %v5914
      %v6163 = vpop.f32.mrf.mxu0
      %v6164 = vadd.f32 %v6075, %v6163
      %v6165 = vpop.f32.mrf.mxu0
      %v6166 = vadd.f32 %v6077, %v6165
      %6167 = vmatmul.bf16.gmra.mxu0 %v5917
      %v6168 = vpop.f32.mrf.mxu0
      %v6169 = vadd.f32 %v6080, %v6168
      %v6170 = vpop.f32.mrf.mxu0
      %v6171 = vadd.f32 %v6082, %v6170
      %6172 = vmatmul.bf16.gmra.mxu0 %v5920
      %v6173 = vpop.f32.mrf.mxu0
      %v6174 = vadd.f32 %v6085, %v6173
      %v6175 = vpop.f32.mrf.mxu0
      %v6176 = vadd.f32 %v6087, %v6175
      %6177 = vmatmul.bf16.gmra.mxu0 %v5923
      %v6178 = vpop.f32.mrf.mxu0
      %v6179 = vadd.f32 %v6090, %v6178
      %v6180 = vpop.f32.mrf.mxu0
      %v6181 = vadd.f32 %v6092, %v6180
      %6182 = vmatmul.bf16.gmra.mxu0 %v5926
      %v6183 = vpop.f32.mrf.mxu0
      %v6184 = vadd.f32 %v6095, %v6183
      %v6185 = vpop.f32.mrf.mxu0
      %v6186 = vadd.f32 %v6097, %v6185
      %6187 = vmatmul.bf16.gmra.mxu0 %v5929
      %v6188 = vpop.f32.mrf.mxu0
      %v6189 = vadd.f32 %v6100, %v6188
      %v6190 = vpop.f32.mrf.mxu0
      %v6191 = vadd.f32 %v6102, %v6190
      %6192 = vmatmul.bf16.gmra.mxu0 %v3076
      %v6193 = vpop.f32.mrf.mxu0
      %v6194 = vadd.f32 %v6105, %v6193
      %v6195 = vpop.f32.mrf.mxu0
      %v6196 = vadd.f32 %v6107, %v6195
      %6197 = vdwg.mxu0
      %v6198 = vpack.c.bf16 %v4728, %v4728
      %v6199 = vpack.c.bf16 %v4729, %v4729
      %v6200 = vpack.c.bf16 %v4730, %v4730
      %v6201 = vpack.c.bf16 %v4731, %v4731
      %v6202 = vpack.c.bf16 %v4732, %v4732
      %v6203 = vpack.c.bf16 %v4733, %v4733
      %v6204 = vpack.c.bf16 %v4734, %v4734
      %v6205 = vpack.c.bf16 %v4735, %v4735
      %v6206 = vpack.c.bf16 %v4736, %v4736
      %v6207 = vpack.c.bf16 %v4737, %v4737
      %v6208 = vpack.c.bf16 %v4738, %v4738
      %v6209 = vpack.c.bf16 %v4739, %v4739
      %v6210 = vpack.c.bf16 %v4740, %v4740
      %v6211 = vpack.c.bf16 %v4741, %v4741
      %v6212 = vpack.c.bf16 %v4742, %v4742
      %v6213 = vpack.c.bf16 %v4743, %v4743
      %v6214 = vpack.c.bf16 %v4744, %v4744
      %v6215 = vpack.c.bf16 %v4745, %v4745
      %v6216 = vpack.c.bf16 %v4746, %v4746
      %v6217 = vpack.c.bf16 %v4747, %v4747
      %v6218 = vpack.c.bf16 %v4748, %v4748
      %v6219 = vpack.c.bf16 %v4749, %v4749
      %v6220 = vpack.c.bf16 %v4750, %v4750
      %v6221 = vpack.c.bf16 %v4751, %v4751
      %v6222 = vpack.c.bf16 %v4752, %v4752
      %v6223 = vpack.c.bf16 %v4753, %v4753
      %v6224 = vpack.c.bf16 %v4754, %v4754
      %v6225 = vpack.c.bf16 %v4755, %v4755
      %v6226 = vpack.c.bf16 %v4756, %v4756
      %v6227 = vpack.c.bf16 %v4757, %v4757
      %v6228 = vpack.c.bf16 %v4758, %v4758
      %v6229 = vpack.c.bf16 %v4759, %v4759
      %v6262 = vunpack.c.l.b16 %v6198
      %v6263 = vunpack.c.l.b16 %v6199
      %v6264 = vunpack.c.l.b16 %v6200
      %v6265 = vunpack.c.l.b16 %v6201
      %v6266 = vunpack.c.l.b16 %v6202
      %v6267 = vunpack.c.l.b16 %v6203
      %v6268 = vunpack.c.l.b16 %v6204
      %v6269 = vunpack.c.l.b16 %v6205
      %v6270 = vunpack.c.l.b16 %v6206
      %v6271 = vunpack.c.l.b16 %v6207
      %v6272 = vunpack.c.l.b16 %v6208
      %v6273 = vunpack.c.l.b16 %v6209
      %v6274 = vunpack.c.l.b16 %v6210
      %v6275 = vunpack.c.l.b16 %v6211
      %v6276 = vunpack.c.l.b16 %v6212
      %v6277 = vunpack.c.l.b16 %v6213
      %v6278 = vunpack.c.l.b16 %v6214
      %v6279 = vunpack.c.l.b16 %v6215
      %v6280 = vunpack.c.l.b16 %v6216
      %v6281 = vunpack.c.l.b16 %v6217
      %v6282 = vunpack.c.l.b16 %v6218
      %v6283 = vunpack.c.l.b16 %v6219
      %v6284 = vunpack.c.l.b16 %v6220
      %v6285 = vunpack.c.l.b16 %v6221
      %v6286 = vunpack.c.l.b16 %v6222
      %v6287 = vunpack.c.l.b16 %v6223
      %v6288 = vunpack.c.l.b16 %v6224
      %v6289 = vunpack.c.l.b16 %v6225
      %v6290 = vunpack.c.l.b16 %v6226
      %v6291 = vunpack.c.l.b16 %v6227
      %v6292 = vunpack.c.l.b16 %v6228
      %v6293 = vunpack.c.l.b16 %v6229
      %v6294 = vpack.c.b16 %v6263, %v6262
      %v6295 = vpack.c.b16 %v6265, %v6264
      %v6296 = vpack.c.b16 %v6267, %v6266
      %v6297 = vpack.c.b16 %v6269, %v6268
      %v6298 = vpack.c.b16 %v6271, %v6270
      %v6299 = vpack.c.b16 %v6273, %v6272
      %v6300 = vpack.c.b16 %v6275, %v6274
      %v6301 = vpack.c.b16 %v6277, %v6276
      %v6302 = vpack.c.b16 %v6279, %v6278
      %v6303 = vpack.c.b16 %v6281, %v6280
      %v6304 = vpack.c.b16 %v6283, %v6282
      %v6305 = vpack.c.b16 %v6285, %v6284
      %v6306 = vpack.c.b16 %v6287, %v6286
      %v6307 = vpack.c.b16 %v6289, %v6288
      %v6308 = vpack.c.b16 %v6291, %v6290
      %v6309 = vpack.c.b16 %v6293, %v6292
      %v6311 = vshrl.u32 %v6294, 16
      %v6313 = vrot.slane %v6311, 7
      %v6314 = vshll.u32 %v6294, 16
      %v6316 = vor.u32 %v6313, %v6314
      %v6318 = vshrl.u32 %v6295, 16
      %v6320 = vrot.slane %v6318, 7
      %v6321 = vshll.u32 %v6295, 16
      %v6323 = vor.u32 %v6320, %v6321
      %v6325 = vshrl.u32 %v6296, 16
      %v6327 = vrot.slane %v6325, 7
      %v6328 = vshll.u32 %v6296, 16
      %v6330 = vor.u32 %v6327, %v6328
      %v6332 = vshrl.u32 %v6297, 16
      %v6334 = vrot.slane %v6332, 7
      %v6335 = vshll.u32 %v6297, 16
      %v6337 = vor.u32 %v6334, %v6335
      %v6339 = vshrl.u32 %v6298, 16
      %v6341 = vrot.slane %v6339, 7
      %v6342 = vshll.u32 %v6298, 16
      %v6344 = vor.u32 %v6341, %v6342
      %v6346 = vshrl.u32 %v6299, 16
      %v6348 = vrot.slane %v6346, 7
      %v6349 = vshll.u32 %v6299, 16
      %v6351 = vor.u32 %v6348, %v6349
      %v6353 = vshrl.u32 %v6300, 16
      %v6355 = vrot.slane %v6353, 7
      %v6356 = vshll.u32 %v6300, 16
      %v6358 = vor.u32 %v6355, %v6356
      %v6360 = vshrl.u32 %v6301, 16
      %v6362 = vrot.slane %v6360, 7
      %v6363 = vshll.u32 %v6301, 16
      %v6365 = vor.u32 %v6362, %v6363
      %v6367 = vshrl.u32 %v6302, 16
      %v6369 = vrot.slane %v6367, 7
      %v6370 = vshll.u32 %v6302, 16
      %v6372 = vor.u32 %v6369, %v6370
      %v6374 = vshrl.u32 %v6303, 16
      %v6376 = vrot.slane %v6374, 7
      %v6377 = vshll.u32 %v6303, 16
      %v6379 = vor.u32 %v6376, %v6377
      %v6381 = vshrl.u32 %v6304, 16
      %v6383 = vrot.slane %v6381, 7
      %v6384 = vshll.u32 %v6304, 16
      %v6386 = vor.u32 %v6383, %v6384
      %v6388 = vshrl.u32 %v6305, 16
      %v6390 = vrot.slane %v6388, 7
      %v6391 = vshll.u32 %v6305, 16
      %v6393 = vor.u32 %v6390, %v6391
      %v6395 = vshrl.u32 %v6306, 16
      %v6397 = vrot.slane %v6395, 7
      %v6398 = vshll.u32 %v6306, 16
      %v6400 = vor.u32 %v6397, %v6398
      %v6402 = vshrl.u32 %v6307, 16
      %v6404 = vrot.slane %v6402, 7
      %v6405 = vshll.u32 %v6307, 16
      %v6407 = vor.u32 %v6404, %v6405
      %v6409 = vshrl.u32 %v6308, 16
      %v6411 = vrot.slane %v6409, 7
      %v6412 = vshll.u32 %v6308, 16
      %v6414 = vor.u32 %v6411, %v6412
      %v6416 = vshrl.u32 %v6309, 16
      %v6418 = vrot.slane %v6416, 7
      %v6419 = vshll.u32 %v6309, 16
      %v6421 = vor.u32 %v6418, %v6419
      %v6454 = vsel %vm860, 0, %v6316
      %v6455 = vsel %vm860, 0, %v6323
      %v6456 = vsel %vm860, 0, %v6330
      %v6457 = vsel %vm860, 0, %v6337
      %v6458 = vsel %vm860, 0, %v6344
      %v6459 = vsel %vm860, 0, %v6351
      %v6460 = vsel %vm860, 0, %v6358
      %v6461 = vsel %vm860, 0, %v6365
      %v6462 = vsel %vm860, 0, %v6372
      %v6463 = vsel %vm860, 0, %v6379
      %v6464 = vsel %vm860, 0, %v6386
      %v6465 = vsel %vm860, 0, %v6393
      %v6466 = vsel %vm860, 0, %v6400
      %v6467 = vsel %vm860, 0, %v6407
      %v6468 = vsel %vm860, 0, %v6414
      %v6469 = vsel %vm860, 0, %v6421
      %v6470 = vsel %vm860, %v6313, 0
      %v6471 = vsel %vm860, %v6320, 0
      %v6472 = vsel %vm860, %v6327, 0
      %v6473 = vsel %vm860, %v6334, 0
      %v6474 = vsel %vm860, %v6341, 0
      %v6475 = vsel %vm860, %v6348, 0
      %v6476 = vsel %vm860, %v6355, 0
      %v6477 = vsel %vm860, %v6362, 0
      %v6478 = vsel %vm860, %v6369, 0
      %v6479 = vsel %vm860, %v6376, 0
      %v6480 = vsel %vm860, %v6383, 0
      %v6481 = vsel %vm860, %v6390, 0
      %v6482 = vsel %vm860, %v6397, 0
      %v6483 = vsel %vm860, %v6404, 0
      %v6484 = vsel %vm860, %v6411, 0
      %v6485 = vsel %vm860, %v6418, 0
      %v6487 = vshrl.u32 %v6454, 16
      %v6489 = vshll.u32 %v6454, 16
      %v6491 = vrot.slane %v6489, 1
      %v6492 = vor.u32 %v6487, %v6491
      %v6494 = vshll.u32 %v6470, 16
      %v6496 = vrot.slane %v6494, 1
      %v6497 = vsel %vm895, %v6492, %v6496
      %v6499 = vshrl.u32 %v6455, 16
      %v6501 = vshll.u32 %v6455, 16
      %v6503 = vrot.slane %v6501, 1
      %v6504 = vor.u32 %v6499, %v6503
      %v6506 = vshll.u32 %v6471, 16
      %v6508 = vrot.slane %v6506, 1
      %v6509 = vsel %vm895, %v6504, %v6508
      %v6511 = vshrl.u32 %v6456, 16
      %v6513 = vshll.u32 %v6456, 16
      %v6515 = vrot.slane %v6513, 1
      %v6516 = vor.u32 %v6511, %v6515
      %v6518 = vshll.u32 %v6472, 16
      %v6520 = vrot.slane %v6518, 1
      %v6521 = vsel %vm895, %v6516, %v6520
      %v6523 = vshrl.u32 %v6457, 16
      %v6525 = vshll.u32 %v6457, 16
      %v6527 = vrot.slane %v6525, 1
      %v6528 = vor.u32 %v6523, %v6527
      %v6530 = vshll.u32 %v6473, 16
      %v6532 = vrot.slane %v6530, 1
      %v6533 = vsel %vm895, %v6528, %v6532
      %v6535 = vshrl.u32 %v6458, 16
      %v6537 = vshll.u32 %v6458, 16
      %v6539 = vrot.slane %v6537, 1
      %v6540 = vor.u32 %v6535, %v6539
      %v6542 = vshll.u32 %v6474, 16
      %v6544 = vrot.slane %v6542, 1
      %v6545 = vsel %vm895, %v6540, %v6544
      %v6547 = vshrl.u32 %v6459, 16
      %v6549 = vshll.u32 %v6459, 16
      %v6551 = vrot.slane %v6549, 1
      %v6552 = vor.u32 %v6547, %v6551
      %v6554 = vshll.u32 %v6475, 16
      %v6556 = vrot.slane %v6554, 1
      %v6557 = vsel %vm895, %v6552, %v6556
      %v6559 = vshrl.u32 %v6460, 16
      %v6561 = vshll.u32 %v6460, 16
      %v6563 = vrot.slane %v6561, 1
      %v6564 = vor.u32 %v6559, %v6563
      %v6566 = vshll.u32 %v6476, 16
      %v6568 = vrot.slane %v6566, 1
      %v6569 = vsel %vm895, %v6564, %v6568
      %v6571 = vshrl.u32 %v6461, 16
      %v6573 = vshll.u32 %v6461, 16
      %v6575 = vrot.slane %v6573, 1
      %v6576 = vor.u32 %v6571, %v6575
      %v6578 = vshll.u32 %v6477, 16
      %v6580 = vrot.slane %v6578, 1
      %v6581 = vsel %vm895, %v6576, %v6580
      %v6583 = vshrl.u32 %v6462, 16
      %v6585 = vshll.u32 %v6462, 16
      %v6587 = vrot.slane %v6585, 1
      %v6588 = vor.u32 %v6583, %v6587
      %v6590 = vshll.u32 %v6478, 16
      %v6592 = vrot.slane %v6590, 1
      %v6593 = vsel %vm895, %v6588, %v6592
      %v6595 = vshrl.u32 %v6463, 16
      %v6597 = vshll.u32 %v6463, 16
      %v6599 = vrot.slane %v6597, 1
      %v6600 = vor.u32 %v6595, %v6599
      %v6602 = vshll.u32 %v6479, 16
      %v6604 = vrot.slane %v6602, 1
      %v6605 = vsel %vm895, %v6600, %v6604
      %v6607 = vshrl.u32 %v6464, 16
      %v6609 = vshll.u32 %v6464, 16
      %v6611 = vrot.slane %v6609, 1
      %v6612 = vor.u32 %v6607, %v6611
      %v6614 = vshll.u32 %v6480, 16
      %v6616 = vrot.slane %v6614, 1
      %v6617 = vsel %vm895, %v6612, %v6616
      %v6619 = vshrl.u32 %v6465, 16
      %v6621 = vshll.u32 %v6465, 16
      %v6623 = vrot.slane %v6621, 1
      %v6624 = vor.u32 %v6619, %v6623
      %v6626 = vshll.u32 %v6481, 16
      %v6628 = vrot.slane %v6626, 1
      %v6629 = vsel %vm895, %v6624, %v6628
      %v6631 = vshrl.u32 %v6466, 16
      %v6633 = vshll.u32 %v6466, 16
      %v6635 = vrot.slane %v6633, 1
      %v6636 = vor.u32 %v6631, %v6635
      %v6638 = vshll.u32 %v6482, 16
      %v6640 = vrot.slane %v6638, 1
      %v6641 = vsel %vm895, %v6636, %v6640
      %v6643 = vshrl.u32 %v6467, 16
      %v6645 = vshll.u32 %v6467, 16
      %v6647 = vrot.slane %v6645, 1
      %v6648 = vor.u32 %v6643, %v6647
      %v6650 = vshll.u32 %v6483, 16
      %v6652 = vrot.slane %v6650, 1
      %v6653 = vsel %vm895, %v6648, %v6652
      %v6655 = vshrl.u32 %v6468, 16
      %v6657 = vshll.u32 %v6468, 16
      %v6659 = vrot.slane %v6657, 1
      %v6660 = vor.u32 %v6655, %v6659
      %v6662 = vshll.u32 %v6484, 16
      %v6664 = vrot.slane %v6662, 1
      %v6665 = vsel %vm895, %v6660, %v6664
      %6666 = vrot.lane.b32.xlu0 %v6497, 32
      %v6667 = vpop.permute.xlu0 %6666
      %6668 = vrot.lane.b32.xlu0 %v6509, 32
      %v6669 = vpop.permute.xlu0 %6668
      %6670 = vrot.lane.b32.xlu0 %v6521, 32
      %v6671 = vpop.permute.xlu0 %6670
      %6672 = vrot.lane.b32.xlu0 %v6533, 32
      %v6673 = vpop.permute.xlu0 %6672
      %6674 = vrot.lane.b32.xlu0 %v6545, 32
      %v6675 = vpop.permute.xlu0 %6674
      %6676 = vrot.lane.b32.xlu0 %v6557, 32
      %v6677 = vpop.permute.xlu0 %6676
      %6678 = vrot.lane.b32.xlu0 %v6569, 32
      %v6679 = vpop.permute.xlu0 %6678
      %6680 = vrot.lane.b32.xlu0 %v6581, 32
      %v6681 = vpop.permute.xlu0 %6680
      %6682 = vrot.lane.b32.xlu0 %v6593, 32
      %v6683 = vpop.permute.xlu0 %6682
      %6684 = vrot.lane.b32.xlu0 %v6605, 32
      %v6685 = vpop.permute.xlu0 %6684
      %6686 = vrot.lane.b32.xlu0 %v6617, 32
      %v6687 = vpop.permute.xlu0 %6686
      %6688 = vrot.lane.b32.xlu0 %v6629, 32
      %v6689 = vpop.permute.xlu0 %6688
      %6690 = vrot.lane.b32.xlu0 %v6641, 32
      %v6691 = vpop.permute.xlu0 %6690
      %6692 = vrot.lane.b32.xlu0 %v6653, 32
      %v6693 = vpop.permute.xlu0 %6692
      %6694 = vrot.lane.b32.xlu0 %v6665, 32
      %v6695 = vpop.permute.xlu0 %6694
      %v6726 = vrot.slane %v6454, 1
      %v6727 = vrot.slane %v6470, 1
      %v6728 = vsel %vm1152, %v6726, %v6727
      %v6729 = vrot.slane %v6455, 1
      %v6730 = vrot.slane %v6471, 1
      %v6731 = vsel %vm1152, %v6729, %v6730
      %v6732 = vrot.slane %v6456, 1
      %v6733 = vrot.slane %v6472, 1
      %v6734 = vsel %vm1152, %v6732, %v6733
      %v6735 = vrot.slane %v6457, 1
      %v6736 = vrot.slane %v6473, 1
      %v6737 = vsel %vm1152, %v6735, %v6736
      %v6738 = vrot.slane %v6458, 1
      %v6739 = vrot.slane %v6474, 1
      %v6740 = vsel %vm1152, %v6738, %v6739
      %v6741 = vrot.slane %v6459, 1
      %v6742 = vrot.slane %v6475, 1
      %v6743 = vsel %vm1152, %v6741, %v6742
      %v6744 = vrot.slane %v6460, 1
      %v6745 = vrot.slane %v6476, 1
      %v6746 = vsel %vm1152, %v6744, %v6745
      %v6747 = vrot.slane %v6461, 1
      %v6748 = vrot.slane %v6477, 1
      %v6749 = vsel %vm1152, %v6747, %v6748
      %v6750 = vrot.slane %v6462, 1
      %v6751 = vrot.slane %v6478, 1
      %v6752 = vsel %vm1152, %v6750, %v6751
      %v6753 = vrot.slane %v6463, 1
      %v6754 = vrot.slane %v6479, 1
      %v6755 = vsel %vm1152, %v6753, %v6754
      %v6756 = vrot.slane %v6464, 1
      %v6757 = vrot.slane %v6480, 1
      %v6758 = vsel %vm1152, %v6756, %v6757
      %v6759 = vrot.slane %v6465, 1
      %v6760 = vrot.slane %v6481, 1
      %v6761 = vsel %vm1152, %v6759, %v6760
      %v6762 = vrot.slane %v6466, 1
      %v6763 = vrot.slane %v6482, 1
      %v6764 = vsel %vm1152, %v6762, %v6763
      %v6765 = vrot.slane %v6467, 1
      %v6766 = vrot.slane %v6483, 1
      %v6767 = vsel %vm1152, %v6765, %v6766
      %v6768 = vrot.slane %v6468, 1
      %v6769 = vrot.slane %v6484, 1
      %v6770 = vsel %vm1152, %v6768, %v6769
      %6771 = vrot.lane.b32.xlu0 %v6728, 64
      %v6772 = vpop.permute.xlu0 %6771
      %6773 = vrot.lane.b32.xlu0 %v6731, 64
      %v6774 = vpop.permute.xlu0 %6773
      %6775 = vrot.lane.b32.xlu0 %v6734, 64
      %v6776 = vpop.permute.xlu0 %6775
      %6777 = vrot.lane.b32.xlu0 %v6737, 64
      %v6778 = vpop.permute.xlu0 %6777
      %6779 = vrot.lane.b32.xlu0 %v6740, 64
      %v6780 = vpop.permute.xlu0 %6779
      %6781 = vrot.lane.b32.xlu0 %v6743, 64
      %v6782 = vpop.permute.xlu0 %6781
      %6783 = vrot.lane.b32.xlu0 %v6746, 64
      %v6784 = vpop.permute.xlu0 %6783
      %6785 = vrot.lane.b32.xlu0 %v6749, 64
      %v6786 = vpop.permute.xlu0 %6785
      %6787 = vrot.lane.b32.xlu0 %v6752, 64
      %v6788 = vpop.permute.xlu0 %6787
      %6789 = vrot.lane.b32.xlu0 %v6755, 64
      %v6790 = vpop.permute.xlu0 %6789
      %6791 = vrot.lane.b32.xlu0 %v6758, 64
      %v6792 = vpop.permute.xlu0 %6791
      %6793 = vrot.lane.b32.xlu0 %v6761, 64
      %v6794 = vpop.permute.xlu0 %6793
      %6795 = vrot.lane.b32.xlu0 %v6764, 64
      %v6796 = vpop.permute.xlu0 %6795
      %6797 = vrot.lane.b32.xlu0 %v6767, 64
      %v6798 = vpop.permute.xlu0 %6797
      %6799 = vrot.lane.b32.xlu0 %v6770, 64
      %v6800 = vpop.permute.xlu0 %6799
      %6802 = vrot.lane.b32.xlu0 %v6454, 96
      %v6803 = vpop.permute.xlu0 %6802
      %6804 = vrot.lane.b32.xlu0 %v6455, 96
      %v6805 = vpop.permute.xlu0 %6804
      %6806 = vrot.lane.b32.xlu0 %v6456, 96
      %v6807 = vpop.permute.xlu0 %6806
      %6808 = vrot.lane.b32.xlu0 %v6457, 96
      %v6809 = vpop.permute.xlu0 %6808
      %6810 = vrot.lane.b32.xlu0 %v6458, 96
      %v6811 = vpop.permute.xlu0 %6810
      %6812 = vrot.lane.b32.xlu0 %v6459, 96
      %v6813 = vpop.permute.xlu0 %6812
      %6814 = vrot.lane.b32.xlu0 %v6460, 96
      %v6815 = vpop.permute.xlu0 %6814
      %6816 = vrot.lane.b32.xlu0 %v6461, 96
      %v6817 = vpop.permute.xlu0 %6816
      %6818 = vrot.lane.b32.xlu0 %v6462, 96
      %v6819 = vpop.permute.xlu0 %6818
      %6820 = vrot.lane.b32.xlu0 %v6463, 96
      %v6821 = vpop.permute.xlu0 %6820
      %6822 = vrot.lane.b32.xlu0 %v6464, 96
      %v6823 = vpop.permute.xlu0 %6822
      %6824 = vrot.lane.b32.xlu0 %v6465, 96
      %v6825 = vpop.permute.xlu0 %6824
      %6826 = vrot.lane.b32.xlu0 %v6466, 96
      %v6827 = vpop.permute.xlu0 %6826
      %6828 = vrot.lane.b32.xlu0 %v6467, 96
      %v6829 = vpop.permute.xlu0 %6828
      %6830 = vrot.lane.b32.xlu0 %v6468, 96
      %v6831 = vpop.permute.xlu0 %6830
      %6832 = vrot.lane.b32.xlu0 %v6469, 96
      %v6833 = vpop.permute.xlu0 %6832
      %v6835 = vshrl.u32 %v6469, 16
      %v6837 = vshll.u32 %v6469, 16
      %v6839 = vrot.slane %v6837, 1
      %v6840 = vor.u32 %v6835, %v6839
      %v6842 = vshll.u32 %v6485, 16
      %v6844 = vrot.slane %v6842, 1
      %v6845 = vsel %vm895, %v6840, %v6844
      %v6847 = vrot.slane %v6469, 1
      %v6848 = vrot.slane %v6485, 1
      %v6849 = vsel %vm1152, %v6847, %v6848
      %6850 = vrot.lane.b32.xlu0 %v6728, 32
      %v6851 = vpop.permute.xlu0 %6850
      %6852 = vrot.lane.b32.xlu0 %v6731, 32
      %v6853 = vpop.permute.xlu0 %6852
      %6854 = vrot.lane.b32.xlu0 %v6734, 32
      %v6855 = vpop.permute.xlu0 %6854
      %6856 = vrot.lane.b32.xlu0 %v6737, 32
      %v6857 = vpop.permute.xlu0 %6856
      %6858 = vrot.lane.b32.xlu0 %v6740, 32
      %v6859 = vpop.permute.xlu0 %6858
      %6860 = vrot.lane.b32.xlu0 %v6743, 32
      %v6861 = vpop.permute.xlu0 %6860
      %6862 = vrot.lane.b32.xlu0 %v6746, 32
      %v6863 = vpop.permute.xlu0 %6862
      %6864 = vrot.lane.b32.xlu0 %v6749, 32
      %v6865 = vpop.permute.xlu0 %6864
      %6866 = vrot.lane.b32.xlu0 %v6752, 32
      %v6867 = vpop.permute.xlu0 %6866
      %6868 = vrot.lane.b32.xlu0 %v6755, 32
      %v6869 = vpop.permute.xlu0 %6868
      %6870 = vrot.lane.b32.xlu0 %v6758, 32
      %v6871 = vpop.permute.xlu0 %6870
      %6872 = vrot.lane.b32.xlu0 %v6761, 32
      %v6873 = vpop.permute.xlu0 %6872
      %6874 = vrot.lane.b32.xlu0 %v6764, 32
      %v6875 = vpop.permute.xlu0 %6874
      %6876 = vrot.lane.b32.xlu0 %v6767, 32
      %v6877 = vpop.permute.xlu0 %6876
      %6878 = vrot.lane.b32.xlu0 %v6770, 32
      %v6879 = vpop.permute.xlu0 %6878
      %6880 = vrot.lane.b32.xlu0 %v6849, 32
      %v6881 = vpop.permute.xlu0 %6880
      %6882 = vrot.lane.b32.xlu0 %v6455, 64
      %v6883 = vpop.permute.xlu0 %6882
      %6884 = vrot.lane.b32.xlu0 %v6456, 64
      %v6885 = vpop.permute.xlu0 %6884
      %6886 = vrot.lane.b32.xlu0 %v6457, 64
      %v6887 = vpop.permute.xlu0 %6886
      %6888 = vrot.lane.b32.xlu0 %v6458, 64
      %v6889 = vpop.permute.xlu0 %6888
      %6890 = vrot.lane.b32.xlu0 %v6459, 64
      %v6891 = vpop.permute.xlu0 %6890
      %6892 = vrot.lane.b32.xlu0 %v6460, 64
      %v6893 = vpop.permute.xlu0 %6892
      %6894 = vrot.lane.b32.xlu0 %v6461, 64
      %v6895 = vpop.permute.xlu0 %6894
      %6896 = vrot.lane.b32.xlu0 %v6462, 64
      %v6897 = vpop.permute.xlu0 %6896
      %6898 = vrot.lane.b32.xlu0 %v6463, 64
      %v6899 = vpop.permute.xlu0 %6898
      %6900 = vrot.lane.b32.xlu0 %v6464, 64
      %v6901 = vpop.permute.xlu0 %6900
      %6902 = vrot.lane.b32.xlu0 %v6465, 64
      %v6903 = vpop.permute.xlu0 %6902
      %6904 = vrot.lane.b32.xlu0 %v6466, 64
      %v6905 = vpop.permute.xlu0 %6904
      %6906 = vrot.lane.b32.xlu0 %v6467, 64
      %v6907 = vpop.permute.xlu0 %6906
      %6908 = vrot.lane.b32.xlu0 %v6468, 64
      %v6909 = vpop.permute.xlu0 %6908
      %6910 = vrot.lane.b32.xlu0 %v6469, 64
      %v6911 = vpop.permute.xlu0 %6910
      %6912 = vrot.lane.b32.xlu0 %v6509, 96
      %v6913 = vpop.permute.xlu0 %6912
      %6914 = vrot.lane.b32.xlu0 %v6521, 96
      %v6915 = vpop.permute.xlu0 %6914
      %6916 = vrot.lane.b32.xlu0 %v6533, 96
      %v6917 = vpop.permute.xlu0 %6916
      %6918 = vrot.lane.b32.xlu0 %v6545, 96
      %v6919 = vpop.permute.xlu0 %6918
      %6920 = vrot.lane.b32.xlu0 %v6557, 96
      %v6921 = vpop.permute.xlu0 %6920
      %6922 = vrot.lane.b32.xlu0 %v6569, 96
      %v6923 = vpop.permute.xlu0 %6922
      %6924 = vrot.lane.b32.xlu0 %v6581, 96
      %v6925 = vpop.permute.xlu0 %6924
      %6926 = vrot.lane.b32.xlu0 %v6593, 96
      %v6927 = vpop.permute.xlu0 %6926
      %6928 = vrot.lane.b32.xlu0 %v6605, 96
      %v6929 = vpop.permute.xlu0 %6928
      %6930 = vrot.lane.b32.xlu0 %v6617, 96
      %v6931 = vpop.permute.xlu0 %6930
      %6932 = vrot.lane.b32.xlu0 %v6629, 96
      %v6933 = vpop.permute.xlu0 %6932
      %6934 = vrot.lane.b32.xlu0 %v6641, 96
      %v6935 = vpop.permute.xlu0 %6934
      %6936 = vrot.lane.b32.xlu0 %v6653, 96
      %v6937 = vpop.permute.xlu0 %6936
      %6938 = vrot.lane.b32.xlu0 %v6665, 96
      %v6939 = vpop.permute.xlu0 %6938
      %6940 = vrot.lane.b32.xlu0 %v6845, 96
      %v6941 = vpop.permute.xlu0 %6940
      %v6943 = vsel %vm1673, %v6454, %v6667
      %v6945 = vsel %vm1673, %v6455, %v6669
      %v6947 = vsel %vm1673, %v6456, %v6671
      %v6949 = vsel %vm1673, %v6457, %v6673
      %v6951 = vsel %vm1673, %v6458, %v6675
      %v6953 = vsel %vm1673, %v6459, %v6677
      %v6955 = vsel %vm1673, %v6460, %v6679
      %v6957 = vsel %vm1673, %v6461, %v6681
      %v6959 = vsel %vm1673, %v6462, %v6683
      %v6961 = vsel %vm1673, %v6463, %v6685
      %v6963 = vsel %vm1673, %v6464, %v6687
      %v6965 = vsel %vm1673, %v6465, %v6689
      %v6967 = vsel %vm1673, %v6466, %v6691
      %v6969 = vsel %vm1673, %v6467, %v6693
      %v6971 = vsel %vm1673, %v6468, %v6695
      %v6973 = vsel %vm2672, %v6943, %v6772
      %v6975 = vsel %vm2672, %v6945, %v6774
      %v6977 = vsel %vm2672, %v6947, %v6776
      %v6979 = vsel %vm2672, %v6949, %v6778
      %v6981 = vsel %vm2672, %v6951, %v6780
      %v6983 = vsel %vm2672, %v6953, %v6782
      %v6985 = vsel %vm2672, %v6955, %v6784
      %v6987 = vsel %vm2672, %v6957, %v6786
      %v6989 = vsel %vm2672, %v6959, %v6788
      %v6991 = vsel %vm2672, %v6961, %v6790
      %v6993 = vsel %vm2672, %v6963, %v6792
      %v6995 = vsel %vm2672, %v6965, %v6794
      %v6997 = vsel %vm2672, %v6967, %v6796
      %v6999 = vsel %vm2672, %v6969, %v6798
      %v7001 = vsel %vm2672, %v6971, %v6800
      %v7003 = vsel %vm2705, %v2674, %v6803
      %v7006 = vsel %vm2705, %v6973, %v6805
      %v7009 = vsel %vm2705, %v6975, %v6807
      %v7012 = vsel %vm2705, %v6977, %v6809
      %v7015 = vsel %vm2705, %v6979, %v6811
      %v7018 = vsel %vm2705, %v6981, %v6813
      %v7021 = vsel %vm2705, %v6983, %v6815
      %v7024 = vsel %vm2705, %v6985, %v6817
      %v7027 = vsel %vm2705, %v6987, %v6819
      %v7030 = vsel %vm2705, %v6989, %v6821
      %v7033 = vsel %vm2705, %v6991, %v6823
      %v7036 = vsel %vm2705, %v6993, %v6825
      %v7039 = vsel %vm2705, %v6995, %v6827
      %v7042 = vsel %vm2705, %v6997, %v6829
      %v7045 = vsel %vm2705, %v6999, %v6831
      %v7048 = vsel %vm2705, %v7001, %v6833
      %v7052 = vsel %vm1673, %v6497, %v6851
      %v7055 = vsel %vm1673, %v6509, %v6853
      %v7058 = vsel %vm1673, %v6521, %v6855
      %v7061 = vsel %vm1673, %v6533, %v6857
      %v7064 = vsel %vm1673, %v6545, %v6859
      %v7067 = vsel %vm1673, %v6557, %v6861
      %v7070 = vsel %vm1673, %v6569, %v6863
      %v7073 = vsel %vm1673, %v6581, %v6865
      %v7076 = vsel %vm1673, %v6593, %v6867
      %v7079 = vsel %vm1673, %v6605, %v6869
      %v7082 = vsel %vm1673, %v6617, %v6871
      %v7085 = vsel %vm1673, %v6629, %v6873
      %v7088 = vsel %vm1673, %v6641, %v6875
      %v7091 = vsel %vm1673, %v6653, %v6877
      %v7094 = vsel %vm1673, %v6665, %v6879
      %v7097 = vsel %vm1673, %v6845, %v6881
      %v7099 = vsel %vm2672, %v7052, %v6883
      %v7101 = vsel %vm2672, %v7055, %v6885
      %v7103 = vsel %vm2672, %v7058, %v6887
      %v7105 = vsel %vm2672, %v7061, %v6889
      %v7107 = vsel %vm2672, %v7064, %v6891
      %v7109 = vsel %vm2672, %v7067, %v6893
      %v7111 = vsel %vm2672, %v7070, %v6895
      %v7113 = vsel %vm2672, %v7073, %v6897
      %v7115 = vsel %vm2672, %v7076, %v6899
      %v7117 = vsel %vm2672, %v7079, %v6901
      %v7119 = vsel %vm2672, %v7082, %v6903
      %v7121 = vsel %vm2672, %v7085, %v6905
      %v7123 = vsel %vm2672, %v7088, %v6907
      %v7125 = vsel %vm2672, %v7091, %v6909
      %v7127 = vsel %vm2672, %v7094, %v6911
      %v7128 = vsel %vm2672, %v7097, %v2607
      %v7130 = vsel %vm2705, %v7099, %v6913
      %v7133 = vsel %vm2705, %v7101, %v6915
      %v7136 = vsel %vm2705, %v7103, %v6917
      %v7139 = vsel %vm2705, %v7105, %v6919
      %v7142 = vsel %vm2705, %v7107, %v6921
      %v7145 = vsel %vm2705, %v7109, %v6923
      %v7148 = vsel %vm2705, %v7111, %v6925
      %v7151 = vsel %vm2705, %v7113, %v6927
      %v7154 = vsel %vm2705, %v7115, %v6929
      %v7157 = vsel %vm2705, %v7117, %v6931
      %v7160 = vsel %vm2705, %v7119, %v6933
      %v7163 = vsel %vm2705, %v7121, %v6935
      %v7166 = vsel %vm2705, %v7123, %v6937
      %v7169 = vsel %vm2705, %v7125, %v6939
      %v7172 = vsel %vm2705, %v7127, %v6941
      %v7174 = vsel %vm2705, %v7128, %v2639
      %v7176 = vld [vmem:[%s12] sm:$0xf]
      %v7177 = vld [vmem:[%s12 + $0x4] sm:$0xf]
      %v7178 = vld [vmem:[%s12 + $0x8] sm:$0xf]
      %v7179 = vld [vmem:[%s12 + $0xc] sm:$0xf]
      %v7180 = vld [vmem:[%s12 + $0x10] sm:$0xf]
      %v7181 = vld [vmem:[%s12 + $0x14] sm:$0xf]
      %v7182 = vld [vmem:[%s12 + $0x18] sm:$0xf]
      %v7183 = vld [vmem:[%s12 + $0x1c] sm:$0xf]
      %v7184 = vld [vmem:[%s12 + $0x20] sm:$0xf]
      %v7185 = vld [vmem:[%s12 + $0x24] sm:$0xf]
      %v7186 = vld [vmem:[%s12 + $0x28] sm:$0xf]
      %v7187 = vld [vmem:[%s12 + $0x2c] sm:$0xf]
      %v7188 = vld [vmem:[%s12 + $0x30] sm:$0xf]
      %v7189 = vld [vmem:[%s12 + $0x34] sm:$0xf]
      %v7190 = vld [vmem:[%s12 + $0x38] sm:$0xf]
      %v7191 = vld [vmem:[%s12 + $0x3c] sm:$0xf]
      %v7192 = vld [vmem:[%s12 + $0x40] sm:$0xf]
      %v7193 = vld [vmem:[%s12 + $0x44] sm:$0xf]
      %v7194 = vld [vmem:[%s12 + $0x48] sm:$0xf]
      %v7195 = vld [vmem:[%s12 + $0x4c] sm:$0xf]
      %v7196 = vld [vmem:[%s12 + $0x50] sm:$0xf]
      %v7197 = vld [vmem:[%s12 + $0x54] sm:$0xf]
      %v7198 = vld [vmem:[%s12 + $0x58] sm:$0xf]
      %v7199 = vld [vmem:[%s12 + $0x5c] sm:$0xf]
      %v7200 = vld [vmem:[%s12 + $0x60] sm:$0xf]
      %v7201 = vld [vmem:[%s12 + $0x64] sm:$0xf]
      %v7202 = vld [vmem:[%s12 + $0x68] sm:$0xf]
      %v7203 = vld [vmem:[%s12 + $0x6c] sm:$0xf]
      %v7204 = vld [vmem:[%s12 + $0x70] sm:$0xf]
      %v7205 = vld [vmem:[%s12 + $0x74] sm:$0xf]
      %v7206 = vld [vmem:[%s12 + $0x78] sm:$0xf]
      %v7207 = vld [vmem:[%s12 + $0x7c] sm:$0xf]
      %v7208 = vld [vmem:[%s12 + $0x80] sm:$0xf]
      %v7209 = vld [vmem:[%s12 + $0x84] sm:$0xf]
      %v7210 = vld [vmem:[%s12 + $0x88] sm:$0xf]
      %v7211 = vld [vmem:[%s12 + $0x8c] sm:$0xf]
      %v7212 = vld [vmem:[%s13] sm:$0x1]
      %v7214 = vperm.slane %v7212, 0
      %v7252 = vunpack.c.l.b16 %v7176
      %v7253 = vunpack.c.l.b16 %v7177
      %v7254 = vunpack.c.l.b16 %v7178
      %v7255 = vunpack.c.l.b16 %v7179
      %v7256 = vunpack.c.l.b16 %v7180
      %v7257 = vunpack.c.l.b16 %v7181
      %v7258 = vunpack.c.l.b16 %v7182
      %v7259 = vunpack.c.l.b16 %v7183
      %v7260 = vunpack.c.l.b16 %v7184
      %v7261 = vunpack.c.l.b16 %v7185
      %v7262 = vunpack.c.l.b16 %v7186
      %v7263 = vunpack.c.l.b16 %v7187
      %v7264 = vunpack.c.l.b16 %v7188
      %v7265 = vunpack.c.l.b16 %v7189
      %v7266 = vunpack.c.l.b16 %v7190
      %v7267 = vunpack.c.l.b16 %v7191
      %v7268 = vunpack.c.l.b16 %v7192
      %v7269 = vunpack.c.l.b16 %v7193
      %v7270 = vunpack.c.l.b16 %v7194
      %v7271 = vunpack.c.l.b16 %v7195
      %v7272 = vunpack.c.l.b16 %v7196
      %v7273 = vunpack.c.l.b16 %v7197
      %v7274 = vunpack.c.l.b16 %v7198
      %v7275 = vunpack.c.l.b16 %v7199
      %v7276 = vunpack.c.l.b16 %v7200
      %v7277 = vunpack.c.l.b16 %v7201
      %v7278 = vunpack.c.l.b16 %v7202
      %v7279 = vunpack.c.l.b16 %v7203
      %v7280 = vunpack.c.l.b16 %v7204
      %v7281 = vunpack.c.l.b16 %v7205
      %v7282 = vunpack.c.l.b16 %v7206
      %v7283 = vunpack.c.l.b16 %v7207
      %v7284 = vunpack.c.l.b16 %v7208
      %v7285 = vunpack.c.l.b16 %v7209
      %v7286 = vunpack.c.l.b16 %v7210
      %v7287 = vunpack.c.l.b16 %v7211
      %v7288 = vpack.c.b16 %v7253, %v7252
      %v7289 = vpack.c.b16 %v7255, %v7254
      %v7290 = vpack.c.b16 %v7257, %v7256
      %v7291 = vpack.c.b16 %v7259, %v7258
      %v7292 = vpack.c.b16 %v7261, %v7260
      %v7293 = vpack.c.b16 %v7263, %v7262
      %v7294 = vpack.c.b16 %v7265, %v7264
      %v7295 = vpack.c.b16 %v7267, %v7266
      %v7296 = vpack.c.b16 %v7269, %v7268
      %v7297 = vpack.c.b16 %v7271, %v7270
      %v7298 = vpack.c.b16 %v7273, %v7272
      %v7299 = vpack.c.b16 %v7275, %v7274
      %v7300 = vpack.c.b16 %v7277, %v7276
      %v7301 = vpack.c.b16 %v7279, %v7278
      %v7302 = vpack.c.b16 %v7281, %v7280
      %v7303 = vpack.c.b16 %v7283, %v7282
      %v7304 = vpack.c.b16 %v7285, %v7284
      %v7305 = vpack.c.b16 %v7287, %v7286
      %v7325 = vsel %vm1673, %v6731, 0
      %v7328 = vsel %vm1673, %v6734, 0
      %v7331 = vsel %vm1673, %v6737, 0
      %v7334 = vsel %vm1673, %v6740, 0
      %v7337 = vsel %vm1673, %v6743, 0
      %v7340 = vsel %vm1673, %v6746, 0
      %v7343 = vsel %vm1673, %v6749, 0
      %v7346 = vsel %vm1673, %v6752, 0
      %v7349 = vsel %vm1673, %v6755, 0
      %v7352 = vsel %vm1673, %v6758, 0
      %v7355 = vsel %vm1673, %v6761, 0
      %v7358 = vsel %vm1673, %v6764, 0
      %v7361 = vsel %vm1673, %v6767, 0
      %v7364 = vsel %vm1673, %v6770, 0
      %v7367 = vsel %vm1673, %v6849, 0
      %7369 = vmatpush.bf16.msra.mxu0 %v7295
      %7370 = vmatpush.bf16.msra.mxu0 %v7294
      %7371 = vmatpush.bf16.msra.mxu0 %v7293
      %7372 = vmatpush.bf16.msra.mxu0 %v7292
      %7373 = vmatpush.bf16.msra.mxu0 %v7291
      %7374 = vmatpush.bf16.msra.mxu0 %v7290
      %7375 = vmatpush.bf16.msra.mxu0 %v7289
      %7376 = vmatpush.bf16.msra.mxu0 %v7288
      %7377 = vmatmul.bf16.gmra.mxu0 %v7003
      %v7378 = vpop.f32.mrf.mxu0
      %v7379 = vadd.f32 %v7214, %v7378
      %v7380 = vpop.f32.mrf.mxu0
      %v7381 = vadd.f32 %v7214, %v7380
      %7382 = vmatmul.bf16.gmra.mxu0 %v7006
      %v7383 = vpop.f32.mrf.mxu0
      %v7384 = vadd.f32 %v7214, %v7383
      %v7385 = vpop.f32.mrf.mxu0
      %v7386 = vadd.f32 %v7214, %v7385
      %7387 = vmatmul.bf16.gmra.mxu0 %v7009
      %v7388 = vpop.f32.mrf.mxu0
      %v7389 = vadd.f32 %v7214, %v7388
      %v7390 = vpop.f32.mrf.mxu0
      %v7391 = vadd.f32 %v7214, %v7390
      %7392 = vmatmul.bf16.gmra.mxu0 %v7012
      %v7393 = vpop.f32.mrf.mxu0
      %v7394 = vadd.f32 %v7214, %v7393
      %v7395 = vpop.f32.mrf.mxu0
      %v7396 = vadd.f32 %v7214, %v7395
      %7397 = vmatmul.bf16.gmra.mxu0 %v7015
      %v7398 = vpop.f32.mrf.mxu0
      %v7399 = vadd.f32 %v7214, %v7398
      %v7400 = vpop.f32.mrf.mxu0
      %v7401 = vadd.f32 %v7214, %v7400
      %7402 = vmatmul.bf16.gmra.mxu0 %v7018
      %v7403 = vpop.f32.mrf.mxu0
      %v7404 = vadd.f32 %v7214, %v7403
      %v7405 = vpop.f32.mrf.mxu0
      %v7406 = vadd.f32 %v7214, %v7405
      %7407 = vmatmul.bf16.gmra.mxu0 %v7021
      %v7408 = vpop.f32.mrf.mxu0
      %v7409 = vadd.f32 %v7214, %v7408
      %v7410 = vpop.f32.mrf.mxu0
      %v7411 = vadd.f32 %v7214, %v7410
      %7412 = vmatmul.bf16.gmra.mxu0 %v7024
      %v7413 = vpop.f32.mrf.mxu0
      %v7414 = vadd.f32 %v7214, %v7413
      %v7415 = vpop.f32.mrf.mxu0
      %v7416 = vadd.f32 %v7214, %v7415
      %7417 = vmatmul.bf16.gmra.mxu0 %v7027
      %v7418 = vpop.f32.mrf.mxu0
      %v7419 = vadd.f32 %v7214, %v7418
      %v7420 = vpop.f32.mrf.mxu0
      %v7421 = vadd.f32 %v7214, %v7420
      %7422 = vmatmul.bf16.gmra.mxu0 %v7030
      %v7423 = vpop.f32.mrf.mxu0
      %v7424 = vadd.f32 %v7214, %v7423
      %v7425 = vpop.f32.mrf.mxu0
      %v7426 = vadd.f32 %v7214, %v7425
      %7427 = vmatmul.bf16.gmra.mxu0 %v7033
      %v7428 = vpop.f32.mrf.mxu0
      %v7429 = vadd.f32 %v7214, %v7428
      %v7430 = vpop.f32.mrf.mxu0
      %v7431 = vadd.f32 %v7214, %v7430
      %7432 = vmatmul.bf16.gmra.mxu0 %v7036
      %v7433 = vpop.f32.mrf.mxu0
      %v7434 = vadd.f32 %v7214, %v7433
      %v7435 = vpop.f32.mrf.mxu0
      %v7436 = vadd.f32 %v7214, %v7435
      %7437 = vmatmul.bf16.gmra.mxu0 %v7039
      %v7438 = vpop.f32.mrf.mxu0
      %v7439 = vadd.f32 %v7214, %v7438
      %v7440 = vpop.f32.mrf.mxu0
      %v7441 = vadd.f32 %v7214, %v7440
      %7442 = vmatmul.bf16.gmra.mxu0 %v7042
      %v7443 = vpop.f32.mrf.mxu0
      %v7444 = vadd.f32 %v7214, %v7443
      %v7445 = vpop.f32.mrf.mxu0
      %v7446 = vadd.f32 %v7214, %v7445
      %7447 = vmatmul.bf16.gmra.mxu0 %v7045
      %v7448 = vpop.f32.mrf.mxu0
      %v7449 = vadd.f32 %v7214, %v7448
      %v7450 = vpop.f32.mrf.mxu0
      %v7451 = vadd.f32 %v7214, %v7450
      %7452 = vmatmul.bf16.gmra.mxu0 %v7048
      %v7453 = vpop.f32.mrf.mxu0
      %v7454 = vadd.f32 %v7214, %v7453
      %v7455 = vpop.f32.mrf.mxu0
      %v7456 = vadd.f32 %v7214, %v7455
      %7457 = vdwg.mxu0
      %7458 = vmatpush.bf16.msra.mxu0 %v7303
      %7459 = vmatpush.bf16.msra.mxu0 %v7302
      %7460 = vmatpush.bf16.msra.mxu0 %v7301
      %7461 = vmatpush.bf16.msra.mxu0 %v7300
      %7462 = vmatpush.bf16.msra.mxu0 %v7299
      %7463 = vmatpush.bf16.msra.mxu0 %v7298
      %7464 = vmatpush.bf16.msra.mxu0 %v7297
      %7465 = vmatpush.bf16.msra.mxu0 %v7296
      %7466 = vmatmul.bf16.gmra.mxu0 %v7130
      %v7467 = vpop.f32.mrf.mxu0
      %v7468 = vadd.f32 %v7379, %v7467
      %v7469 = vpop.f32.mrf.mxu0
      %v7470 = vadd.f32 %v7381, %v7469
      %7471 = vmatmul.bf16.gmra.mxu0 %v7133
      %v7472 = vpop.f32.mrf.mxu0
      %v7473 = vadd.f32 %v7384, %v7472
      %v7474 = vpop.f32.mrf.mxu0
      %v7475 = vadd.f32 %v7386, %v7474
      %7476 = vmatmul.bf16.gmra.mxu0 %v7136
      %v7477 = vpop.f32.mrf.mxu0
      %v7478 = vadd.f32 %v7389, %v7477
      %v7479 = vpop.f32.mrf.mxu0
      %v7480 = vadd.f32 %v7391, %v7479
      %7481 = vmatmul.bf16.gmra.mxu0 %v7139
      %v7482 = vpop.f32.mrf.mxu0
      %v7483 = vadd.f32 %v7394, %v7482
      %v7484 = vpop.f32.mrf.mxu0
      %v7485 = vadd.f32 %v7396, %v7484
      %7486 = vmatmul.bf16.gmra.mxu0 %v7142
      %v7487 = vpop.f32.mrf.mxu0
      %v7488 = vadd.f32 %v7399, %v7487
      %v7489 = vpop.f32.mrf.mxu0
      %v7490 = vadd.f32 %v7401, %v7489
      %7491 = vmatmul.bf16.gmra.mxu0 %v7145
      %v7492 = vpop.f32.mrf.mxu0
      %v7493 = vadd.f32 %v7404, %v7492
      %v7494 = vpop.f32.mrf.mxu0
      %v7495 = vadd.f32 %v7406, %v7494
      %7496 = vmatmul.bf16.gmra.mxu0 %v7148
      %v7497 = vpop.f32.mrf.mxu0
      %v7498 = vadd.f32 %v7409, %v7497
      %v7499 = vpop.f32.mrf.mxu0
      %v7500 = vadd.f32 %v7411, %v7499
      %7501 = vmatmul.bf16.gmra.mxu0 %v7151
      %v7502 = vpop.f32.mrf.mxu0
      %v7503 = vadd.f32 %v7414, %v7502
      %v7504 = vpop.f32.mrf.mxu0
      %v7505 = vadd.f32 %v7416, %v7504
      %7506 = vmatmul.bf16.gmra.mxu0 %v7154
      %v7507 = vpop.f32.mrf.mxu0
      %v7508 = vadd.f32 %v7419, %v7507
      %v7509 = vpop.f32.mrf.mxu0
      %v7510 = vadd.f32 %v7421, %v7509
      %7511 = vmatmul.bf16.gmra.mxu0 %v7157
      %v7512 = vpop.f32.mrf.mxu0
      %v7513 = vadd.f32 %v7424, %v7512
      %v7514 = vpop.f32.mrf.mxu0
      %v7515 = vadd.f32 %v7426, %v7514
      %7516 = vmatmul.bf16.gmra.mxu0 %v7160
      %v7517 = vpop.f32.mrf.mxu0
      %v7518 = vadd.f32 %v7429, %v7517
      %v7519 = vpop.f32.mrf.mxu0
      %v7520 = vadd.f32 %v7431, %v7519
      %7521 = vmatmul.bf16.gmra.mxu0 %v7163
      %v7522 = vpop.f32.mrf.mxu0
      %v7523 = vadd.f32 %v7434, %v7522
      %v7524 = vpop.f32.mrf.mxu0
      %v7525 = vadd.f32 %v7436, %v7524
      %7526 = vmatmul.bf16.gmra.mxu0 %v7166
      %v7527 = vpop.f32.mrf.mxu0
      %v7528 = vadd.f32 %v7439, %v7527
      %v7529 = vpop.f32.mrf.mxu0
      %v7530 = vadd.f32 %v7441, %v7529
      %7531 = vmatmul.bf16.gmra.mxu0 %v7169
      %v7532 = vpop.f32.mrf.mxu0
      %v7533 = vadd.f32 %v7444, %v7532
      %v7534 = vpop.f32.mrf.mxu0
      %v7535 = vadd.f32 %v7446, %v7534
      %7536 = vmatmul.bf16.gmra.mxu0 %v7172
      %v7537 = vpop.f32.mrf.mxu0
      %v7538 = vadd.f32 %v7449, %v7537
      %v7539 = vpop.f32.mrf.mxu0
      %v7540 = vadd.f32 %v7451, %v7539
      %7541 = vmatmul.bf16.gmra.mxu0 %v7174
      %v7542 = vpop.f32.mrf.mxu0
      %v7543 = vadd.f32 %v7454, %v7542
      %v7544 = vpop.f32.mrf.mxu0
      %v7545 = vadd.f32 %v7456, %v7544
      %7546 = vdwg.mxu0
      %7547 = vmatpush.bf16.msra.mxu0 0
      %7548 = vmatpush.bf16.msra.mxu0 0
      %7549 = vmatpush.bf16.msra.mxu0 0
      %7550 = vmatpush.bf16.msra.mxu0 0
      %7551 = vmatpush.bf16.msra.mxu0 0
      %7552 = vmatpush.bf16.msra.mxu0 0
      %7553 = vmatpush.bf16.msra.mxu0 %v7305
      %7554 = vmatpush.bf16.msra.mxu0 %v7304
      %7555 = vmatmul.bf16.gmra.mxu0 %v7325
      %v7556 = vpop.f32.mrf.mxu0
      %v7557 = vadd.f32 %v7468, %v7556
      %v7558 = vpop.f32.mrf.mxu0
      %v7559 = vadd.f32 %v7470, %v7558
      %7560 = vmatmul.bf16.gmra.mxu0 %v7328
      %v7561 = vpop.f32.mrf.mxu0
      %v7562 = vadd.f32 %v7473, %v7561
      %v7563 = vpop.f32.mrf.mxu0
      %v7564 = vadd.f32 %v7475, %v7563
      %7565 = vmatmul.bf16.gmra.mxu0 %v7331
      %v7566 = vpop.f32.mrf.mxu0
      %v7567 = vadd.f32 %v7478, %v7566
      %v7568 = vpop.f32.mrf.mxu0
      %v7569 = vadd.f32 %v7480, %v7568
      %7570 = vmatmul.bf16.gmra.mxu0 %v7334
      %v7571 = vpop.f32.mrf.mxu0
      %v7572 = vadd.f32 %v7483, %v7571
      %v7573 = vpop.f32.mrf.mxu0
      %v7574 = vadd.f32 %v7485, %v7573
      %7575 = vmatmul.bf16.gmra.mxu0 %v7337
      %v7576 = vpop.f32.mrf.mxu0
      %v7577 = vadd.f32 %v7488, %v7576
      %v7578 = vpop.f32.mrf.mxu0
      %v7579 = vadd.f32 %v7490, %v7578
      %7580 = vmatmul.bf16.gmra.mxu0 %v7340
      %v7581 = vpop.f32.mrf.mxu0
      %v7582 = vadd.f32 %v7493, %v7581
      %v7583 = vpop.f32.mrf.mxu0
      %v7584 = vadd.f32 %v7495, %v7583
      %7585 = vmatmul.bf16.gmra.mxu0 %v7343
      %v7586 = vpop.f32.mrf.mxu0
      %v7587 = vadd.f32 %v7498, %v7586
      %v7588 = vpop.f32.mrf.mxu0
      %v7589 = vadd.f32 %v7500, %v7588
      %7590 = vmatmul.bf16.gmra.mxu0 %v7346
      %v7591 = vpop.f32.mrf.mxu0
      %v7592 = vadd.f32 %v7503, %v7591
      %v7593 = vpop.f32.mrf.mxu0
      %v7594 = vadd.f32 %v7505, %v7593
      %7595 = vmatmul.bf16.gmra.mxu0 %v7349
      %v7596 = vpop.f32.mrf.mxu0
      %v7597 = vadd.f32 %v7508, %v7596
      %v7598 = vpop.f32.mrf.mxu0
      %v7599 = vadd.f32 %v7510, %v7598
      %7600 = vmatmul.bf16.gmra.mxu0 %v7352
      %v7601 = vpop.f32.mrf.mxu0
      %v7602 = vadd.f32 %v7513, %v7601
      %v7603 = vpop.f32.mrf.mxu0
      %v7604 = vadd.f32 %v7515, %v7603
      %7605 = vmatmul.bf16.gmra.mxu0 %v7355
      %v7606 = vpop.f32.mrf.mxu0
      %v7607 = vadd.f32 %v7518, %v7606
      %v7608 = vpop.f32.mrf.mxu0
      %v7609 = vadd.f32 %v7520, %v7608
      %7610 = vmatmul.bf16.gmra.mxu0 %v7358
      %v7611 = vpop.f32.mrf.mxu0
      %v7612 = vadd.f32 %v7523, %v7611
      %v7613 = vpop.f32.mrf.mxu0
      %v7614 = vadd.f32 %v7525, %v7613
      %7615 = vmatmul.bf16.gmra.mxu0 %v7361
      %v7616 = vpop.f32.mrf.mxu0
      %v7617 = vadd.f32 %v7528, %v7616
      %v7618 = vpop.f32.mrf.mxu0
      %v7619 = vadd.f32 %v7530, %v7618
      %7620 = vmatmul.bf16.gmra.mxu0 %v7364
      %v7621 = vpop.f32.mrf.mxu0
      %v7622 = vadd.f32 %v7533, %v7621
      %v7623 = vpop.f32.mrf.mxu0
      %v7624 = vadd.f32 %v7535, %v7623
      %7625 = vmatmul.bf16.gmra.mxu0 %v7367
      %v7626 = vpop.f32.mrf.mxu0
      %v7627 = vadd.f32 %v7538, %v7626
      %v7628 = vpop.f32.mrf.mxu0
      %v7629 = vadd.f32 %v7540, %v7628
      %7630 = vmatmul.bf16.gmra.mxu0 %v3076
      %v7631 = vpop.f32.mrf.mxu0
      %v7632 = vadd.f32 %v7543, %v7631
      %v7633 = vpop.f32.mrf.mxu0
      %v7634 = vadd.f32 %v7545, %v7633
      %7635 = vdwg.mxu0
      %v7636 = vmul.f32 %v6119, 1.442695
      %v7637 = vpow.pop %v7636
      %v7638 = vmul.f32 %v6121, 1.442695
      %v7639 = vpow.pop %v7638
      %v7640 = vmul.f32 %v6124, 1.442695
      %v7641 = vpow.pop %v7640
      %v7642 = vmul.f32 %v6126, 1.442695
      %v7643 = vpow.pop %v7642
      %v7644 = vmul.f32 %v6129, 1.442695
      %v7645 = vpow.pop %v7644
      %v7646 = vmul.f32 %v6131, 1.442695
      %v7647 = vpow.pop %v7646
      %v7648 = vmul.f32 %v6134, 1.442695
      %v7649 = vpow.pop %v7648
      %v7650 = vmul.f32 %v6136, 1.442695
      %v7651 = vpow.pop %v7650
      %v7652 = vmul.f32 %v6139, 1.442695
      %v7653 = vpow.pop %v7652
      %v7654 = vmul.f32 %v6141, 1.442695
      %v7655 = vpow.pop %v7654
      %v7656 = vmul.f32 %v6144, 1.442695
      %v7657 = vpow.pop %v7656
      %v7658 = vmul.f32 %v6146, 1.442695
      %v7659 = vpow.pop %v7658
      %v7660 = vmul.f32 %v6149, 1.442695
      %v7661 = vpow.pop %v7660
      %v7662 = vmul.f32 %v6151, 1.442695
      %v7663 = vpow.pop %v7662
      %v7664 = vmul.f32 %v6154, 1.442695
      %v7665 = vpow.pop %v7664
      %v7666 = vmul.f32 %v6156, 1.442695
      %v7667 = vpow.pop %v7666
      %v7668 = vmul.f32 %v6159, 1.442695
      %v7669 = vpow.pop %v7668
      %v7670 = vmul.f32 %v6161, 1.442695
      %v7671 = vpow.pop %v7670
      %v7672 = vmul.f32 %v6164, 1.442695
      %v7673 = vpow.pop %v7672
      %v7674 = vmul.f32 %v6166, 1.442695
      %v7675 = vpow.pop %v7674
      %v7676 = vmul.f32 %v6169, 1.442695
      %v7677 = vpow.pop %v7676
      %v7678 = vmul.f32 %v6171, 1.442695
      %v7679 = vpow.pop %v7678
      %v7680 = vmul.f32 %v6174, 1.442695
      %v7681 = vpow.pop %v7680
      %v7682 = vmul.f32 %v6176, 1.442695
      %v7683 = vpow.pop %v7682
      %v7684 = vmul.f32 %v6179, 1.442695
      %v7685 = vpow.pop %v7684
      %v7686 = vmul.f32 %v6181, 1.442695
      %v7687 = vpow.pop %v7686
      %v7688 = vmul.f32 %v6184, 1.442695
      %v7689 = vpow.pop %v7688
      %v7690 = vmul.f32 %v6186, 1.442695
      %v7691 = vpow.pop %v7690
      %v7692 = vmul.f32 %v6189, 1.442695
      %v7693 = vpow.pop %v7692
      %v7694 = vmul.f32 %v6191, 1.442695
      %v7695 = vpow.pop %v7694
      %v7696 = vmul.f32 %v6194, 1.442695
      %v7697 = vpow.pop %v7696
      %v7698 = vmul.f32 %v6196, 1.442695
      %v7699 = vpow.pop %v7698
      %v7700 = vmul.f32 %v7637, %v561
      %v7701 = vmul.f32 %v7639, %v562
      %v7702 = vmul.f32 %v7641, %v563
      %v7703 = vmul.f32 %v7643, %v564
      %v7704 = vmul.f32 %v7645, %v565
      %v7705 = vmul.f32 %v7647, %v566
      %v7706 = vmul.f32 %v7649, %v567
      %v7707 = vmul.f32 %v7651, %v568
      %v7708 = vmul.f32 %v7653, %v569
      %v7709 = vmul.f32 %v7655, %v570
      %v7710 = vmul.f32 %v7657, %v571
      %v7711 = vmul.f32 %v7659, %v572
      %v7712 = vmul.f32 %v7661, %v573
      %v7713 = vmul.f32 %v7663, %v574
      %v7714 = vmul.f32 %v7665, %v575
      %v7715 = vmul.f32 %v7667, %v576
      %v7716 = vmul.f32 %v7669, %v577
      %v7717 = vmul.f32 %v7671, %v578
      %v7718 = vmul.f32 %v7673, %v579
      %v7719 = vmul.f32 %v7675, %v580
      %v7720 = vmul.f32 %v7677, %v581
      %v7721 = vmul.f32 %v7679, %v582
      %v7722 = vmul.f32 %v7681, %v583
      %v7723 = vmul.f32 %v7683, %v584
      %v7724 = vmul.f32 %v7685, %v585
      %v7725 = vmul.f32 %v7687, %v586
      %v7726 = vmul.f32 %v7689, %v587
      %v7727 = vmul.f32 %v7691, %v588
      %v7728 = vmul.f32 %v7693, %v589
      %v7729 = vmul.f32 %v7695, %v590
      %v7730 = vmul.f32 %v7697, %v591
      %v7731 = vmul.f32 %v7699, %v592
      %v7732 = vadd.f32 %v7700, %v7557
      %v7733 = vadd.f32 %v7701, %v7559
      %v7734 = vadd.f32 %v7702, %v7562
      %v7735 = vadd.f32 %v7703, %v7564
      %v7736 = vadd.f32 %v7704, %v7567
      %v7737 = vadd.f32 %v7705, %v7569
      %v7738 = vadd.f32 %v7706, %v7572
      %v7739 = vadd.f32 %v7707, %v7574
      %v7740 = vadd.f32 %v7708, %v7577
      %v7741 = vadd.f32 %v7709, %v7579
      %v7742 = vadd.f32 %v7710, %v7582
      %v7743 = vadd.f32 %v7711, %v7584
      %v7744 = vadd.f32 %v7712, %v7587
      %v7745 = vadd.f32 %v7713, %v7589
      %v7746 = vadd.f32 %v7714, %v7592
      %v7747 = vadd.f32 %v7715, %v7594
      %v7748 = vadd.f32 %v7716, %v7597
      %v7749 = vadd.f32 %v7717, %v7599
      %v7750 = vadd.f32 %v7718, %v7602
      %v7751 = vadd.f32 %v7719, %v7604
      %v7752 = vadd.f32 %v7720, %v7607
      %v7753 = vadd.f32 %v7721, %v7609
      %v7754 = vadd.f32 %v7722, %v7612
      %v7755 = vadd.f32 %v7723, %v7614
      %v7756 = vadd.f32 %v7724, %v7617
      %v7757 = vadd.f32 %v7725, %v7619
      %v7758 = vadd.f32 %v7726, %v7622
      %v7759 = vadd.f32 %v7727, %v7624
      %v7760 = vadd.f32 %v7728, %v7627
      %v7761 = vadd.f32 %v7729, %v7629
      %v7762 = vadd.f32 %v7730, %v7632
      %v7763 = vadd.f32 %v7731, %v7634
      %7764 = vxpose.xlu0.b32.start [1/16] %v3345, 128
      %7765 = vxpose.xlu0.b32.cont [2/16] %v3346, 128
      %7766 = vxpose.xlu0.b32.cont [3/16] %v3347, 128
      %7767 = vxpose.xlu0.b32.cont [4/16] %v3348, 128
      %7768 = vxpose.xlu0.b32.cont [5/16] %v3349, 128
      %7769 = vxpose.xlu0.b32.cont [6/16] %v3350, 128
      %7770 = vxpose.xlu0.b32.cont [7/16] %v3351, 128
      %7771 = vxpose.xlu0.b32.cont [8/16] %v3352, 128
      %7772 = vxpose.xlu0.b32.cont [9/16] %v3353, 128
      %7773 = vxpose.xlu0.b32.cont [10/16] %v3354, 128
      %7774 = vxpose.xlu0.b32.cont [11/16] %v3355, 128
      %7775 = vxpose.xlu0.b32.cont [12/16] %v3356, 128
      %7776 = vxpose.xlu0.b32.cont [13/16] %v3357, 128
      %7777 = vxpose.xlu0.b32.cont [14/16] %v3358, 128
      %7778 = vxpose.xlu0.b32.cont [15/16] %v3359, 128
      %7779 = vxpose.xlu0.b32.end [16/16] %v3360, 128
      %v7780 = vpop.trf.xlu0
      %v7781 = vpop.trf.xlu0
      %v7782 = vpop.trf.xlu0
      %v7783 = vpop.trf.xlu0
      %v7784 = vpop.trf.xlu0
      %v7785 = vpop.trf.xlu0
      %v7786 = vpop.trf.xlu0
      %v7787 = vpop.trf.xlu0
      %v7788 = vpop.trf.xlu0
      %v7789 = vpop.trf.xlu0
      %v7790 = vpop.trf.xlu0
      %v7791 = vpop.trf.xlu0
      %v7792 = vpop.trf.xlu0
      %v7793 = vpop.trf.xlu0
      %v7794 = vpop.trf.xlu0
      %v7795 = vpop.trf.xlu0
      %7796 = vxpose.xlu0.b32.start [1/16] %v3361, 128
      %7797 = vxpose.xlu0.b32.cont [2/16] %v3362, 128
      %7798 = vxpose.xlu0.b32.cont [3/16] %v3363, 128
      %7799 = vxpose.xlu0.b32.cont [4/16] %v3364, 128
      %7800 = vxpose.xlu0.b32.cont [5/16] %v3365, 128
      %7801 = vxpose.xlu0.b32.cont [6/16] %v3366, 128
      %7802 = vxpose.xlu0.b32.cont [7/16] %v3367, 128
      %7803 = vxpose.xlu0.b32.cont [8/16] %v3368, 128
      %7804 = vxpose.xlu0.b32.cont [9/16] %v3369, 128
      %7805 = vxpose.xlu0.b32.cont [10/16] %v3370, 128
      %7806 = vxpose.xlu0.b32.cont [11/16] %v3371, 128
      %7807 = vxpose.xlu0.b32.cont [12/16] %v3372, 128
      %7808 = vxpose.xlu0.b32.cont [13/16] %v3373, 128
      %7809 = vxpose.xlu0.b32.cont [14/16] %v3374, 128
      %7810 = vxpose.xlu0.b32.cont [15/16] %v3375, 128
      %7811 = vxpose.xlu0.b32.end [16/16] %v3376, 128
      %v7812 = vpop.trf.xlu0
      %v7813 = vpop.trf.xlu0
      %v7814 = vpop.trf.xlu0
      %v7815 = vpop.trf.xlu0
      %v7816 = vpop.trf.xlu0
      %v7817 = vpop.trf.xlu0
      %v7818 = vpop.trf.xlu0
      %v7819 = vpop.trf.xlu0
      %v7820 = vpop.trf.xlu0
      %v7821 = vpop.trf.xlu0
      %v7822 = vpop.trf.xlu0
      %v7823 = vpop.trf.xlu0
      %v7824 = vpop.trf.xlu0
      %v7825 = vpop.trf.xlu0
      %v7826 = vpop.trf.xlu0
      %v7827 = vpop.trf.xlu0
      %v7830 = vrot.slane %v7812, 4
      %vm7831 = vcmask 1043456
      %v7832 = vsel %vm7831, %v7780, %v7830
      %7834 = vst [vmem:[%s522] sm:$0xff] %v7832
      %7835 = vxpose.xlu0.b32.start [1/16] %v7732, 128
      %7836 = vxpose.xlu0.b32.cont [2/16] %v7733, 128
      %7837 = vxpose.xlu0.b32.cont [3/16] %v7734, 128
      %7838 = vxpose.xlu0.b32.cont [4/16] %v7735, 128
      %7839 = vxpose.xlu0.b32.cont [5/16] %v7736, 128
      %7840 = vxpose.xlu0.b32.cont [6/16] %v7737, 128
      %7841 = vxpose.xlu0.b32.cont [7/16] %v7738, 128
      %7842 = vxpose.xlu0.b32.cont [8/16] %v7739, 128
      %7843 = vxpose.xlu0.b32.cont [9/16] %v7740, 128
      %7844 = vxpose.xlu0.b32.cont [10/16] %v7741, 128
      %7845 = vxpose.xlu0.b32.cont [11/16] %v7742, 128
      %7846 = vxpose.xlu0.b32.cont [12/16] %v7743, 128
      %7847 = vxpose.xlu0.b32.cont [13/16] %v7744, 128
      %7848 = vxpose.xlu0.b32.cont [14/16] %v7745, 128
      %7849 = vxpose.xlu0.b32.cont [15/16] %v7746, 128
      %7850 = vxpose.xlu0.b32.end [16/16] %v7747, 128
      %v7851 = vpop.trf.xlu0
      %v7852 = vpop.trf.xlu0
      %v7853 = vpop.trf.xlu0
      %v7854 = vpop.trf.xlu0
      %v7855 = vpop.trf.xlu0
      %v7856 = vpop.trf.xlu0
      %v7857 = vpop.trf.xlu0
      %v7858 = vpop.trf.xlu0
      %v7859 = vpop.trf.xlu0
      %v7860 = vpop.trf.xlu0
      %v7861 = vpop.trf.xlu0
      %v7862 = vpop.trf.xlu0
      %v7863 = vpop.trf.xlu0
      %v7864 = vpop.trf.xlu0
      %v7865 = vpop.trf.xlu0
      %v7866 = vpop.trf.xlu0
      %7867 = vxpose.xlu0.b32.start [1/16] %v7748, 128
      %7868 = vxpose.xlu0.b32.cont [2/16] %v7749, 128
      %7869 = vxpose.xlu0.b32.cont [3/16] %v7750, 128
      %7870 = vxpose.xlu0.b32.cont [4/16] %v7751, 128
      %7871 = vxpose.xlu0.b32.cont [5/16] %v7752, 128
      %7872 = vxpose.xlu0.b32.cont [6/16] %v7753, 128
      %7873 = vxpose.xlu0.b32.cont [7/16] %v7754, 128
      %7874 = vxpose.xlu0.b32.cont [8/16] %v7755, 128
      %7875 = vxpose.xlu0.b32.cont [9/16] %v7756, 128
      %7876 = vxpose.xlu0.b32.cont [10/16] %v7757, 128
      %7877 = vxpose.xlu0.b32.cont [11/16] %v7758, 128
      %7878 = vxpose.xlu0.b32.cont [12/16] %v7759, 128
      %7879 = vxpose.xlu0.b32.cont [13/16] %v7760, 128
      %7880 = vxpose.xlu0.b32.cont [14/16] %v7761, 128
      %7881 = vxpose.xlu0.b32.cont [15/16] %v7762, 128
      %7882 = vxpose.xlu0.b32.end [16/16] %v7763, 128
      %v7883 = vpop.trf.xlu0
      %v7884 = vpop.trf.xlu0
      %v7885 = vpop.trf.xlu0
      %v7886 = vpop.trf.xlu0
      %v7887 = vpop.trf.xlu0
      %v7888 = vpop.trf.xlu0
      %v7889 = vpop.trf.xlu0
      %v7890 = vpop.trf.xlu0
      %v7891 = vpop.trf.xlu0
      %v7892 = vpop.trf.xlu0
      %v7893 = vpop.trf.xlu0
      %v7894 = vpop.trf.xlu0
      %v7895 = vpop.trf.xlu0
      %v7896 = vpop.trf.xlu0
      %v7897 = vpop.trf.xlu0
      %v7898 = vpop.trf.xlu0
      %v7901 = vrot.slane %v7883, 4
      %v7902 = vsel %vm7831, %v7851, %v7901
      %7904 = vst [vmem:[%s527] sm:$0xff] %v7902
      %p7905 = scmp.lt.s32.totalorder %s27, 1
      %s7906 = scalar_select %p7905, %s27, 1
      %s7907 = smul.addr %s7906, 2
      %s7908 = smul.addr %s7907, 4
      %s7909 = scalar_lea.vmem %s14, %s7908
      %p7910 = scmp.lt.s32.totalorder %s27, 1
      %s7911 = scalar_select %p7910, %s27, 1
      %s7912 = smul.addr %s7911, 2
      %s7913 = smul.addr %s7912, 4
      %s7914 = scalar_lea.vmem %s15, %s7913
      // Predicated region
      $region77: #{ib_apply.1} parent=75 // pred_check
        %p7915 = pneg %p349
      $region78: #{ib_apply.1} parent=75 // pred_check_branch
        %7917 = sbr.rel (%p7915) target = $region80
      $region79: #{ib_apply.1} parent=75 // pred_region
        _
      $region80: #{ib_apply.1} parent=75 // pred_fallthru
        _
      // Predicated region
      $region81: #{ib_apply.1} parent=75 // pred_check
        %p7918 = pneg %p375
      $region82: #{ib_apply.1} parent=75 // pred_check_branch
        %7920 = sbr.rel (%p7918) target = $region84
      $region83: #{ib_apply.1} parent=75 // pred_region
        _
      $region84: #{ib_apply.1} parent=75 // pred_fallthru
        _
    $region76: #{ib_apply.1} parent=5 // pred_fallthru
      _
    %p7921 = scmp.le.s32.totalorder 2, %s22
    // Predicated region
    $region85: #{ib_apply.1} parent=5 // pred_check
      %p7922 = pneg %p7921
    $region86: #{ib_apply.1} parent=5 // pred_check_branch
      %7924 = sbr.rel (%p7922) target = $region88
    $region87: #{ib_apply.1} parent=5 // pred_region
      %s7925 = ssub.s32 %s22, 2
      // Predicated region
      $region89: #{ib_apply.1} parent=87 // pred_check
        %p7926 = pneg %p355
      $region90: #{ib_apply.1} parent=87 // pred_check_branch
        %7928 = sbr.rel (%p7926) target = $region92
      $region91: #{ib_apply.1} parent=87 // pred_region
        %p7929 = scmp.lt.s32.totalorder %s28, 1
        %s7930 = scalar_select %p7929, %s28, 1
        %s7931 = smul.addr %s7930, 2
        %s7932 = smul.addr %s7931, 4
        %s7933 = scalar_lea.vmem %s14, %s7932
      $region92: #{ib_apply.1} parent=87 // pred_fallthru
        _
      // Predicated region
      $region93: #{ib_apply.1} parent=87 // pred_check
        %p7934 = pneg %p381
      $region94: #{ib_apply.1} parent=87 // pred_check_branch
        %7936 = sbr.rel (%p7934) target = $region96
      $region95: #{ib_apply.1} parent=87 // pred_region
        %p7937 = scmp.lt.s32.totalorder %s28, 1
        %s7938 = scalar_select %p7937, %s28, 1
        %s7939 = smul.addr %s7938, 2
        %s7940 = smul.addr %s7939, 4
        %s7941 = scalar_lea.vmem %s15, %s7940
      $region96: #{ib_apply.1} parent=87 // pred_fallthru
        _
    $region88: #{ib_apply.1} parent=5 // pred_fallthru
      _
  $region6: #{ib_apply.1} parent=0 // loop_footer
    %s26 = sadd.s32 1, %s22
  $region7: #{ib_apply.1} parent=0 // loop_footer_branch
    %21 = sbr.rel target = $region3
  $region8: #{ib_apply.1} parent=0 // loop_exit
    _

</llo_original>
